<compile_context>
chip_gen: v7x
topology: tpu7x:2x2x1
jax: 0.10.0
libtpu: 0.0.40
codegen_flags: <defaults>
</compile_context>

<pallas_src>
import functools

import jax
import jax.numpy as jnp
import numpy as np
from jax.experimental import pallas as pl
from jax.experimental.pallas import tpu as pltpu


def _unet_up_kernel(x_ref, w_ref, out_ref, zp_ref, raw_ref, *, H, W, Cin, Cout, eps):
    # x_ref  : (1, H*W, Cin)        bf16  flattened NHWC input (one batch element)
    # w_ref  : (Cin, 16*Cout)       bf16  all 16 ConvTranspose taps, phase-ordered
    # out_ref: (1, 4, H, W, Cout)   bf16  per-phase normalized output, phase = 2*ph+pw
    # zp_ref : (H+2, W+2, 16*Cout)  f32   scratch: zero-padded per-tap conv results
    # raw_ref: (4, H, W, Cout)      f32   scratch: raw per-phase conv results
    C16 = 16 * Cout

    # --- single standard MXU matmul: channels -> all 16 tap outputs ---
    # LHS (H*W, Cin) contracts its minor dim, RHS (Cin, 16*Cout) has N minor:
    # no operand transpose, f32 accumulation.
    z = jnp.dot(x_ref[0], w_ref[...], preferred_element_type=jnp.float32)

    # --- stage into a 1-px zero-padded scratch so halo handling is pure slicing ---
    zp_ref[0:1, :, :] = jnp.zeros((1, W + 2, C16), jnp.float32)
    zp_ref[H + 1:H + 2, :, :] = jnp.zeros((1, W + 2, C16), jnp.float32)
    zp_ref[:, 0:1, :] = jnp.zeros((H + 2, 1, C16), jnp.float32)
    zp_ref[:, W + 1:W + 2, :] = jnp.zeros((H + 2, 1, C16), jnp.float32)
    zp_ref[1:H + 1, 1:W + 1, :] = z.reshape(H, W, C16)

    # --- assemble the 4 output phases (shift-add of 4 taps each) +
    #     one-pass f32 instance-norm stats (sum and sum-of-squares) ---
    tot = jnp.zeros((Cout,), jnp.float32)
    tot2 = jnp.zeros((Cout,), jnp.float32)
    for ph in range(2):
        for pw in range(2):
            p4 = ph * 2 + pw
            acc = jnp.zeros((H, W, Cout), jnp.float32)
            for dh in range(2):
                for dw in range(2):
                    g = p4 * 4 + dh * 2 + dw
                    acc = acc + zp_ref[ph + dh:ph + dh + H,
                                       pw + dw:pw + dw + W,
                                       g * Cout:(g + 1) * Cout]
            raw_ref[p4] = acc
            tot = tot + jnp.sum(acc, axis=(0, 1))
            tot2 = tot2 + jnp.sum(acc * acc, axis=(0, 1))

    inv_cnt = 1.0 / float(4 * H * W)          # (2H)*(2W) pixels per channel
    mean = tot * inv_cnt
    var = jnp.maximum(tot2 * inv_cnt - mean * mean, 0.0)
    inv = jax.lax.rsqrt(var + eps)

    # --- normalize + ReLU; single bf16 write of the output block ---
    for p4 in range(4):
        out_ref[0, p4] = jnp.maximum((raw_ref[p4] - mean) * inv,
                                     0.0).astype(out_ref.dtype)


def unet_up_forward(x, skip, weight, eps=1e-5):
    """x: (N,Cin,H,W) NCHW; skip: (N,Cs,2H,2W); weight: (Cin,Cout,4,4) ConvTranspose2d."""
    N, Cin, H, W = x.shape
    Cout = weight.shape[1]

    # NCHW -> flattened NHWC, bf16 (input is the small tensor; one cheap XLA pass).
    x_flat = jnp.transpose(x, (0, 2, 3, 1)).reshape(N, H * W, Cin).astype(jnp.bfloat16)

    # All 16 taps concatenated on the output-channel axis, ordered (ph, pw, dh, dw)
    # with (kh, kw) = (3 - ph - 2*dh, 3 - pw - 2*dw)  [ConvTranspose2d k=4,s=2,p=1].
    blocks = []
    for ph in range(2):
        for pw in range(2):
            for dh in range(2):
                for dw in range(2):
                    kh = 3 - ph - 2 * dh
                    kw = 3 - pw - 2 * dw
                    blocks.append(weight[:, :, kh, kw])            # (Cin, Cout)
    w_all = jnp.concatenate(blocks, axis=1).astype(jnp.bfloat16)   # (Cin, 16*Cout)

    phases = pl.pallas_call(
        functools.partial(_unet_up_kernel, H=H, W=W, Cin=Cin, Cout=Cout, eps=eps),
        out_shape=jax.ShapeDtypeStruct((N, 4, H, W, Cout), jnp.bfloat16),
        grid=(N,),
        in_specs=[
            pl.BlockSpec((1, H * W, Cin), lambda n: (n, 0, 0)),
            pl.BlockSpec((Cin, 16 * Cout), lambda n: (0, 0)),
        ],
        out_specs=pl.BlockSpec((1, 4, H, W, Cout), lambda n: (n, 0, 0, 0, 0)),
        scratch_shapes=[
            pltpu.VMEM((H + 2, W + 2, 16 * Cout), jnp.float32),
            pltpu.VMEM((4, H, W, Cout), jnp.float32),
        ],
        compiler_params=pltpu.CompilerParams(
            dimension_semantics=("parallel",),
            # 32 MiB is safe on v5e (scoped default 16 MiB) and fits v7x's 64 MiB.
            vmem_limit_bytes=32 * 1024 * 1024),
    )(x_flat, w_all)

    # Interleave phases into NCHW (bf16 -> half the transpose traffic) + concat skip.
    y = phases.reshape(N, 2, 2, H, W, Cout)
    y = jnp.transpose(y, (0, 5, 3, 1, 4, 2))          # (N, Cout, H, ph, W, pw)
    y = y.reshape(N, Cout, 2 * H, 2 * W)
    return jnp.concatenate([y.astype(skip.dtype), skip], axis=1)


def _reference(x, skip, weight, eps=1e-5):
    # ConvTranspose2d(k=4, s=2, p=1) == dilated conv with flipped kernel, pad 2.
    w_conv = jnp.transpose(weight[:, :, ::-1, ::-1], (1, 0, 2, 3))  # (Cout,Cin,4,4)
    y = jax.lax.conv_general_dilated(
        x, w_conv, window_strides=(1, 1), padding=((2, 2), (2, 2)),
        lhs_dilation=(2, 2), dimension_numbers=("NCHW", "OIHW", "NCHW"),
        precision=jax.lax.Precision.HIGHEST)
    mean = y.mean(axis=(2, 3), keepdims=True)
    var = y.var(axis=(2, 3), keepdims=True)
    y = jnp.maximum((y - mean) / jnp.sqrt(var + eps), 0.0)
    return jnp.concatenate([y, skip], axis=1)


if __name__ == "__main__":
    key = jax.random.PRNGKey(0)
    N, Cin, Cout, H, W = 2, 4, 8, 16, 16
    kx, ks, kw = jax.random.split(key, 3)

    x = jax.random.normal(kx, (N, Cin, H, W), jnp.float32)
    skip = jax.random.normal(ks, (N, Cout, 2 * H, 2 * W), jnp.float32)
    # ConvTranspose2d weight shape: (Cin, Cout, 4, 4)
    weight = 0.1 * jax.random.normal(kw, (Cin, Cout, 4, 4), jnp.float32)

    out = jax.jit(unet_up_forward)(x, skip, weight)
    out = jax.block_until_ready(out)

    ref = _reference(x, skip, weight)
    assert out.shape == (N, 2 * Cout, 2 * H, 2 * W), out.shape
    # bf16 MXU operands + bf16 kernel output (f32 stats/normalization) -> compare
    # against the f32 reference with a bf16-appropriate tolerance.
    np.testing.assert_allclose(np.asarray(out), np.asarray(ref),
                               rtol=3e-2, atol=2e-2)
    print("KERNEL_OK")
</pallas_src>

<mosaic_0001>
module attributes {stable_mosaic.version = 11 : i64} {
  func.func @_unet_up_kernel(%arg0: i32, %arg1: memref<1x256x4xbf16, #tpu.memory_space<vmem>>, %arg2: memref<4x128xbf16, #tpu.memory_space<vmem>>, %arg3: memref<1x4x16x16x8xbf16, #tpu.memory_space<vmem>>, %arg4: memref<18x18x128xf32, #tpu.memory_space<vmem>>, %arg5: memref<4x16x16x8xf32, #tpu.memory_space<vmem>>) attributes {dimension_semantics = [#tpu.dimension_semantics<parallel>], iteration_bounds = array<i64: 2>, scalar_prefetch = 0 : i64, scratch_operands = 2 : i64, tpu.core_type = #tpu.core_type<tc>, window_params = [{transform_indices = @transform_0, window_bounds = array<i64: 1, 256, 4>}, {pipeline_mode = #tpu.pipeline_mode<synchronous>, transform_indices = @transform_1, window_bounds = array<i64: 4, 128>}, {transform_indices = @transform_2, window_bounds = array<i64: 1, 4, 16, 16, 8>}]} {
    %c0 = arith.constant 0 : index
    %c0_0 = arith.constant 0 : index
    %c0_1 = arith.constant 0 : index
    %0 = vector.load %arg1[%c0, %c0_0, %c0_1] : memref<1x256x4xbf16, #tpu.memory_space<vmem>>, vector<1x256x4xbf16>
    %1 = vector.shape_cast %0 : vector<1x256x4xbf16> to vector<256x4xbf16>
    %c0_2 = arith.constant 0 : index
    %c0_3 = arith.constant 0 : index
    %2 = vector.load %arg2[%c0_2, %c0_3] : memref<4x128xbf16, #tpu.memory_space<vmem>>, vector<4x128xbf16>
    %cst = arith.constant dense<0.000000e+00> : vector<256x128xf32>
    %3 = tpu.matmul %1, %2, %cst {dimension_numbers = #tpu.dot_dimension_numbers<[1], [0], [0], [1], [0, 0, 1, 1], [], []>} : vector<256x4xbf16>, vector<4x128xbf16>, vector<256x128xf32> -> vector<256x128xf32>
    %cst_4 = arith.constant 0.000000e+00 : f32
    %4 = vector.broadcast %cst_4 : f32 to vector<1x18x128xf32>
    %c0_5 = arith.constant 0 : index
    %c0_6 = arith.constant 0 : index
    %c0_7 = arith.constant 0 : index
    %5 = vector.load %arg4[%c0_5, %c0_6, %c0_7] : memref<18x18x128xf32, #tpu.memory_space<vmem>>, vector<1x18x128xf32>
    tpu.vector_store %arg4[%c0_5, %c0_6, %c0_7], %4 {strides = array<i32>} : memref<18x18x128xf32, #tpu.memory_space<vmem>>, vector<1x18x128xf32>,
    %cst_8 = arith.constant 0.000000e+00 : f32
    %6 = vector.broadcast %cst_8 : f32 to vector<1x18x128xf32>
    %c17 = arith.constant 17 : index
    %c0_9 = arith.constant 0 : index
    %c0_10 = arith.constant 0 : index
    %7 = vector.load %arg4[%c17, %c0_9, %c0_10] : memref<18x18x128xf32, #tpu.memory_space<vmem>>, vector<1x18x128xf32>
    tpu.vector_store %arg4[%c17, %c0_9, %c0_10], %6 {strides = array<i32>} : memref<18x18x128xf32, #tpu.memory_space<vmem>>, vector<1x18x128xf32>,
    %cst_11 = arith.constant 0.000000e+00 : f32
    %8 = vector.broadcast %cst_11 : f32 to vector<18x1x128xf32>
    %c0_12 = arith.constant 0 : index
    %c0_13 = arith.constant 0 : index
    %c0_14 = arith.constant 0 : index
    %9 = vector.load %arg4[%c0_12, %c0_13, %c0_14] : memref<18x18x128xf32, #tpu.memory_space<vmem>>, vector<18x1x128xf32>
    tpu.vector_store %arg4[%c0_12, %c0_13, %c0_14], %8 {strides = array<i32>} : memref<18x18x128xf32, #tpu.memory_space<vmem>>, vector<18x1x128xf32>,
    %cst_15 = arith.constant 0.000000e+00 : f32
    %10 = vector.broadcast %cst_15 : f32 to vector<18x1x128xf32>
    %c0_16 = arith.constant 0 : index
    %c17_17 = arith.constant 17 : index
    %c0_18 = arith.constant 0 : index
    %11 = vector.load %arg4[%c0_16, %c17_17, %c0_18] : memref<18x18x128xf32, #tpu.memory_space<vmem>>, vector<18x1x128xf32>
    tpu.vector_store %arg4[%c0_16, %c17_17, %c0_18], %10 {strides = array<i32>} : memref<18x18x128xf32, #tpu.memory_space<vmem>>, vector<18x1x128xf32>,
    %12 = vector.shape_cast %3 : vector<256x128xf32> to vector<16x16x128xf32>
    %c1 = arith.constant 1 : index
    %c1_19 = arith.constant 1 : index
    %c0_20 = arith.constant 0 : index
    %13 = vector.load %arg4[%c1, %c1_19, %c0_20] : memref<18x18x128xf32, #tpu.memory_space<vmem>>, vector<16x16x128xf32>
    tpu.vector_store %arg4[%c1, %c1_19, %c0_20], %12 {strides = array<i32>} : memref<18x18x128xf32, #tpu.memory_space<vmem>>, vector<16x16x128xf32>,
    %cst_21 = arith.constant 0.000000e+00 : f32
    %14 = vector.broadcast %cst_21 : f32 to vector<8xf32>
    %cst_22 = arith.constant 0.000000e+00 : f32
    %15 = vector.broadcast %cst_22 : f32 to vector<8xf32>
    %cst_23 = arith.constant 0.000000e+00 : f32
    %16 = vector.broadcast %cst_23 : f32 to vector<16x16x8xf32>
    %c0_24 = arith.constant 0 : index
    %c0_25 = arith.constant 0 : index
    %c0_26 = arith.constant 0 : index
    %17 = vector.load %arg4[%c0_24, %c0_25, %c0_26] : memref<18x18x128xf32, #tpu.memory_space<vmem>>, vector<16x16x8xf32>
    %18 = arith.addf %16, %17 : vector<16x16x8xf32>
    %c0_27 = arith.constant 0 : index
    %c1_28 = arith.constant 1 : index
    %c8 = arith.constant 8 : index
    %19 = vector.load %arg4[%c0_27, %c1_28, %c8] : memref<18x18x128xf32, #tpu.memory_space<vmem>>, vector<16x16x8xf32>
    %20 = arith.addf %18, %19 : vector<16x16x8xf32>
    %c1_29 = arith.constant 1 : index
    %c0_30 = arith.constant 0 : index
    %c16 = arith.constant 16 : index
    %21 = vector.load %arg4[%c1_29, %c0_30, %c16] : memref<18x18x128xf32, #tpu.memory_space<vmem>>, vector<16x16x8xf32>
    %22 = arith.addf %20, %21 : vector<16x16x8xf32>
    %c1_31 = arith.constant 1 : index
    %c1_32 = arith.constant 1 : index
    %c24 = arith.constant 24 : index
    %23 = vector.load %arg4[%c1_31, %c1_32, %c24] : memref<18x18x128xf32, #tpu.memory_space<vmem>>, vector<16x16x8xf32>
    %24 = arith.addf %22, %23 : vector<16x16x8xf32>
    %c0_33 = arith.constant 0 : index
    %c0_34 = arith.constant 0 : index
    %c0_35 = arith.constant 0 : index
    %c0_36 = arith.constant 0 : index
    %25 = vector.load %arg5[%c0_33, %c0_34, %c0_35, %c0_36] : memref<4x16x16x8xf32, #tpu.memory_space<vmem>>, vector<1x16x16x8xf32>
    %26 = vector.shape_cast %25 : vector<1x16x16x8xf32> to vector<16x16x8xf32>
    %27 = vector.shape_cast %24 : vector<16x16x8xf32> to vector<1x16x16x8xf32>
    tpu.vector_store %arg5[%c0_33, %c0_34, %c0_35, %c0_36], %27 {strides = array<i32>} : memref<4x16x16x8xf32, #tpu.memory_space<vmem>>, vector<1x16x16x8xf32>,
    %cst_37 = arith.constant dense<0.000000e+00> : vector<8xf32>
    %28 = vector.multi_reduction <add>, %24, %cst_37 [0, 1] : vector<16x16x8xf32> to vector<8xf32>
    %29 = arith.addf %14, %28 : vector<8xf32>
    %30 = arith.mulf %24, %24 : vector<16x16x8xf32>
    %cst_38 = arith.constant dense<0.000000e+00> : vector<8xf32>
    %31 = vector.multi_reduction <add>, %30, %cst_38 [0, 1] : vector<16x16x8xf32> to vector<8xf32>
    %32 = arith.addf %15, %31 : vector<8xf32>
    %cst_39 = arith.constant 0.000000e+00 : f32
    %33 = vector.broadcast %cst_39 : f32 to vector<16x16x8xf32>
    %c0_40 = arith.constant 0 : index
    %c1_41 = arith.constant 1 : index
    %c32 = arith.constant 32 : index
    %34 = vector.load %arg4[%c0_40, %c1_41, %c32] : memref<18x18x128xf32, #tpu.memory_space<vmem>>, vector<16x16x8xf32>
    %35 = arith.addf %33, %34 : vector<16x16x8xf32>
    %c0_42 = arith.constant 0 : index
    %c2 = arith.constant 2 : index
    %c40 = arith.constant 40 : index
    %36 = vector.load %arg4[%c0_42, %c2, %c40] : memref<18x18x128xf32, #tpu.memory_space<vmem>>, vector<16x16x8xf32>
    %37 = arith.addf %35, %36 : vector<16x16x8xf32>
    %c1_43 = arith.constant 1 : index
    %c1_44 = arith.constant 1 : index
    %c48 = arith.constant 48 : index
    %38 = vector.load %arg4[%c1_43, %c1_44, %c48] : memref<18x18x128xf32, #tpu.memory_space<vmem>>, vector<16x16x8xf32>
    %39 = arith.addf %37, %38 : vector<16x16x8xf32>
    %c1_45 = arith.constant 1 : index
    %c2_46 = arith.constant 2 : index
    %c56 = arith.constant 56 : index
    %40 = vector.load %arg4[%c1_45, %c2_46, %c56] : memref<18x18x128xf32, #tpu.memory_space<vmem>>, vector<16x16x8xf32>
    %41 = arith.addf %39, %40 : vector<16x16x8xf32>
    %c1_47 = arith.constant 1 : index
    %c0_48 = arith.constant 0 : index
    %c0_49 = arith.constant 0 : index
    %c0_50 = arith.constant 0 : index
    %42 = vector.load %arg5[%c1_47, %c0_48, %c0_49, %c0_50] : memref<4x16x16x8xf32, #tpu.memory_space<vmem>>, vector<1x16x16x8xf32>
    %43 = vector.shape_cast %42 : vector<1x16x16x8xf32> to vector<16x16x8xf32>
    %44 = vector.shape_cast %41 : vector<16x16x8xf32> to vector<1x16x16x8xf32>
    tpu.vector_store %arg5[%c1_47, %c0_48, %c0_49, %c0_50], %44 {strides = array<i32>} : memref<4x16x16x8xf32, #tpu.memory_space<vmem>>, vector<1x16x16x8xf32>,
    %cst_51 = arith.constant dense<0.000000e+00> : vector<8xf32>
    %45 = vector.multi_reduction <add>, %41, %cst_51 [0, 1] : vector<16x16x8xf32> to vector<8xf32>
    %46 = arith.addf %29, %45 : vector<8xf32>
    %47 = arith.mulf %41, %41 : vector<16x16x8xf32>
    %cst_52 = arith.constant dense<0.000000e+00> : vector<8xf32>
    %48 = vector.multi_reduction <add>, %47, %cst_52 [0, 1] : vector<16x16x8xf32> to vector<8xf32>
    %49 = arith.addf %32, %48 : vector<8xf32>
    %cst_53 = arith.constant 0.000000e+00 : f32
    %50 = vector.broadcast %cst_53 : f32 to vector<16x16x8xf32>
    %c1_54 = arith.constant 1 : index
    %c0_55 = arith.constant 0 : index
    %c64 = arith.constant 64 : index
    %51 = vector.load %arg4[%c1_54, %c0_55, %c64] : memref<18x18x128xf32, #tpu.memory_space<vmem>>, vector<16x16x8xf32>
    %52 = arith.addf %50, %51 : vector<16x16x8xf32>
    %c1_56 = arith.constant 1 : index
    %c1_57 = arith.constant 1 : index
    %c72 = arith.constant 72 : index
    %53 = vector.load %arg4[%c1_56, %c1_57, %c72] : memref<18x18x128xf32, #tpu.memory_space<vmem>>, vector<16x16x8xf32>
    %54 = arith.addf %52, %53 : vector<16x16x8xf32>
    %c2_58 = arith.constant 2 : index
    %c0_59 = arith.constant 0 : index
    %c80 = arith.constant 80 : index
    %55 = vector.load %arg4[%c2_58, %c0_59, %c80] : memref<18x18x128xf32, #tpu.memory_space<vmem>>, vector<16x16x8xf32>
    %56 = arith.addf %54, %55 : vector<16x16x8xf32>
    %c2_60 = arith.constant 2 : index
    %c1_61 = arith.constant 1 : index
    %c88 = arith.constant 88 : index
    %57 = vector.load %arg4[%c2_60, %c1_61, %c88] : memref<18x18x128xf32, #tpu.memory_space<vmem>>, vector<16x16x8xf32>
    %58 = arith.addf %56, %57 : vector<16x16x8xf32>
    %c2_62 = arith.constant 2 : index
    %c0_63 = arith.constant 0 : index
    %c0_64 = arith.constant 0 : index
    %c0_65 = arith.constant 0 : index
    %59 = vector.load %arg5[%c2_62, %c0_63, %c0_64, %c0_65] : memref<4x16x16x8xf32, #tpu.memory_space<vmem>>, vector<1x16x16x8xf32>
    %60 = vector.shape_cast %59 : vector<1x16x16x8xf32> to vector<16x16x8xf32>
    %61 = vector.shape_cast %58 : vector<16x16x8xf32> to vector<1x16x16x8xf32>
    tpu.vector_store %arg5[%c2_62, %c0_63, %c0_64, %c0_65], %61 {strides = array<i32>} : memref<4x16x16x8xf32, #tpu.memory_space<vmem>>, vector<1x16x16x8xf32>,
    %cst_66 = arith.constant dense<0.000000e+00> : vector<8xf32>
    %62 = vector.multi_reduction <add>, %58, %cst_66 [0, 1] : vector<16x16x8xf32> to vector<8xf32>
    %63 = arith.addf %46, %62 : vector<8xf32>
    %64 = arith.mulf %58, %58 : vector<16x16x8xf32>
    %cst_67 = arith.constant dense<0.000000e+00> : vector<8xf32>
    %65 = vector.multi_reduction <add>, %64, %cst_67 [0, 1] : vector<16x16x8xf32> to vector<8xf32>
    %66 = arith.addf %49, %65 : vector<8xf32>
    %cst_68 = arith.constant 0.000000e+00 : f32
    %67 = vector.broadcast %cst_68 : f32 to vector<16x16x8xf32>
    %c1_69 = arith.constant 1 : index
    %c1_70 = arith.constant 1 : index
    %c96 = arith.constant 96 : index
    %68 = vector.load %arg4[%c1_69, %c1_70, %c96] : memref<18x18x128xf32, #tpu.memory_space<vmem>>, vector<16x16x8xf32>
    %69 = arith.addf %67, %68 : vector<16x16x8xf32>
    %c1_71 = arith.constant 1 : index
    %c2_72 = arith.constant 2 : index
    %c104 = arith.constant 104 : index
    %70 = vector.load %arg4[%c1_71, %c2_72, %c104] : memref<18x18x128xf32, #tpu.memory_space<vmem>>, vector<16x16x8xf32>
    %71 = arith.addf %69, %70 : vector<16x16x8xf32>
    %c2_73 = arith.constant 2 : index
    %c1_74 = arith.constant 1 : index
    %c112 = arith.constant 112 : index
    %72 = vector.load %arg4[%c2_73, %c1_74, %c112] : memref<18x18x128xf32, #tpu.memory_space<vmem>>, vector<16x16x8xf32>
    %73 = arith.addf %71, %72 : vector<16x16x8xf32>
    %c2_75 = arith.constant 2 : index
    %c2_76 = arith.constant 2 : index
    %c120 = arith.constant 120 : index
    %74 = vector.load %arg4[%c2_75, %c2_76, %c120] : memref<18x18x128xf32, #tpu.memory_space<vmem>>, vector<16x16x8xf32>
    %75 = arith.addf %73, %74 : vector<16x16x8xf32>
    %c3 = arith.constant 3 : index
    %c0_77 = arith.constant 0 : index
    %c0_78 = arith.constant 0 : index
    %c0_79 = arith.constant 0 : index
    %76 = vector.load %arg5[%c3, %c0_77, %c0_78, %c0_79] : memref<4x16x16x8xf32, #tpu.memory_space<vmem>>, vector<1x16x16x8xf32>
    %77 = vector.shape_cast %76 : vector<1x16x16x8xf32> to vector<16x16x8xf32>
    %78 = vector.shape_cast %75 : vector<16x16x8xf32> to vector<1x16x16x8xf32>
    tpu.vector_store %arg5[%c3, %c0_77, %c0_78, %c0_79], %78 {strides = array<i32>} : memref<4x16x16x8xf32, #tpu.memory_space<vmem>>, vector<1x16x16x8xf32>,
    %cst_80 = arith.constant dense<0.000000e+00> : vector<8xf32>
    %79 = vector.multi_reduction <add>, %75, %cst_80 [0, 1] : vector<16x16x8xf32> to vector<8xf32>
    %80 = arith.addf %63, %79 : vector<8xf32>
    %81 = arith.mulf %75, %75 : vector<16x16x8xf32>
    %cst_81 = arith.constant dense<0.000000e+00> : vector<8xf32>
    %82 = vector.multi_reduction <add>, %81, %cst_81 [0, 1] : vector<16x16x8xf32> to vector<8xf32>
    %83 = arith.addf %66, %82 : vector<8xf32>
    %cst_82 = arith.constant 9.765625E-4 : f32
    %84 = vector.broadcast %cst_82 : f32 to vector<8xf32>
    %85 = arith.mulf %80, %84 : vector<8xf32>
    %cst_83 = arith.constant 9.765625E-4 : f32
    %86 = vector.broadcast %cst_83 : f32 to vector<8xf32>
    %87 = arith.mulf %83, %86 : vector<8xf32>
    %88 = arith.mulf %85, %85 : vector<8xf32>
    %89 = arith.subf %87, %88 : vector<8xf32>
    %cst_84 = arith.constant 0.000000e+00 : f32
    %90 = vector.broadcast %cst_84 : f32 to vector<8xf32>
    %91 = arith.maximumf %89, %90 : vector<8xf32>
    %cst_85 = arith.constant 9.99999974E-6 : f32
    %92 = vector.broadcast %cst_85 : f32 to vector<8xf32>
    %93 = arith.addf %91, %92 : vector<8xf32>
    %94 = math.rsqrt %93 : vector<8xf32>
    %c0_86 = arith.constant 0 : index
    %c0_87 = arith.constant 0 : index
    %c0_88 = arith.constant 0 : index
    %c0_89 = arith.constant 0 : index
    %95 = vector.load %arg5[%c0_86, %c0_87, %c0_88, %c0_89] : memref<4x16x16x8xf32, #tpu.memory_space<vmem>>, vector<1x16x16x8xf32>
    %96 = vector.shape_cast %95 : vector<1x16x16x8xf32> to vector<16x16x8xf32>
    %97 = vector.shape_cast %85 : vector<8xf32> to vector<1x1x8xf32>
    %98 = vector.broadcast %97 : vector<1x1x8xf32> to vector<16x16x8xf32>
    %99 = arith.subf %96, %98 : vector<16x16x8xf32>
    %100 = vector.shape_cast %94 : vector<8xf32> to vector<1x1x8xf32>
    %101 = vector.broadcast %100 : vector<1x1x8xf32> to vector<16x16x8xf32>
    %102 = arith.mulf %99, %101 : vector<16x16x8xf32>
    %cst_90 = arith.constant 0.000000e+00 : f32
    %103 = vector.broadcast %cst_90 : f32 to vector<16x16x8xf32>
    %104 = arith.maximumf %102, %103 : vector<16x16x8xf32>
    %105 = arith.truncf %104 : vector<16x16x8xf32> to vector<16x16x8xbf16>
    %c0_91 = arith.constant 0 : index
    %c0_92 = arith.constant 0 : index
    %c0_93 = arith.constant 0 : index
    %c0_94 = arith.constant 0 : index
    %c0_95 = arith.constant 0 : index
    %106 = vector.load %arg3[%c0_91, %c0_92, %c0_93, %c0_94, %c0_95] : memref<1x4x16x16x8xbf16, #tpu.memory_space<vmem>>, vector<1x1x16x16x8xbf16>
    %107 = vector.shape_cast %106 : vector<1x1x16x16x8xbf16> to vector<16x16x8xbf16>
    %108 = vector.shape_cast %105 : vector<16x16x8xbf16> to vector<1x1x16x16x8xbf16>
    tpu.vector_store %arg3[%c0_91, %c0_92, %c0_93, %c0_94, %c0_95], %108 {strides = array<i32>} : memref<1x4x16x16x8xbf16, #tpu.memory_space<vmem>>, vector<1x1x16x16x8xbf16>,
    %c1_96 = arith.constant 1 : index
    %c0_97 = arith.constant 0 : index
    %c0_98 = arith.constant 0 : index
    %c0_99 = arith.constant 0 : index
    %109 = vector.load %arg5[%c1_96, %c0_97, %c0_98, %c0_99] : memref<4x16x16x8xf32, #tpu.memory_space<vmem>>, vector<1x16x16x8xf32>
    %110 = vector.shape_cast %109 : vector<1x16x16x8xf32> to vector<16x16x8xf32>
    %111 = vector.shape_cast %85 : vector<8xf32> to vector<1x1x8xf32>
    %112 = vector.broadcast %111 : vector<1x1x8xf32> to vector<16x16x8xf32>
    %113 = arith.subf %110, %112 : vector<16x16x8xf32>
    %114 = vector.shape_cast %94 : vector<8xf32> to vector<1x1x8xf32>
    %115 = vector.broadcast %114 : vector<1x1x8xf32> to vector<16x16x8xf32>
    %116 = arith.mulf %113, %115 : vector<16x16x8xf32>
    %cst_100 = arith.constant 0.000000e+00 : f32
    %117 = vector.broadcast %cst_100 : f32 to vector<16x16x8xf32>
    %118 = arith.maximumf %116, %117 : vector<16x16x8xf32>
    %119 = arith.truncf %118 : vector<16x16x8xf32> to vector<16x16x8xbf16>
    %c0_101 = arith.constant 0 : index
    %c1_102 = arith.constant 1 : index
    %c0_103 = arith.constant 0 : index
    %c0_104 = arith.constant 0 : index
    %c0_105 = arith.constant 0 : index
    %120 = vector.load %arg3[%c0_101, %c1_102, %c0_103, %c0_104, %c0_105] : memref<1x4x16x16x8xbf16, #tpu.memory_space<vmem>>, vector<1x1x16x16x8xbf16>
    %121 = vector.shape_cast %120 : vector<1x1x16x16x8xbf16> to vector<16x16x8xbf16>
    %122 = vector.shape_cast %119 : vector<16x16x8xbf16> to vector<1x1x16x16x8xbf16>
    tpu.vector_store %arg3[%c0_101, %c1_102, %c0_103, %c0_104, %c0_105], %122 {strides = array<i32>} : memref<1x4x16x16x8xbf16, #tpu.memory_space<vmem>>, vector<1x1x16x16x8xbf16>,
    %c2_106 = arith.constant 2 : index
    %c0_107 = arith.constant 0 : index
    %c0_108 = arith.constant 0 : index
    %c0_109 = arith.constant 0 : index
    %123 = vector.load %arg5[%c2_106, %c0_107, %c0_108, %c0_109] : memref<4x16x16x8xf32, #tpu.memory_space<vmem>>, vector<1x16x16x8xf32>
    %124 = vector.shape_cast %123 : vector<1x16x16x8xf32> to vector<16x16x8xf32>
    %125 = vector.shape_cast %85 : vector<8xf32> to vector<1x1x8xf32>
    %126 = vector.broadcast %125 : vector<1x1x8xf32> to vector<16x16x8xf32>
    %127 = arith.subf %124, %126 : vector<16x16x8xf32>
    %128 = vector.shape_cast %94 : vector<8xf32> to vector<1x1x8xf32>
    %129 = vector.broadcast %128 : vector<1x1x8xf32> to vector<16x16x8xf32>
    %130 = arith.mulf %127, %129 : vector<16x16x8xf32>
    %cst_110 = arith.constant 0.000000e+00 : f32
    %131 = vector.broadcast %cst_110 : f32 to vector<16x16x8xf32>
    %132 = arith.maximumf %130, %131 : vector<16x16x8xf32>
    %133 = arith.truncf %132 : vector<16x16x8xf32> to vector<16x16x8xbf16>
    %c0_111 = arith.constant 0 : index
    %c2_112 = arith.constant 2 : index
    %c0_113 = arith.constant 0 : index
    %c0_114 = arith.constant 0 : index
    %c0_115 = arith.constant 0 : index
    %134 = vector.load %arg3[%c0_111, %c2_112, %c0_113, %c0_114, %c0_115] : memref<1x4x16x16x8xbf16, #tpu.memory_space<vmem>>, vector<1x1x16x16x8xbf16>
    %135 = vector.shape_cast %134 : vector<1x1x16x16x8xbf16> to vector<16x16x8xbf16>
    %136 = vector.shape_cast %133 : vector<16x16x8xbf16> to vector<1x1x16x16x8xbf16>
    tpu.vector_store %arg3[%c0_111, %c2_112, %c0_113, %c0_114, %c0_115], %136 {strides = array<i32>} : memref<1x4x16x16x8xbf16, #tpu.memory_space<vmem>>, vector<1x1x16x16x8xbf16>,
    %c3_116 = arith.constant 3 : index
    %c0_117 = arith.constant 0 : index
    %c0_118 = arith.constant 0 : index
    %c0_119 = arith.constant 0 : index
    %137 = vector.load %arg5[%c3_116, %c0_117, %c0_118, %c0_119] : memref<4x16x16x8xf32, #tpu.memory_space<vmem>>, vector<1x16x16x8xf32>
    %138 = vector.shape_cast %137 : vector<1x16x16x8xf32> to vector<16x16x8xf32>
    %139 = vector.shape_cast %85 : vector<8xf32> to vector<1x1x8xf32>
    %140 = vector.broadcast %139 : vector<1x1x8xf32> to vector<16x16x8xf32>
    %141 = arith.subf %138, %140 : vector<16x16x8xf32>
    %142 = vector.shape_cast %94 : vector<8xf32> to vector<1x1x8xf32>
    %143 = vector.broadcast %142 : vector<1x1x8xf32> to vector<16x16x8xf32>
    %144 = arith.mulf %141, %143 : vector<16x16x8xf32>
    %cst_120 = arith.constant 0.000000e+00 : f32
    %145 = vector.broadcast %cst_120 : f32 to vector<16x16x8xf32>
    %146 = arith.maximumf %144, %145 : vector<16x16x8xf32>
    %147 = arith.truncf %146 : vector<16x16x8xf32> to vector<16x16x8xbf16>
    %c0_121 = arith.constant 0 : index
    %c3_122 = arith.constant 3 : index
    %c0_123 = arith.constant 0 : index
    %c0_124 = arith.constant 0 : index
    %c0_125 = arith.constant 0 : index
    %148 = vector.load %arg3[%c0_121, %c3_122, %c0_123, %c0_124, %c0_125] : memref<1x4x16x16x8xbf16, #tpu.memory_space<vmem>>, vector<1x1x16x16x8xbf16>
    %149 = vector.shape_cast %148 : vector<1x1x16x16x8xbf16> to vector<16x16x8xbf16>
    %150 = vector.shape_cast %147 : vector<16x16x8xbf16> to vector<1x1x16x16x8xbf16>
    tpu.vector_store %arg3[%c0_121, %c3_122, %c0_123, %c0_124, %c0_125], %150 {strides = array<i32>} : memref<1x4x16x16x8xbf16, #tpu.memory_space<vmem>>, vector<1x1x16x16x8xbf16>,
    return
  }
  func.func @transform_0(%arg0: i32) -> (i32, i32, i32) {
    %c0_i32 = arith.constant 0 : i32
    %c0_i32_0 = arith.constant 0 : i32
    %c0_i32_1 = arith.constant 0 : i32
    return %arg0, %c0_i32, %c0_i32_0 : i32, i32, i32
  }
  func.func @transform_1(%arg0: i32) -> (i32, i32) {
    %c0_i32 = arith.constant 0 : i32
    %c0_i32_0 = arith.constant 0 : i32
    %c0_i32_1 = arith.constant 0 : i32
    return %c0_i32, %c0_i32_0 : i32, i32
  }
  func.func @transform_2(%arg0: i32) -> (i32, i32, i32, i32, i32) {
    %c0_i32 = arith.constant 0 : i32
    %c0_i32_0 = arith.constant 0 : i32
    %c0_i32_1 = arith.constant 0 : i32
    %c0_i32_2 = arith.constant 0 : i32
    %c0_i32_3 = arith.constant 0 : i32
    return %arg0, %c0_i32, %c0_i32_0, %c0_i32_1, %c0_i32_2 : i32, i32, i32, i32, i32
  }
}

</mosaic_0001>

<llo_original>
// kernel: unet_up_forward.1
$region0: #{unet_up_forward.1}
  #allocation0 [shape = 'u32[]', space=smem, size = 0x4, offset = 0x4, fixed_abs, tag = 'smem constant byte address 0x4 - core index']
  #allocation1 [shape = 'u32[144,128]{1,0:T(1,128)}', space=vmem, size = 0x12000, scoped, tag = 'internal scratch']
  #allocation2 [shape = 'f32[18,18,128]{2,1,0:T(8,128)}', space=vmem, size = 0x36000, scoped, tag = 'scratch operand']
  #allocation3 [shape = 'f32[4,16,16,8]{3,2,1,0:T(8,128)}', space=vmem, size = 0x80000, scoped, tag = 'scratch operand']
  %s0 = inlined_call_operand.vmem [shape: bf16[2,256,4], index: 0, kind: input, shape index: {}]
  %s1 = inlined_call_operand.vmem [shape: bf16[4,128], index: 1, kind: input, shape index: {}]
  %s2 = inlined_call_operand.vmem [shape: bf16[2,4,16,16,8], index: 2, kind: output, shape index: {}]
  %s3 = sld [smem:[#allocation0]]
  $region41: #{unet_up_forward.1} parent=0
    _
  %s5 = ssub.s32 1, %s3
  %s6 = scalar_select 0, %s5, %s3
  loop: start=0, step=1, limit=4
  $region2: #{unet_up_forward.1} parent=0 // loop_pre_header
    _
  $region3: #{unet_up_forward.1} parent=0 // loop_header
    %s8 = sphi 0, %s12
    %p9 = scmp.ge.s32.totalorder %s8, 4
    %s18 = sphi 0, %s20
    %s21 = sphi 0, %s18
    %s22 = sphi 0, %s21
    %s38 = sphi 0, %s22
    %s42 = sphi 0, %s42
    %s44 = sphi 0, %s42
    %s45 = sphi 0, %s44
    %s59 = sphi 0, %s45
    %s65 = sphi 0, %s67
    %s68 = sphi 0, %s65
    %s69 = sphi 0, %s68
    %s85 = sphi 0, %s69
  $region4: #{unet_up_forward.1} parent=0 // loop_header_branch
    %11 = sbr.rel (%p9) target = $region8
  $region5: #{unet_up_forward.1} parent=0 // loop_body
    %s13 = ssub.s32 %s8, 1
    %s14 = ssub.s32 %s8, 2
    %s15 = sadd.s32 %s8, 1
    %s16 = ssub.s32 %s8, %s15
    %p17 = scmp.eq.s32.totalorder %s16, 0
    %s19 = sadd.s32 %s18, 1
    %s20 = scalar_select %p17, %s18, %s19
    %p23 = pneg %p17
    %p24 = scmp.eq.s32.totalorder %s8, 1
    %p25 = por %p23, %p24
    %p26 = scmp.ne.s32.totalorder %s18, %s21
    %p27 = scmp.eq.s32.totalorder %s8, 0
    %p28 = por %p26, %p27
    %p29 = scmp.ne.s32.totalorder %s18, %s21
    %p30 = scmp.eq.s32.totalorder %s13, 1
    %p31 = por %p29, %p30
    %p32 = scmp.ne.s32.totalorder %s21, %s22
    %p33 = scmp.eq.s32.totalorder %s13, 0
    %p34 = por %p32, %p33
    %p35 = scmp.ne.s32.totalorder %s21, %s22
    %p36 = scmp.eq.s32.totalorder %s14, 1
    %p37 = por %p35, %p36
    %p39 = scmp.ne.s32.totalorder %s22, %s38
    %p40 = scmp.eq.s32.totalorder %s14, 0
    %p41 = por %p39, %p40
    %s43 = sadd.s32 %s42, 1
    %p46 = scmp.eq.s32.totalorder %s8, 1
    %p47 = scmp.ne.s32.totalorder %s42, %s44
    %p48 = scmp.eq.s32.totalorder %s8, 0
    %p49 = por %p47, %p48
    %p50 = scmp.ne.s32.totalorder %s42, %s44
    %p51 = scmp.eq.s32.totalorder %s13, 1
    %p52 = por %p50, %p51
    %p53 = scmp.ne.s32.totalorder %s44, %s45
    %p54 = scmp.eq.s32.totalorder %s13, 0
    %p55 = por %p53, %p54
    %p56 = scmp.ne.s32.totalorder %s44, %s45
    %p57 = scmp.eq.s32.totalorder %s14, 1
    %p58 = por %p56, %p57
    %p60 = scmp.ne.s32.totalorder %s45, %s59
    %p61 = scmp.eq.s32.totalorder %s14, 0
    %p62 = por %p60, %p61
    %s63 = ssub.s32 %s8, %s15
    %p64 = scmp.eq.s32.totalorder %s63, 0
    %s66 = sadd.s32 %s65, 1
    %s67 = scalar_select %p64, %s65, %s66
    %p70 = pneg %p64
    %p71 = scmp.eq.s32.totalorder %s8, 1
    %p72 = por %p70, %p71
    %p73 = scmp.ne.s32.totalorder %s65, %s68
    %p74 = scmp.eq.s32.totalorder %s8, 0
    %p75 = por %p73, %p74
    %p76 = scmp.ne.s32.totalorder %s65, %s68
    %p77 = scmp.eq.s32.totalorder %s13, 1
    %p78 = por %p76, %p77
    %p79 = scmp.ne.s32.totalorder %s68, %s69
    %p80 = scmp.eq.s32.totalorder %s13, 0
    %p81 = por %p79, %p80
    %p82 = scmp.ne.s32.totalorder %s68, %s69
    %p83 = scmp.eq.s32.totalorder %s14, 1
    %p84 = por %p82, %p83
    %p86 = scmp.ne.s32.totalorder %s69, %s85
    %p87 = scmp.eq.s32.totalorder %s14, 0
    %p88 = por %p86, %p87
    %p89 = scmp.le.s32.totalorder 1, %s8
    %p90 = scmp.lt.s32.totalorder %s8, 3
    %p91 = pnand %p89, %p90
    %p92 = pneg %p91
    // Predicated region
    $region9: #{unet_up_forward.1} parent=5 // pred_check
      _
    $region10: #{unet_up_forward.1} parent=5 // pred_check_branch
      %94 = sbr.rel (%p91) target = $region12
    $region11: #{unet_up_forward.1} parent=5 // pred_region
      %s95 = ssub.s32 %s8, 1
      // Predicated region
      $region13: #{unet_up_forward.1} parent=11 // pred_check
        %p96 = pneg %p55
      $region14: #{unet_up_forward.1} parent=11 // pred_check_branch
        %98 = sbr.rel (%p96) target = $region16
      $region15: #{unet_up_forward.1} parent=11 // pred_region
        _
      $region16: #{unet_up_forward.1} parent=11 // pred_fallthru
        _
    $region12: #{unet_up_forward.1} parent=5 // pred_fallthru
      _
    %p99 = scmp.lt.s32.totalorder %s8, 2
    // Predicated region
    $region17: #{unet_up_forward.1} parent=5 // pred_check
      %p100 = pneg %p99
    $region18: #{unet_up_forward.1} parent=5 // pred_check_branch
      %102 = sbr.rel (%p100) target = $region20
    $region19: #{unet_up_forward.1} parent=5 // pred_region
      // Predicated region
      $region21: #{unet_up_forward.1} parent=19 // pred_check
        %p103 = pneg %p28
      $region22: #{unet_up_forward.1} parent=19 // pred_check_branch
        %105 = sbr.rel (%p103) target = $region24
      $region23: #{unet_up_forward.1} parent=19 // pred_region
        %p106 = scmp.lt.s32.totalorder %s8, 1
        %s107 = scalar_select %p106, %s8, 1
        %s108 = smul.addr %s107, 32
        %s109 = smul.addr %s108, 4
        %s110 = scalar_lea.vmem %s0, %s109
      $region24: #{unet_up_forward.1} parent=19 // pred_fallthru
        _
    $region20: #{unet_up_forward.1} parent=5 // pred_fallthru
      _
    %p111 = scmp.le.s32.totalorder 1, %s8
    %p112 = scmp.lt.s32.totalorder %s8, 3
    %p113 = pnand %p111, %p112
    %p114 = pneg %p113
    // Predicated region
    $region25: #{unet_up_forward.1} parent=5 // pred_check
      _
    $region26: #{unet_up_forward.1} parent=5 // pred_check_branch
      %116 = sbr.rel (%p113) target = $region28
    $region27: #{unet_up_forward.1} parent=5 // pred_region
      %s117 = ssub.s32 %s8, 1
      %p118 = scmp.lt.s32.totalorder %s13, 1
      %s119 = scalar_select %p118, %s13, 1
      %s120 = smul.addr %s119, 32
      %s121 = smul.addr %s120, 4
      %s122 = scalar_lea.vmem %s0, %s121
      %p123 = pneg %p34
      %p124 = pneg %p31
      %p125 = pneg %p55
      %p126 = pneg %p52
      %p127 = pneg %p81
      %p128 = pneg %p78
      %p129 = scmp.lt.s32.totalorder %s13, 1
      %s130 = scalar_select %p129, %s13, 1
      %s131 = smul.addr %s130, 128
      %s132 = smul.addr %s131, 4
      %s133 = scalar_lea.vmem %s2, %s132
      %p134 = scmp.lt.s32.totalorder %s13, 1
      %s135 = scalar_select %p134, %s13, 1
      %s136 = smul.addr %s135, 32
      %s137 = smul.addr %s136, 4
      %s138 = scalar_lea.vmem %s0, %s137
      %p139 = scmp.lt.s32.totalorder %s13, 1
      %s140 = scalar_select %p139, %s13, 1
      %s141 = smul.addr %s140, 128
      %s142 = smul.addr %s141, 4
      %s143 = scalar_lea.vmem %s2, %s142
      %v145 = vld [vmem:[%s138] sm:$0xf]
      %v146 = vld [vmem:[%s138 + $0x4] sm:$0xf]
      %v147 = vld [vmem:[%s138 + $0x8] sm:$0xf]
      %v148 = vld [vmem:[%s138 + $0xc] sm:$0xf]
      %v149 = vld [vmem:[%s138 + $0x10] sm:$0xf]
      %v150 = vld [vmem:[%s138 + $0x14] sm:$0xf]
      %v151 = vld [vmem:[%s138 + $0x18] sm:$0xf]
      %v152 = vld [vmem:[%s138 + $0x1c] sm:$0xf]
      %v153 = vld [vmem:[%s138 + $0x20] sm:$0xf]
      %v154 = vld [vmem:[%s138 + $0x24] sm:$0xf]
      %v155 = vld [vmem:[%s138 + $0x28] sm:$0xf]
      %v156 = vld [vmem:[%s138 + $0x2c] sm:$0xf]
      %v157 = vld [vmem:[%s138 + $0x30] sm:$0xf]
      %v158 = vld [vmem:[%s138 + $0x34] sm:$0xf]
      %v159 = vld [vmem:[%s138 + $0x38] sm:$0xf]
      %v160 = vld [vmem:[%s138 + $0x3c] sm:$0xf]
      %v161 = vld [vmem:[%s138 + $0x40] sm:$0xf]
      %v162 = vld [vmem:[%s138 + $0x44] sm:$0xf]
      %v163 = vld [vmem:[%s138 + $0x48] sm:$0xf]
      %v164 = vld [vmem:[%s138 + $0x4c] sm:$0xf]
      %v165 = vld [vmem:[%s138 + $0x50] sm:$0xf]
      %v166 = vld [vmem:[%s138 + $0x54] sm:$0xf]
      %v167 = vld [vmem:[%s138 + $0x58] sm:$0xf]
      %v168 = vld [vmem:[%s138 + $0x5c] sm:$0xf]
      %v169 = vld [vmem:[%s138 + $0x60] sm:$0xf]
      %v170 = vld [vmem:[%s138 + $0x64] sm:$0xf]
      %v171 = vld [vmem:[%s138 + $0x68] sm:$0xf]
      %v172 = vld [vmem:[%s138 + $0x6c] sm:$0xf]
      %v173 = vld [vmem:[%s138 + $0x70] sm:$0xf]
      %v174 = vld [vmem:[%s138 + $0x74] sm:$0xf]
      %v175 = vld [vmem:[%s138 + $0x78] sm:$0xf]
      %v176 = vld [vmem:[%s138 + $0x7c] sm:$0xf]
      %v177 = vld [vmem:[%s1] sm:$0x3]
      %v210 = vunpack.c.l.b16 %v145
      %v211 = vunpack.c.l.b16 %v146
      %v212 = vunpack.c.l.b16 %v147
      %v213 = vunpack.c.l.b16 %v148
      %v214 = vunpack.c.l.b16 %v149
      %v215 = vunpack.c.l.b16 %v150
      %v216 = vunpack.c.l.b16 %v151
      %v217 = vunpack.c.l.b16 %v152
      %v218 = vunpack.c.l.b16 %v153
      %v219 = vunpack.c.l.b16 %v154
      %v220 = vunpack.c.l.b16 %v155
      %v221 = vunpack.c.l.b16 %v156
      %v222 = vunpack.c.l.b16 %v157
      %v223 = vunpack.c.l.b16 %v158
      %v224 = vunpack.c.l.b16 %v159
      %v225 = vunpack.c.l.b16 %v160
      %v226 = vunpack.c.l.b16 %v161
      %v227 = vunpack.c.l.b16 %v162
      %v228 = vunpack.c.l.b16 %v163
      %v229 = vunpack.c.l.b16 %v164
      %v230 = vunpack.c.l.b16 %v165
      %v231 = vunpack.c.l.b16 %v166
      %v232 = vunpack.c.l.b16 %v167
      %v233 = vunpack.c.l.b16 %v168
      %v234 = vunpack.c.l.b16 %v169
      %v235 = vunpack.c.l.b16 %v170
      %v236 = vunpack.c.l.b16 %v171
      %v237 = vunpack.c.l.b16 %v172
      %v238 = vunpack.c.l.b16 %v173
      %v239 = vunpack.c.l.b16 %v174
      %v240 = vunpack.c.l.b16 %v175
      %v241 = vunpack.c.l.b16 %v176
      %v242 = vpack.c.b16 %v211, %v210
      %v243 = vpack.c.b16 %v213, %v212
      %v244 = vpack.c.b16 %v215, %v214
      %v245 = vpack.c.b16 %v217, %v216
      %v246 = vpack.c.b16 %v219, %v218
      %v247 = vpack.c.b16 %v221, %v220
      %v248 = vpack.c.b16 %v223, %v222
      %v249 = vpack.c.b16 %v225, %v224
      %v250 = vpack.c.b16 %v227, %v226
      %v251 = vpack.c.b16 %v229, %v228
      %v252 = vpack.c.b16 %v231, %v230
      %v253 = vpack.c.b16 %v233, %v232
      %v254 = vpack.c.b16 %v235, %v234
      %v255 = vpack.c.b16 %v237, %v236
      %v256 = vpack.c.b16 %v239, %v238
      %v257 = vpack.c.b16 %v241, %v240
      %vm258 = vcmask 31744
      %v260 = vsel %vm258, %v242, 0
      %v263 = vsel %vm258, %v243, 0
      %v266 = vsel %vm258, %v244, 0
      %v269 = vsel %vm258, %v245, 0
      %v272 = vsel %vm258, %v246, 0
      %v275 = vsel %vm258, %v247, 0
      %v278 = vsel %vm258, %v248, 0
      %v281 = vsel %vm258, %v249, 0
      %v284 = vsel %vm258, %v250, 0
      %v287 = vsel %vm258, %v251, 0
      %v290 = vsel %vm258, %v252, 0
      %v293 = vsel %vm258, %v253, 0
      %v296 = vsel %vm258, %v254, 0
      %v299 = vsel %vm258, %v255, 0
      %v302 = vsel %vm258, %v256, 0
      %v305 = vsel %vm258, %v257, 0
      %vm307 = vcmask 1041408
      %v309 = vsel %vm307, %v177, 0
      %311 = vmatprep.subr.bf16.mxu0 0
      %312 = vmatpush1.bf16.msra.mxu0 %v309
      %313 = vmatprep.subr.bf16.mxu0 0
      %314 = vmatpush1.bf16.msra.mxu0 0
      %315 = vmatprep.subr.bf16.mxu0 0
      %316 = vmatpush1.bf16.msra.mxu0 0
      %317 = vmatprep.subr.bf16.mxu0 0
      %318 = vmatpush1.bf16.msra.mxu0 0
      %319 = vmatprep.subr.bf16.mxu0 0
      %320 = vmatpush1.bf16.msra.mxu0 0
      %321 = vmatprep.subr.bf16.mxu0 0
      %322 = vmatpush1.bf16.msra.mxu0 0
      %323 = vmatprep.subr.bf16.mxu0 0
      %324 = vmatpush1.bf16.msra.mxu0 0
      %325 = vmatprep.subr.bf16.mxu0 0
      %326 = vmatpush1.bf16.msra.mxu0 0
      %327 = vmatprep.subr.bf16.mxu0 0
      %328 = vmatpush1.bf16.msra.mxu0 0
      %329 = vmatprep.subr.bf16.mxu0 0
      %330 = vmatpush1.bf16.msra.mxu0 0
      %331 = vmatprep.subr.bf16.mxu0 0
      %332 = vmatpush1.bf16.msra.mxu0 0
      %333 = vmatprep.subr.bf16.mxu0 0
      %334 = vmatpush1.bf16.msra.mxu0 0
      %335 = vmatprep.subr.bf16.mxu0 0
      %336 = vmatpush1.bf16.msra.mxu0 0
      %337 = vmatprep.subr.bf16.mxu0 0
      %338 = vmatpush1.bf16.msra.mxu0 0
      %339 = vmatprep.subr.bf16.mxu0 0
      %340 = vmatpush1.bf16.msra.mxu0 0
      %341 = vmatprep.subr.bf16.mxu0 0
      %342 = vmatpush1.bf16.msra.mxu0 0
      %343 = vmatprep.mubr.bf16.mxu0 0
      %344 = vmatmul.mubr.bf16.gmra.mrb[0].mxu0 %v260
      %v345 = vpop.f32.mrb[0].mxu0
      %v346 = vadd.f32 0.0, %v345
      %v347 = vpop.f32.mrb[0].mxu0
      %v348 = vpop.f32.mrb[0].mxu0
      %v349 = vadd.f32 0.0, %v348
      %v350 = vpop.f32.mrb[0].mxu0
      %351 = vmatprep.mubr.bf16.mxu0 0
      %352 = vmatmul.mubr.bf16.gmra.mrb[0].mxu0 %v263
      %v353 = vpop.f32.mrb[0].mxu0
      %v354 = vadd.f32 0.0, %v353
      %v355 = vpop.f32.mrb[0].mxu0
      %v356 = vpop.f32.mrb[0].mxu0
      %v357 = vadd.f32 0.0, %v356
      %v358 = vpop.f32.mrb[0].mxu0
      %359 = vmatprep.mubr.bf16.mxu0 0
      %360 = vmatmul.mubr.bf16.gmra.mrb[0].mxu0 %v266
      %v361 = vpop.f32.mrb[0].mxu0
      %v362 = vadd.f32 0.0, %v361
      %v363 = vpop.f32.mrb[0].mxu0
      %v364 = vpop.f32.mrb[0].mxu0
      %v365 = vadd.f32 0.0, %v364
      %v366 = vpop.f32.mrb[0].mxu0
      %367 = vmatprep.mubr.bf16.mxu0 0
      %368 = vmatmul.mubr.bf16.gmra.mrb[0].mxu0 %v269
      %v369 = vpop.f32.mrb[0].mxu0
      %v370 = vadd.f32 0.0, %v369
      %v371 = vpop.f32.mrb[0].mxu0
      %v372 = vpop.f32.mrb[0].mxu0
      %v373 = vadd.f32 0.0, %v372
      %v374 = vpop.f32.mrb[0].mxu0
      %375 = vmatprep.mubr.bf16.mxu0 0
      %376 = vmatmul.mubr.bf16.gmra.mrb[0].mxu0 %v272
      %v377 = vpop.f32.mrb[0].mxu0
      %v378 = vadd.f32 0.0, %v377
      %v379 = vpop.f32.mrb[0].mxu0
      %v380 = vpop.f32.mrb[0].mxu0
      %v381 = vadd.f32 0.0, %v380
      %v382 = vpop.f32.mrb[0].mxu0
      %383 = vmatprep.mubr.bf16.mxu0 0
      %384 = vmatmul.mubr.bf16.gmra.mrb[0].mxu0 %v275
      %v385 = vpop.f32.mrb[0].mxu0
      %v386 = vadd.f32 0.0, %v385
      %v387 = vpop.f32.mrb[0].mxu0
      %v388 = vpop.f32.mrb[0].mxu0
      %v389 = vadd.f32 0.0, %v388
      %v390 = vpop.f32.mrb[0].mxu0
      %391 = vmatprep.mubr.bf16.mxu0 0
      %392 = vmatmul.mubr.bf16.gmra.mrb[0].mxu0 %v278
      %v393 = vpop.f32.mrb[0].mxu0
      %v394 = vadd.f32 0.0, %v393
      %v395 = vpop.f32.mrb[0].mxu0
      %v396 = vpop.f32.mrb[0].mxu0
      %v397 = vadd.f32 0.0, %v396
      %v398 = vpop.f32.mrb[0].mxu0
      %399 = vmatprep.mubr.bf16.mxu0 0
      %400 = vmatmul.mubr.bf16.gmra.mrb[0].mxu0 %v281
      %v401 = vpop.f32.mrb[0].mxu0
      %v402 = vadd.f32 0.0, %v401
      %v403 = vpop.f32.mrb[0].mxu0
      %v404 = vpop.f32.mrb[0].mxu0
      %v405 = vadd.f32 0.0, %v404
      %v406 = vpop.f32.mrb[0].mxu0
      %407 = vmatprep.mubr.bf16.mxu0 0
      %408 = vmatmul.mubr.bf16.gmra.mrb[0].mxu0 %v284
      %v409 = vpop.f32.mrb[0].mxu0
      %v410 = vadd.f32 0.0, %v409
      %v411 = vpop.f32.mrb[0].mxu0
      %v412 = vpop.f32.mrb[0].mxu0
      %v413 = vadd.f32 0.0, %v412
      %v414 = vpop.f32.mrb[0].mxu0
      %415 = vmatprep.mubr.bf16.mxu0 0
      %416 = vmatmul.mubr.bf16.gmra.mrb[0].mxu0 %v287
      %v417 = vpop.f32.mrb[0].mxu0
      %v418 = vadd.f32 0.0, %v417
      %v419 = vpop.f32.mrb[0].mxu0
      %v420 = vpop.f32.mrb[0].mxu0
      %v421 = vadd.f32 0.0, %v420
      %v422 = vpop.f32.mrb[0].mxu0
      %423 = vmatprep.mubr.bf16.mxu0 0
      %424 = vmatmul.mubr.bf16.gmra.mrb[0].mxu0 %v290
      %v425 = vpop.f32.mrb[0].mxu0
      %v426 = vadd.f32 0.0, %v425
      %v427 = vpop.f32.mrb[0].mxu0
      %v428 = vpop.f32.mrb[0].mxu0
      %v429 = vadd.f32 0.0, %v428
      %v430 = vpop.f32.mrb[0].mxu0
      %431 = vmatprep.mubr.bf16.mxu0 0
      %432 = vmatmul.mubr.bf16.gmra.mrb[0].mxu0 %v293
      %v433 = vpop.f32.mrb[0].mxu0
      %v434 = vadd.f32 0.0, %v433
      %v435 = vpop.f32.mrb[0].mxu0
      %v436 = vpop.f32.mrb[0].mxu0
      %v437 = vadd.f32 0.0, %v436
      %v438 = vpop.f32.mrb[0].mxu0
      %439 = vmatprep.mubr.bf16.mxu0 0
      %440 = vmatmul.mubr.bf16.gmra.mrb[0].mxu0 %v296
      %v441 = vpop.f32.mrb[0].mxu0
      %v442 = vadd.f32 0.0, %v441
      %v443 = vpop.f32.mrb[0].mxu0
      %v444 = vpop.f32.mrb[0].mxu0
      %v445 = vadd.f32 0.0, %v444
      %v446 = vpop.f32.mrb[0].mxu0
      %447 = vmatprep.mubr.bf16.mxu0 0
      %448 = vmatmul.mubr.bf16.gmra.mrb[0].mxu0 %v299
      %v449 = vpop.f32.mrb[0].mxu0
      %v450 = vadd.f32 0.0, %v449
      %v451 = vpop.f32.mrb[0].mxu0
      %v452 = vpop.f32.mrb[0].mxu0
      %v453 = vadd.f32 0.0, %v452
      %v454 = vpop.f32.mrb[0].mxu0
      %455 = vmatprep.mubr.bf16.mxu0 0
      %456 = vmatmul.mubr.bf16.gmra.mrb[0].mxu0 %v302
      %v457 = vpop.f32.mrb[0].mxu0
      %v458 = vadd.f32 0.0, %v457
      %v459 = vpop.f32.mrb[0].mxu0
      %v460 = vpop.f32.mrb[0].mxu0
      %v461 = vadd.f32 0.0, %v460
      %v462 = vpop.f32.mrb[0].mxu0
      %463 = vmatprep.mubr.bf16.mxu0 0
      %464 = vmatmul.mubr.bf16.gmra.mrb[0].mxu0 %v305
      %v465 = vpop.f32.mrb[0].mxu0
      %v466 = vadd.f32 0.0, %v465
      %v467 = vpop.f32.mrb[0].mxu0
      %v468 = vpop.f32.mrb[0].mxu0
      %v469 = vadd.f32 0.0, %v468
      %v470 = vpop.f32.mrb[0].mxu0
      %471 = vdwg.mxu0
      %472 = vst [vmem:[#allocation2] sm:$0xff] 0.0
      %473 = vst [vmem:[#allocation2 + $0x8] sm:$0xff] 0.0
      %474 = vst [vmem:[#allocation2 + $0x10] sm:$0x3] 0.0
      %s475 = scalar_lea.vmem [#allocation2], 408
      %476 = vst [vmem:[%s475] sm:$0xff] 0.0
      %477 = vst [vmem:[%s475 + $0x8] sm:$0xff] 0.0
      %478 = vst [vmem:[%s475 + $0x10] sm:$0x3] 0.0
      %479 = vst [vmem:[#allocation2] sm:$0x1] 0.0
      %480 = vst [vmem:[#allocation2 + $0x18] sm:$0x1] 0.0
      %481 = vst [vmem:[#allocation2 + $0x30] sm:$0x1] 0.0
      %482 = vst [vmem:[#allocation2 + $0x48] sm:$0x1] 0.0
      %483 = vst [vmem:[#allocation2 + $0x60] sm:$0x1] 0.0
      %484 = vst [vmem:[#allocation2 + $0x78] sm:$0x1] 0.0
      %485 = vst [vmem:[#allocation2 + $0x90] sm:$0x1] 0.0
      %486 = vst [vmem:[#allocation2 + $0xa8] sm:$0x1] 0.0
      %487 = vst [vmem:[#allocation2 + $0xc0] sm:$0x1] 0.0
      %488 = vst [vmem:[#allocation2 + $0xd8] sm:$0x1] 0.0
      %489 = vst [vmem:[#allocation2 + $0xf0] sm:$0x1] 0.0
      %490 = vst [vmem:[#allocation2 + $0x108] sm:$0x1] 0.0
      %491 = vst [vmem:[#allocation2 + $0x120] sm:$0x1] 0.0
      %492 = vst [vmem:[#allocation2 + $0x138] sm:$0x1] 0.0
      %493 = vst [vmem:[#allocation2 + $0x150] sm:$0x1] 0.0
      %494 = vst [vmem:[#allocation2 + $0x168] sm:$0x1] 0.0
      %495 = vst [vmem:[#allocation2 + $0x180] sm:$0x1] 0.0
      %496 = vst [vmem:[#allocation2 + $0x198] sm:$0x1] 0.0
      %497 = vst [vmem:[#allocation2 + $0x11] sm:$0x1] 0.0
      %498 = vst [vmem:[#allocation2 + $0x29] sm:$0x1] 0.0
      %499 = vst [vmem:[#allocation2 + $0x41] sm:$0x1] 0.0
      %500 = vst [vmem:[#allocation2 + $0x59] sm:$0x1] 0.0
      %501 = vst [vmem:[#allocation2 + $0x71] sm:$0x1] 0.0
      %502 = vst [vmem:[#allocation2 + $0x89] sm:$0x1] 0.0
      %503 = vst [vmem:[#allocation2 + $0xa1] sm:$0x1] 0.0
      %504 = vst [vmem:[#allocation2 + $0xb9] sm:$0x1] 0.0
      %505 = vst [vmem:[#allocation2 + $0xd1] sm:$0x1] 0.0
      %506 = vst [vmem:[#allocation2 + $0xe9] sm:$0x1] 0.0
      %507 = vst [vmem:[#allocation2 + $0x101] sm:$0x1] 0.0
      %508 = vst [vmem:[#allocation2 + $0x119] sm:$0x1] 0.0
      %509 = vst [vmem:[#allocation2 + $0x131] sm:$0x1] 0.0
      %510 = vst [vmem:[#allocation2 + $0x149] sm:$0x1] 0.0
      %511 = vst [vmem:[#allocation2 + $0x161] sm:$0x1] 0.0
      %512 = vst [vmem:[#allocation2 + $0x179] sm:$0x1] 0.0
      %513 = vst [vmem:[#allocation2 + $0x191] sm:$0x1] 0.0
      %514 = vst [vmem:[#allocation2 + $0x1a9] sm:$0x1] 0.0
      %s515 = scalar_lea.vmem [#allocation2], 24
      %516 = vst [vmem:[%s515 + $0x1] sm:$0xff] %v346
      %517 = vst [vmem:[%s515 + $0x9] sm:$0xff] %v349
      %518 = vst [vmem:[%s515 + $0x19] sm:$0xff] %v354
      %519 = vst [vmem:[%s515 + $0x21] sm:$0xff] %v357
      %520 = vst [vmem:[%s515 + $0x31] sm:$0xff] %v362
      %521 = vst [vmem:[%s515 + $0x39] sm:$0xff] %v365
      %522 = vst [vmem:[%s515 + $0x49] sm:$0xff] %v370
      %523 = vst [vmem:[%s515 + $0x51] sm:$0xff] %v373
      %524 = vst [vmem:[%s515 + $0x61] sm:$0xff] %v378
      %525 = vst [vmem:[%s515 + $0x69] sm:$0xff] %v381
      %526 = vst [vmem:[%s515 + $0x79] sm:$0xff] %v386
      %527 = vst [vmem:[%s515 + $0x81] sm:$0xff] %v389
      %528 = vst [vmem:[%s515 + $0x91] sm:$0xff] %v394
      %529 = vst [vmem:[%s515 + $0x99] sm:$0xff] %v397
      %530 = vst [vmem:[%s515 + $0xa9] sm:$0xff] %v402
      %531 = vst [vmem:[%s515 + $0xb1] sm:$0xff] %v405
      %532 = vst [vmem:[%s515 + $0xc1] sm:$0xff] %v410
      %533 = vst [vmem:[%s515 + $0xc9] sm:$0xff] %v413
      %534 = vst [vmem:[%s515 + $0xd9] sm:$0xff] %v418
      %535 = vst [vmem:[%s515 + $0xe1] sm:$0xff] %v421
      %536 = vst [vmem:[%s515 + $0xf1] sm:$0xff] %v426
      %537 = vst [vmem:[%s515 + $0xf9] sm:$0xff] %v429
      %538 = vst [vmem:[%s515 + $0x109] sm:$0xff] %v434
      %539 = vst [vmem:[%s515 + $0x111] sm:$0xff] %v437
      %540 = vst [vmem:[%s515 + $0x121] sm:$0xff] %v442
      %541 = vst [vmem:[%s515 + $0x129] sm:$0xff] %v445
      %542 = vst [vmem:[%s515 + $0x139] sm:$0xff] %v450
      %543 = vst [vmem:[%s515 + $0x141] sm:$0xff] %v453
      %544 = vst [vmem:[%s515 + $0x151] sm:$0xff] %v458
      %545 = vst [vmem:[%s515 + $0x159] sm:$0xff] %v461
      %546 = vst [vmem:[%s515 + $0x169] sm:$0xff] %v466
      %547 = vst [vmem:[%s515 + $0x171] sm:$0xff] %v469
      %v548 = vld [vmem:[#allocation2] sm:$0xff]
      %v549 = vld [vmem:[#allocation2 + $0x8] sm:$0xff]
      %v550 = vld [vmem:[#allocation2 + $0x18] sm:$0xff]
      %v551 = vld [vmem:[#allocation2 + $0x20] sm:$0xff]
      %v552 = vld [vmem:[#allocation2 + $0x30] sm:$0xff]
      %v553 = vld [vmem:[#allocation2 + $0x38] sm:$0xff]
      %v554 = vld [vmem:[#allocation2 + $0x48] sm:$0xff]
      %v555 = vld [vmem:[#allocation2 + $0x50] sm:$0xff]
      %v556 = vld [vmem:[#allocation2 + $0x60] sm:$0xff]
      %v557 = vld [vmem:[#allocation2 + $0x68] sm:$0xff]
      %v558 = vld [vmem:[#allocation2 + $0x78] sm:$0xff]
      %v559 = vld [vmem:[#allocation2 + $0x80] sm:$0xff]
      %v560 = vld [vmem:[#allocation2 + $0x90] sm:$0xff]
      %v561 = vld [vmem:[#allocation2 + $0x98] sm:$0xff]
      %v562 = vld [vmem:[#allocation2 + $0xa8] sm:$0xff]
      %v563 = vld [vmem:[#allocation2 + $0xb0] sm:$0xff]
      %v564 = vld [vmem:[#allocation2 + $0xc0] sm:$0xff]
      %v565 = vld [vmem:[#allocation2 + $0xc8] sm:$0xff]
      %v566 = vld [vmem:[#allocation2 + $0xd8] sm:$0xff]
      %v567 = vld [vmem:[#allocation2 + $0xe0] sm:$0xff]
      %v568 = vld [vmem:[#allocation2 + $0xf0] sm:$0xff]
      %v569 = vld [vmem:[#allocation2 + $0xf8] sm:$0xff]
      %v570 = vld [vmem:[#allocation2 + $0x108] sm:$0xff]
      %v571 = vld [vmem:[#allocation2 + $0x110] sm:$0xff]
      %v572 = vld [vmem:[#allocation2 + $0x120] sm:$0xff]
      %v573 = vld [vmem:[#allocation2 + $0x128] sm:$0xff]
      %v574 = vld [vmem:[#allocation2 + $0x138] sm:$0xff]
      %v575 = vld [vmem:[#allocation2 + $0x140] sm:$0xff]
      %v576 = vld [vmem:[#allocation2 + $0x150] sm:$0xff]
      %v577 = vld [vmem:[#allocation2 + $0x158] sm:$0xff]
      %v578 = vld [vmem:[#allocation2 + $0x168] sm:$0xff]
      %v579 = vld [vmem:[#allocation2 + $0x170] sm:$0xff]
      %v580 = vadd.f32 %v548, 0.0
      %v581 = vadd.f32 %v549, 0.0
      %v582 = vadd.f32 %v550, 0.0
      %v583 = vadd.f32 %v551, 0.0
      %v584 = vadd.f32 %v552, 0.0
      %v585 = vadd.f32 %v553, 0.0
      %v586 = vadd.f32 %v554, 0.0
      %v587 = vadd.f32 %v555, 0.0
      %v588 = vadd.f32 %v556, 0.0
      %v589 = vadd.f32 %v557, 0.0
      %v590 = vadd.f32 %v558, 0.0
      %v591 = vadd.f32 %v559, 0.0
      %v592 = vadd.f32 %v560, 0.0
      %v593 = vadd.f32 %v561, 0.0
      %v594 = vadd.f32 %v562, 0.0
      %v595 = vadd.f32 %v563, 0.0
      %v596 = vadd.f32 %v564, 0.0
      %v597 = vadd.f32 %v565, 0.0
      %v598 = vadd.f32 %v566, 0.0
      %v599 = vadd.f32 %v567, 0.0
      %v600 = vadd.f32 %v568, 0.0
      %v601 = vadd.f32 %v569, 0.0
      %v602 = vadd.f32 %v570, 0.0
      %v603 = vadd.f32 %v571, 0.0
      %v604 = vadd.f32 %v572, 0.0
      %v605 = vadd.f32 %v573, 0.0
      %v606 = vadd.f32 %v574, 0.0
      %v607 = vadd.f32 %v575, 0.0
      %v608 = vadd.f32 %v576, 0.0
      %v609 = vadd.f32 %v577, 0.0
      %v610 = vadd.f32 %v578, 0.0
      %v611 = vadd.f32 %v579, 0.0
      %v612 = vld [vmem:[#allocation2 + $0x1] sm:$0xff]
      %v613 = vld [vmem:[#allocation2 + $0x9] sm:$0xff]
      %v614 = vld [vmem:[#allocation2 + $0x19] sm:$0xff]
      %v615 = vld [vmem:[#allocation2 + $0x21] sm:$0xff]
      %v616 = vld [vmem:[#allocation2 + $0x31] sm:$0xff]
      %v617 = vld [vmem:[#allocation2 + $0x39] sm:$0xff]
      %v618 = vld [vmem:[#allocation2 + $0x49] sm:$0xff]
      %v619 = vld [vmem:[#allocation2 + $0x51] sm:$0xff]
      %v620 = vld [vmem:[#allocation2 + $0x61] sm:$0xff]
      %v621 = vld [vmem:[#allocation2 + $0x69] sm:$0xff]
      %v622 = vld [vmem:[#allocation2 + $0x79] sm:$0xff]
      %v623 = vld [vmem:[#allocation2 + $0x81] sm:$0xff]
      %v624 = vld [vmem:[#allocation2 + $0x91] sm:$0xff]
      %v625 = vld [vmem:[#allocation2 + $0x99] sm:$0xff]
      %v626 = vld [vmem:[#allocation2 + $0xa9] sm:$0xff]
      %v627 = vld [vmem:[#allocation2 + $0xb1] sm:$0xff]
      %v628 = vld [vmem:[#allocation2 + $0xc1] sm:$0xff]
      %v629 = vld [vmem:[#allocation2 + $0xc9] sm:$0xff]
      %v630 = vld [vmem:[#allocation2 + $0xd9] sm:$0xff]
      %v631 = vld [vmem:[#allocation2 + $0xe1] sm:$0xff]
      %v632 = vld [vmem:[#allocation2 + $0xf1] sm:$0xff]
      %v633 = vld [vmem:[#allocation2 + $0xf9] sm:$0xff]
      %v634 = vld [vmem:[#allocation2 + $0x109] sm:$0xff]
      %v635 = vld [vmem:[#allocation2 + $0x111] sm:$0xff]
      %v636 = vld [vmem:[#allocation2 + $0x121] sm:$0xff]
      %v637 = vld [vmem:[#allocation2 + $0x129] sm:$0xff]
      %v638 = vld [vmem:[#allocation2 + $0x139] sm:$0xff]
      %v639 = vld [vmem:[#allocation2 + $0x141] sm:$0xff]
      %v640 = vld [vmem:[#allocation2 + $0x151] sm:$0xff]
      %v641 = vld [vmem:[#allocation2 + $0x159] sm:$0xff]
      %v642 = vld [vmem:[#allocation2 + $0x169] sm:$0xff]
      %v643 = vld [vmem:[#allocation2 + $0x171] sm:$0xff]
      %676 = vrot.lane.b32.xlu0 %v612, 120
      %v677 = vpop.permute.xlu0 %676
      %678 = vrot.lane.b32.xlu0 %v613, 120
      %v679 = vpop.permute.xlu0 %678
      %680 = vrot.lane.b32.xlu0 %v614, 120
      %v681 = vpop.permute.xlu0 %680
      %682 = vrot.lane.b32.xlu0 %v615, 120
      %v683 = vpop.permute.xlu0 %682
      %684 = vrot.lane.b32.xlu0 %v616, 120
      %v685 = vpop.permute.xlu0 %684
      %686 = vrot.lane.b32.xlu0 %v617, 120
      %v687 = vpop.permute.xlu0 %686
      %688 = vrot.lane.b32.xlu0 %v618, 120
      %v689 = vpop.permute.xlu0 %688
      %690 = vrot.lane.b32.xlu0 %v619, 120
      %v691 = vpop.permute.xlu0 %690
      %692 = vrot.lane.b32.xlu0 %v620, 120
      %v693 = vpop.permute.xlu0 %692
      %694 = vrot.lane.b32.xlu0 %v621, 120
      %v695 = vpop.permute.xlu0 %694
      %696 = vrot.lane.b32.xlu0 %v622, 120
      %v697 = vpop.permute.xlu0 %696
      %698 = vrot.lane.b32.xlu0 %v623, 120
      %v699 = vpop.permute.xlu0 %698
      %700 = vrot.lane.b32.xlu0 %v624, 120
      %v701 = vpop.permute.xlu0 %700
      %702 = vrot.lane.b32.xlu0 %v625, 120
      %v703 = vpop.permute.xlu0 %702
      %704 = vrot.lane.b32.xlu0 %v626, 120
      %v705 = vpop.permute.xlu0 %704
      %706 = vrot.lane.b32.xlu0 %v627, 120
      %v707 = vpop.permute.xlu0 %706
      %708 = vrot.lane.b32.xlu0 %v628, 120
      %v709 = vpop.permute.xlu0 %708
      %710 = vrot.lane.b32.xlu0 %v629, 120
      %v711 = vpop.permute.xlu0 %710
      %712 = vrot.lane.b32.xlu0 %v630, 120
      %v713 = vpop.permute.xlu0 %712
      %714 = vrot.lane.b32.xlu0 %v631, 120
      %v715 = vpop.permute.xlu0 %714
      %716 = vrot.lane.b32.xlu0 %v632, 120
      %v717 = vpop.permute.xlu0 %716
      %718 = vrot.lane.b32.xlu0 %v633, 120
      %v719 = vpop.permute.xlu0 %718
      %720 = vrot.lane.b32.xlu0 %v634, 120
      %v721 = vpop.permute.xlu0 %720
      %722 = vrot.lane.b32.xlu0 %v635, 120
      %v723 = vpop.permute.xlu0 %722
      %724 = vrot.lane.b32.xlu0 %v636, 120
      %v725 = vpop.permute.xlu0 %724
      %726 = vrot.lane.b32.xlu0 %v637, 120
      %v727 = vpop.permute.xlu0 %726
      %728 = vrot.lane.b32.xlu0 %v638, 120
      %v729 = vpop.permute.xlu0 %728
      %730 = vrot.lane.b32.xlu0 %v639, 120
      %v731 = vpop.permute.xlu0 %730
      %732 = vrot.lane.b32.xlu0 %v640, 120
      %v733 = vpop.permute.xlu0 %732
      %734 = vrot.lane.b32.xlu0 %v641, 120
      %v735 = vpop.permute.xlu0 %734
      %736 = vrot.lane.b32.xlu0 %v642, 120
      %v737 = vpop.permute.xlu0 %736
      %738 = vrot.lane.b32.xlu0 %v643, 120
      %v739 = vpop.permute.xlu0 %738
      %v772 = vadd.f32 %v580, %v677
      %v773 = vadd.f32 %v581, %v679
      %v774 = vadd.f32 %v582, %v681
      %v775 = vadd.f32 %v583, %v683
      %v776 = vadd.f32 %v584, %v685
      %v777 = vadd.f32 %v585, %v687
      %v778 = vadd.f32 %v586, %v689
      %v779 = vadd.f32 %v587, %v691
      %v780 = vadd.f32 %v588, %v693
      %v781 = vadd.f32 %v589, %v695
      %v782 = vadd.f32 %v590, %v697
      %v783 = vadd.f32 %v591, %v699
      %v784 = vadd.f32 %v592, %v701
      %v785 = vadd.f32 %v593, %v703
      %v786 = vadd.f32 %v594, %v705
      %v787 = vadd.f32 %v595, %v707
      %v788 = vadd.f32 %v596, %v709
      %v789 = vadd.f32 %v597, %v711
      %v790 = vadd.f32 %v598, %v713
      %v791 = vadd.f32 %v599, %v715
      %v792 = vadd.f32 %v600, %v717
      %v793 = vadd.f32 %v601, %v719
      %v794 = vadd.f32 %v602, %v721
      %v795 = vadd.f32 %v603, %v723
      %v796 = vadd.f32 %v604, %v725
      %v797 = vadd.f32 %v605, %v727
      %v798 = vadd.f32 %v606, %v729
      %v799 = vadd.f32 %v607, %v731
      %v800 = vadd.f32 %v608, %v733
      %v801 = vadd.f32 %v609, %v735
      %v802 = vadd.f32 %v610, %v737
      %v803 = vadd.f32 %v611, %v739
      %v804 = vld [vmem:[%s515] sm:$0xff]
      %v805 = vld [vmem:[%s515 + $0x8] sm:$0xff]
      %v806 = vld [vmem:[%s515 + $0x18] sm:$0xff]
      %v807 = vld [vmem:[%s515 + $0x20] sm:$0xff]
      %v808 = vld [vmem:[%s515 + $0x30] sm:$0xff]
      %v809 = vld [vmem:[%s515 + $0x38] sm:$0xff]
      %v810 = vld [vmem:[%s515 + $0x48] sm:$0xff]
      %v811 = vld [vmem:[%s515 + $0x50] sm:$0xff]
      %v812 = vld [vmem:[%s515 + $0x60] sm:$0xff]
      %v813 = vld [vmem:[%s515 + $0x68] sm:$0xff]
      %v814 = vld [vmem:[%s515 + $0x78] sm:$0xff]
      %v815 = vld [vmem:[%s515 + $0x80] sm:$0xff]
      %v816 = vld [vmem:[%s515 + $0x90] sm:$0xff]
      %v817 = vld [vmem:[%s515 + $0x98] sm:$0xff]
      %v818 = vld [vmem:[%s515 + $0xa8] sm:$0xff]
      %v819 = vld [vmem:[%s515 + $0xb0] sm:$0xff]
      %v820 = vld [vmem:[%s515 + $0xc0] sm:$0xff]
      %v821 = vld [vmem:[%s515 + $0xc8] sm:$0xff]
      %v822 = vld [vmem:[%s515 + $0xd8] sm:$0xff]
      %v823 = vld [vmem:[%s515 + $0xe0] sm:$0xff]
      %v824 = vld [vmem:[%s515 + $0xf0] sm:$0xff]
      %v825 = vld [vmem:[%s515 + $0xf8] sm:$0xff]
      %v826 = vld [vmem:[%s515 + $0x108] sm:$0xff]
      %v827 = vld [vmem:[%s515 + $0x110] sm:$0xff]
      %v828 = vld [vmem:[%s515 + $0x120] sm:$0xff]
      %v829 = vld [vmem:[%s515 + $0x128] sm:$0xff]
      %v830 = vld [vmem:[%s515 + $0x138] sm:$0xff]
      %v831 = vld [vmem:[%s515 + $0x140] sm:$0xff]
      %v832 = vld [vmem:[%s515 + $0x150] sm:$0xff]
      %v833 = vld [vmem:[%s515 + $0x158] sm:$0xff]
      %v834 = vld [vmem:[%s515 + $0x168] sm:$0xff]
      %v835 = vld [vmem:[%s515 + $0x170] sm:$0xff]
      %868 = vrot.lane.b32.xlu0 %v804, 112
      %v869 = vpop.permute.xlu0 %868
      %870 = vrot.lane.b32.xlu0 %v805, 112
      %v871 = vpop.permute.xlu0 %870
      %872 = vrot.lane.b32.xlu0 %v806, 112
      %v873 = vpop.permute.xlu0 %872
      %874 = vrot.lane.b32.xlu0 %v807, 112
      %v875 = vpop.permute.xlu0 %874
      %876 = vrot.lane.b32.xlu0 %v808, 112
      %v877 = vpop.permute.xlu0 %876
      %878 = vrot.lane.b32.xlu0 %v809, 112
      %v879 = vpop.permute.xlu0 %878
      %880 = vrot.lane.b32.xlu0 %v810, 112
      %v881 = vpop.permute.xlu0 %880
      %882 = vrot.lane.b32.xlu0 %v811, 112
      %v883 = vpop.permute.xlu0 %882
      %884 = vrot.lane.b32.xlu0 %v812, 112
      %v885 = vpop.permute.xlu0 %884
      %886 = vrot.lane.b32.xlu0 %v813, 112
      %v887 = vpop.permute.xlu0 %886
      %888 = vrot.lane.b32.xlu0 %v814, 112
      %v889 = vpop.permute.xlu0 %888
      %890 = vrot.lane.b32.xlu0 %v815, 112
      %v891 = vpop.permute.xlu0 %890
      %892 = vrot.lane.b32.xlu0 %v816, 112
      %v893 = vpop.permute.xlu0 %892
      %894 = vrot.lane.b32.xlu0 %v817, 112
      %v895 = vpop.permute.xlu0 %894
      %896 = vrot.lane.b32.xlu0 %v818, 112
      %v897 = vpop.permute.xlu0 %896
      %898 = vrot.lane.b32.xlu0 %v819, 112
      %v899 = vpop.permute.xlu0 %898
      %900 = vrot.lane.b32.xlu0 %v820, 112
      %v901 = vpop.permute.xlu0 %900
      %902 = vrot.lane.b32.xlu0 %v821, 112
      %v903 = vpop.permute.xlu0 %902
      %904 = vrot.lane.b32.xlu0 %v822, 112
      %v905 = vpop.permute.xlu0 %904
      %906 = vrot.lane.b32.xlu0 %v823, 112
      %v907 = vpop.permute.xlu0 %906
      %908 = vrot.lane.b32.xlu0 %v824, 112
      %v909 = vpop.permute.xlu0 %908
      %910 = vrot.lane.b32.xlu0 %v825, 112
      %v911 = vpop.permute.xlu0 %910
      %912 = vrot.lane.b32.xlu0 %v826, 112
      %v913 = vpop.permute.xlu0 %912
      %914 = vrot.lane.b32.xlu0 %v827, 112
      %v915 = vpop.permute.xlu0 %914
      %916 = vrot.lane.b32.xlu0 %v828, 112
      %v917 = vpop.permute.xlu0 %916
      %918 = vrot.lane.b32.xlu0 %v829, 112
      %v919 = vpop.permute.xlu0 %918
      %920 = vrot.lane.b32.xlu0 %v830, 112
      %v921 = vpop.permute.xlu0 %920
      %922 = vrot.lane.b32.xlu0 %v831, 112
      %v923 = vpop.permute.xlu0 %922
      %924 = vrot.lane.b32.xlu0 %v832, 112
      %v925 = vpop.permute.xlu0 %924
      %926 = vrot.lane.b32.xlu0 %v833, 112
      %v927 = vpop.permute.xlu0 %926
      %928 = vrot.lane.b32.xlu0 %v834, 112
      %v929 = vpop.permute.xlu0 %928
      %930 = vrot.lane.b32.xlu0 %v835, 112
      %v931 = vpop.permute.xlu0 %930
      %v964 = vadd.f32 %v772, %v869
      %v965 = vadd.f32 %v773, %v871
      %v966 = vadd.f32 %v774, %v873
      %v967 = vadd.f32 %v775, %v875
      %v968 = vadd.f32 %v776, %v877
      %v969 = vadd.f32 %v777, %v879
      %v970 = vadd.f32 %v778, %v881
      %v971 = vadd.f32 %v779, %v883
      %v972 = vadd.f32 %v780, %v885
      %v973 = vadd.f32 %v781, %v887
      %v974 = vadd.f32 %v782, %v889
      %v975 = vadd.f32 %v783, %v891
      %v976 = vadd.f32 %v784, %v893
      %v977 = vadd.f32 %v785, %v895
      %v978 = vadd.f32 %v786, %v897
      %v979 = vadd.f32 %v787, %v899
      %v980 = vadd.f32 %v788, %v901
      %v981 = vadd.f32 %v789, %v903
      %v982 = vadd.f32 %v790, %v905
      %v983 = vadd.f32 %v791, %v907
      %v984 = vadd.f32 %v792, %v909
      %v985 = vadd.f32 %v793, %v911
      %v986 = vadd.f32 %v794, %v913
      %v987 = vadd.f32 %v795, %v915
      %v988 = vadd.f32 %v796, %v917
      %v989 = vadd.f32 %v797, %v919
      %v990 = vadd.f32 %v798, %v921
      %v991 = vadd.f32 %v799, %v923
      %v992 = vadd.f32 %v800, %v925
      %v993 = vadd.f32 %v801, %v927
      %v994 = vadd.f32 %v802, %v929
      %v995 = vadd.f32 %v803, %v931
      %v996 = vld [vmem:[%s515 + $0x1] sm:$0xff]
      %v997 = vld [vmem:[%s515 + $0x9] sm:$0xff]
      %v998 = vld [vmem:[%s515 + $0x19] sm:$0xff]
      %v999 = vld [vmem:[%s515 + $0x21] sm:$0xff]
      %v1000 = vld [vmem:[%s515 + $0x31] sm:$0xff]
      %v1001 = vld [vmem:[%s515 + $0x39] sm:$0xff]
      %v1002 = vld [vmem:[%s515 + $0x49] sm:$0xff]
      %v1003 = vld [vmem:[%s515 + $0x51] sm:$0xff]
      %v1004 = vld [vmem:[%s515 + $0x61] sm:$0xff]
      %v1005 = vld [vmem:[%s515 + $0x69] sm:$0xff]
      %v1006 = vld [vmem:[%s515 + $0x79] sm:$0xff]
      %v1007 = vld [vmem:[%s515 + $0x81] sm:$0xff]
      %v1008 = vld [vmem:[%s515 + $0x91] sm:$0xff]
      %v1009 = vld [vmem:[%s515 + $0x99] sm:$0xff]
      %v1010 = vld [vmem:[%s515 + $0xa9] sm:$0xff]
      %v1011 = vld [vmem:[%s515 + $0xb1] sm:$0xff]
      %v1012 = vld [vmem:[%s515 + $0xc1] sm:$0xff]
      %v1013 = vld [vmem:[%s515 + $0xc9] sm:$0xff]
      %v1014 = vld [vmem:[%s515 + $0xd9] sm:$0xff]
      %v1015 = vld [vmem:[%s515 + $0xe1] sm:$0xff]
      %v1016 = vld [vmem:[%s515 + $0xf1] sm:$0xff]
      %v1017 = vld [vmem:[%s515 + $0xf9] sm:$0xff]
      %v1018 = vld [vmem:[%s515 + $0x109] sm:$0xff]
      %v1019 = vld [vmem:[%s515 + $0x111] sm:$0xff]
      %v1020 = vld [vmem:[%s515 + $0x121] sm:$0xff]
      %v1021 = vld [vmem:[%s515 + $0x129] sm:$0xff]
      %v1022 = vld [vmem:[%s515 + $0x139] sm:$0xff]
      %v1023 = vld [vmem:[%s515 + $0x141] sm:$0xff]
      %v1024 = vld [vmem:[%s515 + $0x151] sm:$0xff]
      %v1025 = vld [vmem:[%s515 + $0x159] sm:$0xff]
      %v1026 = vld [vmem:[%s515 + $0x169] sm:$0xff]
      %v1027 = vld [vmem:[%s515 + $0x171] sm:$0xff]
      %1060 = vrot.lane.b32.xlu0 %v996, 104
      %v1061 = vpop.permute.xlu0 %1060
      %1062 = vrot.lane.b32.xlu0 %v997, 104
      %v1063 = vpop.permute.xlu0 %1062
      %1064 = vrot.lane.b32.xlu0 %v998, 104
      %v1065 = vpop.permute.xlu0 %1064
      %1066 = vrot.lane.b32.xlu0 %v999, 104
      %v1067 = vpop.permute.xlu0 %1066
      %1068 = vrot.lane.b32.xlu0 %v1000, 104
      %v1069 = vpop.permute.xlu0 %1068
      %1070 = vrot.lane.b32.xlu0 %v1001, 104
      %v1071 = vpop.permute.xlu0 %1070
      %1072 = vrot.lane.b32.xlu0 %v1002, 104
      %v1073 = vpop.permute.xlu0 %1072
      %1074 = vrot.lane.b32.xlu0 %v1003, 104
      %v1075 = vpop.permute.xlu0 %1074
      %1076 = vrot.lane.b32.xlu0 %v1004, 104
      %v1077 = vpop.permute.xlu0 %1076
      %1078 = vrot.lane.b32.xlu0 %v1005, 104
      %v1079 = vpop.permute.xlu0 %1078
      %1080 = vrot.lane.b32.xlu0 %v1006, 104
      %v1081 = vpop.permute.xlu0 %1080
      %1082 = vrot.lane.b32.xlu0 %v1007, 104
      %v1083 = vpop.permute.xlu0 %1082
      %1084 = vrot.lane.b32.xlu0 %v1008, 104
      %v1085 = vpop.permute.xlu0 %1084
      %1086 = vrot.lane.b32.xlu0 %v1009, 104
      %v1087 = vpop.permute.xlu0 %1086
      %1088 = vrot.lane.b32.xlu0 %v1010, 104
      %v1089 = vpop.permute.xlu0 %1088
      %1090 = vrot.lane.b32.xlu0 %v1011, 104
      %v1091 = vpop.permute.xlu0 %1090
      %1092 = vrot.lane.b32.xlu0 %v1012, 104
      %v1093 = vpop.permute.xlu0 %1092
      %1094 = vrot.lane.b32.xlu0 %v1013, 104
      %v1095 = vpop.permute.xlu0 %1094
      %1096 = vrot.lane.b32.xlu0 %v1014, 104
      %v1097 = vpop.permute.xlu0 %1096
      %1098 = vrot.lane.b32.xlu0 %v1015, 104
      %v1099 = vpop.permute.xlu0 %1098
      %1100 = vrot.lane.b32.xlu0 %v1016, 104
      %v1101 = vpop.permute.xlu0 %1100
      %1102 = vrot.lane.b32.xlu0 %v1017, 104
      %v1103 = vpop.permute.xlu0 %1102
      %1104 = vrot.lane.b32.xlu0 %v1018, 104
      %v1105 = vpop.permute.xlu0 %1104
      %1106 = vrot.lane.b32.xlu0 %v1019, 104
      %v1107 = vpop.permute.xlu0 %1106
      %1108 = vrot.lane.b32.xlu0 %v1020, 104
      %v1109 = vpop.permute.xlu0 %1108
      %1110 = vrot.lane.b32.xlu0 %v1021, 104
      %v1111 = vpop.permute.xlu0 %1110
      %1112 = vrot.lane.b32.xlu0 %v1022, 104
      %v1113 = vpop.permute.xlu0 %1112
      %1114 = vrot.lane.b32.xlu0 %v1023, 104
      %v1115 = vpop.permute.xlu0 %1114
      %1116 = vrot.lane.b32.xlu0 %v1024, 104
      %v1117 = vpop.permute.xlu0 %1116
      %1118 = vrot.lane.b32.xlu0 %v1025, 104
      %v1119 = vpop.permute.xlu0 %1118
      %1120 = vrot.lane.b32.xlu0 %v1026, 104
      %v1121 = vpop.permute.xlu0 %1120
      %1122 = vrot.lane.b32.xlu0 %v1027, 104
      %v1123 = vpop.permute.xlu0 %1122
      %v1156 = vadd.f32 %v964, %v1061
      %v1157 = vadd.f32 %v965, %v1063
      %v1158 = vadd.f32 %v966, %v1065
      %v1159 = vadd.f32 %v967, %v1067
      %v1160 = vadd.f32 %v968, %v1069
      %v1161 = vadd.f32 %v969, %v1071
      %v1162 = vadd.f32 %v970, %v1073
      %v1163 = vadd.f32 %v971, %v1075
      %v1164 = vadd.f32 %v972, %v1077
      %v1165 = vadd.f32 %v973, %v1079
      %v1166 = vadd.f32 %v974, %v1081
      %v1167 = vadd.f32 %v975, %v1083
      %v1168 = vadd.f32 %v976, %v1085
      %v1169 = vadd.f32 %v977, %v1087
      %v1170 = vadd.f32 %v978, %v1089
      %v1171 = vadd.f32 %v979, %v1091
      %v1172 = vadd.f32 %v980, %v1093
      %v1173 = vadd.f32 %v981, %v1095
      %v1174 = vadd.f32 %v982, %v1097
      %v1175 = vadd.f32 %v983, %v1099
      %v1176 = vadd.f32 %v984, %v1101
      %v1177 = vadd.f32 %v985, %v1103
      %v1178 = vadd.f32 %v986, %v1105
      %v1179 = vadd.f32 %v987, %v1107
      %v1180 = vadd.f32 %v988, %v1109
      %v1181 = vadd.f32 %v989, %v1111
      %v1182 = vadd.f32 %v990, %v1113
      %v1183 = vadd.f32 %v991, %v1115
      %v1184 = vadd.f32 %v992, %v1117
      %v1185 = vadd.f32 %v993, %v1119
      %v1186 = vadd.f32 %v994, %v1121
      %v1187 = vadd.f32 %v995, %v1123
      %vm1188 = vcmask 64512
      %1189 = vst.msk [vmem:[#allocation3] sm:$0xff] %vm1188, %v1156
      %1190 = vst.msk [vmem:[#allocation3 + $0x8] sm:$0xff] %vm1188, %v1157
      %1191 = vst.msk [vmem:[#allocation3 + $0x10] sm:$0xff] %vm1188, %v1158
      %1192 = vst.msk [vmem:[#allocation3 + $0x18] sm:$0xff] %vm1188, %v1159
      %1193 = vst.msk [vmem:[#allocation3 + $0x20] sm:$0xff] %vm1188, %v1160
      %1194 = vst.msk [vmem:[#allocation3 + $0x28] sm:$0xff] %vm1188, %v1161
      %1195 = vst.msk [vmem:[#allocation3 + $0x30] sm:$0xff] %vm1188, %v1162
      %1196 = vst.msk [vmem:[#allocation3 + $0x38] sm:$0xff] %vm1188, %v1163
      %1197 = vst.msk [vmem:[#allocation3 + $0x40] sm:$0xff] %vm1188, %v1164
      %1198 = vst.msk [vmem:[#allocation3 + $0x48] sm:$0xff] %vm1188, %v1165
      %1199 = vst.msk [vmem:[#allocation3 + $0x50] sm:$0xff] %vm1188, %v1166
      %1200 = vst.msk [vmem:[#allocation3 + $0x58] sm:$0xff] %vm1188, %v1167
      %1201 = vst.msk [vmem:[#allocation3 + $0x60] sm:$0xff] %vm1188, %v1168
      %1202 = vst.msk [vmem:[#allocation3 + $0x68] sm:$0xff] %vm1188, %v1169
      %1203 = vst.msk [vmem:[#allocation3 + $0x70] sm:$0xff] %vm1188, %v1170
      %1204 = vst.msk [vmem:[#allocation3 + $0x78] sm:$0xff] %vm1188, %v1171
      %1205 = vst.msk [vmem:[#allocation3 + $0x80] sm:$0xff] %vm1188, %v1172
      %1206 = vst.msk [vmem:[#allocation3 + $0x88] sm:$0xff] %vm1188, %v1173
      %1207 = vst.msk [vmem:[#allocation3 + $0x90] sm:$0xff] %vm1188, %v1174
      %1208 = vst.msk [vmem:[#allocation3 + $0x98] sm:$0xff] %vm1188, %v1175
      %1209 = vst.msk [vmem:[#allocation3 + $0xa0] sm:$0xff] %vm1188, %v1176
      %1210 = vst.msk [vmem:[#allocation3 + $0xa8] sm:$0xff] %vm1188, %v1177
      %1211 = vst.msk [vmem:[#allocation3 + $0xb0] sm:$0xff] %vm1188, %v1178
      %1212 = vst.msk [vmem:[#allocation3 + $0xb8] sm:$0xff] %vm1188, %v1179
      %1213 = vst.msk [vmem:[#allocation3 + $0xc0] sm:$0xff] %vm1188, %v1180
      %1214 = vst.msk [vmem:[#allocation3 + $0xc8] sm:$0xff] %vm1188, %v1181
      %1215 = vst.msk [vmem:[#allocation3 + $0xd0] sm:$0xff] %vm1188, %v1182
      %1216 = vst.msk [vmem:[#allocation3 + $0xd8] sm:$0xff] %vm1188, %v1183
      %1217 = vst.msk [vmem:[#allocation3 + $0xe0] sm:$0xff] %vm1188, %v1184
      %1218 = vst.msk [vmem:[#allocation3 + $0xe8] sm:$0xff] %vm1188, %v1185
      %1219 = vst.msk [vmem:[#allocation3 + $0xf0] sm:$0xff] %vm1188, %v1186
      %1220 = vst.msk [vmem:[#allocation3 + $0xf8] sm:$0xff] %vm1188, %v1187
      %v1221 = vsel %vm1188, %v1156, 0.0
      %v1222 = vsel %vm1188, %v1157, 0.0
      %v1223 = vadd.f32 %v1221, %v1222
      %v1224 = vsel %vm1188, %v1158, 0.0
      %v1225 = vadd.f32 %v1223, %v1224
      %v1226 = vsel %vm1188, %v1159, 0.0
      %v1227 = vadd.f32 %v1225, %v1226
      %v1228 = vsel %vm1188, %v1160, 0.0
      %v1229 = vadd.f32 %v1227, %v1228
      %v1230 = vsel %vm1188, %v1161, 0.0
      %v1231 = vadd.f32 %v1229, %v1230
      %v1232 = vsel %vm1188, %v1162, 0.0
      %v1233 = vadd.f32 %v1231, %v1232
      %v1234 = vsel %vm1188, %v1163, 0.0
      %v1235 = vadd.f32 %v1233, %v1234
      %v1236 = vsel %vm1188, %v1164, 0.0
      %v1237 = vadd.f32 %v1235, %v1236
      %v1238 = vsel %vm1188, %v1165, 0.0
      %v1239 = vadd.f32 %v1237, %v1238
      %v1240 = vsel %vm1188, %v1166, 0.0
      %v1241 = vadd.f32 %v1239, %v1240
      %v1242 = vsel %vm1188, %v1167, 0.0
      %v1243 = vadd.f32 %v1241, %v1242
      %v1244 = vsel %vm1188, %v1168, 0.0
      %v1245 = vadd.f32 %v1243, %v1244
      %v1246 = vsel %vm1188, %v1169, 0.0
      %v1247 = vadd.f32 %v1245, %v1246
      %v1248 = vsel %vm1188, %v1170, 0.0
      %v1249 = vadd.f32 %v1247, %v1248
      %v1250 = vsel %vm1188, %v1171, 0.0
      %v1251 = vadd.f32 %v1249, %v1250
      %v1252 = vsel %vm1188, %v1172, 0.0
      %v1253 = vadd.f32 %v1251, %v1252
      %v1254 = vsel %vm1188, %v1173, 0.0
      %v1255 = vadd.f32 %v1253, %v1254
      %v1256 = vsel %vm1188, %v1174, 0.0
      %v1257 = vadd.f32 %v1255, %v1256
      %v1258 = vsel %vm1188, %v1175, 0.0
      %v1259 = vadd.f32 %v1257, %v1258
      %v1260 = vsel %vm1188, %v1176, 0.0
      %v1261 = vadd.f32 %v1259, %v1260
      %v1262 = vsel %vm1188, %v1177, 0.0
      %v1263 = vadd.f32 %v1261, %v1262
      %v1264 = vsel %vm1188, %v1178, 0.0
      %v1265 = vadd.f32 %v1263, %v1264
      %v1266 = vsel %vm1188, %v1179, 0.0
      %v1267 = vadd.f32 %v1265, %v1266
      %v1268 = vsel %vm1188, %v1180, 0.0
      %v1269 = vadd.f32 %v1267, %v1268
      %v1270 = vsel %vm1188, %v1181, 0.0
      %v1271 = vadd.f32 %v1269, %v1270
      %v1272 = vsel %vm1188, %v1182, 0.0
      %v1273 = vadd.f32 %v1271, %v1272
      %v1274 = vsel %vm1188, %v1183, 0.0
      %v1275 = vadd.f32 %v1273, %v1274
      %v1276 = vsel %vm1188, %v1184, 0.0
      %v1277 = vadd.f32 %v1275, %v1276
      %v1278 = vsel %vm1188, %v1185, 0.0
      %v1279 = vadd.f32 %v1277, %v1278
      %v1280 = vsel %vm1188, %v1186, 0.0
      %v1281 = vadd.f32 %v1279, %v1280
      %v1282 = vsel %vm1188, %v1187, 0.0
      %v1283 = vadd.f32 %v1281, %v1282
      %v1284 = vrot.slane %v1283, 4
      %v1285 = vadd.f32 %v1283, %v1284
      %v1286 = vrot.slane %v1285, 2
      %v1287 = vadd.f32 %v1285, %v1286
      %v1288 = vrot.slane %v1287, 1
      %v1289 = vadd.f32 %v1287, %v1288
      %v1290 = vadd.f32 %v1289, 0.0
      %v1291 = vmul.f32 %v1156, %v1156
      %v1292 = vmul.f32 %v1157, %v1157
      %v1293 = vmul.f32 %v1158, %v1158
      %v1294 = vmul.f32 %v1159, %v1159
      %v1295 = vmul.f32 %v1160, %v1160
      %v1296 = vmul.f32 %v1161, %v1161
      %v1297 = vmul.f32 %v1162, %v1162
      %v1298 = vmul.f32 %v1163, %v1163
      %v1299 = vmul.f32 %v1164, %v1164
      %v1300 = vmul.f32 %v1165, %v1165
      %v1301 = vmul.f32 %v1166, %v1166
      %v1302 = vmul.f32 %v1167, %v1167
      %v1303 = vmul.f32 %v1168, %v1168
      %v1304 = vmul.f32 %v1169, %v1169
      %v1305 = vmul.f32 %v1170, %v1170
      %v1306 = vmul.f32 %v1171, %v1171
      %v1307 = vmul.f32 %v1172, %v1172
      %v1308 = vmul.f32 %v1173, %v1173
      %v1309 = vmul.f32 %v1174, %v1174
      %v1310 = vmul.f32 %v1175, %v1175
      %v1311 = vmul.f32 %v1176, %v1176
      %v1312 = vmul.f32 %v1177, %v1177
      %v1313 = vmul.f32 %v1178, %v1178
      %v1314 = vmul.f32 %v1179, %v1179
      %v1315 = vmul.f32 %v1180, %v1180
      %v1316 = vmul.f32 %v1181, %v1181
      %v1317 = vmul.f32 %v1182, %v1182
      %v1318 = vmul.f32 %v1183, %v1183
      %v1319 = vmul.f32 %v1184, %v1184
      %v1320 = vmul.f32 %v1185, %v1185
      %v1321 = vmul.f32 %v1186, %v1186
      %v1322 = vmul.f32 %v1187, %v1187
      %v1323 = vsel %vm1188, %v1291, 0.0
      %v1324 = vsel %vm1188, %v1292, 0.0
      %v1325 = vadd.f32 %v1323, %v1324
      %v1326 = vsel %vm1188, %v1293, 0.0
      %v1327 = vadd.f32 %v1325, %v1326
      %v1328 = vsel %vm1188, %v1294, 0.0
      %v1329 = vadd.f32 %v1327, %v1328
      %v1330 = vsel %vm1188, %v1295, 0.0
      %v1331 = vadd.f32 %v1329, %v1330
      %v1332 = vsel %vm1188, %v1296, 0.0
      %v1333 = vadd.f32 %v1331, %v1332
      %v1334 = vsel %vm1188, %v1297, 0.0
      %v1335 = vadd.f32 %v1333, %v1334
      %v1336 = vsel %vm1188, %v1298, 0.0
      %v1337 = vadd.f32 %v1335, %v1336
      %v1338 = vsel %vm1188, %v1299, 0.0
      %v1339 = vadd.f32 %v1337, %v1338
      %v1340 = vsel %vm1188, %v1300, 0.0
      %v1341 = vadd.f32 %v1339, %v1340
      %v1342 = vsel %vm1188, %v1301, 0.0
      %v1343 = vadd.f32 %v1341, %v1342
      %v1344 = vsel %vm1188, %v1302, 0.0
      %v1345 = vadd.f32 %v1343, %v1344
      %v1346 = vsel %vm1188, %v1303, 0.0
      %v1347 = vadd.f32 %v1345, %v1346
      %v1348 = vsel %vm1188, %v1304, 0.0
      %v1349 = vadd.f32 %v1347, %v1348
      %v1350 = vsel %vm1188, %v1305, 0.0
      %v1351 = vadd.f32 %v1349, %v1350
      %v1352 = vsel %vm1188, %v1306, 0.0
      %v1353 = vadd.f32 %v1351, %v1352
      %v1354 = vsel %vm1188, %v1307, 0.0
      %v1355 = vadd.f32 %v1353, %v1354
      %v1356 = vsel %vm1188, %v1308, 0.0
      %v1357 = vadd.f32 %v1355, %v1356
      %v1358 = vsel %vm1188, %v1309, 0.0
      %v1359 = vadd.f32 %v1357, %v1358
      %v1360 = vsel %vm1188, %v1310, 0.0
      %v1361 = vadd.f32 %v1359, %v1360
      %v1362 = vsel %vm1188, %v1311, 0.0
      %v1363 = vadd.f32 %v1361, %v1362
      %v1364 = vsel %vm1188, %v1312, 0.0
      %v1365 = vadd.f32 %v1363, %v1364
      %v1366 = vsel %vm1188, %v1313, 0.0
      %v1367 = vadd.f32 %v1365, %v1366
      %v1368 = vsel %vm1188, %v1314, 0.0
      %v1369 = vadd.f32 %v1367, %v1368
      %v1370 = vsel %vm1188, %v1315, 0.0
      %v1371 = vadd.f32 %v1369, %v1370
      %v1372 = vsel %vm1188, %v1316, 0.0
      %v1373 = vadd.f32 %v1371, %v1372
      %v1374 = vsel %vm1188, %v1317, 0.0
      %v1375 = vadd.f32 %v1373, %v1374
      %v1376 = vsel %vm1188, %v1318, 0.0
      %v1377 = vadd.f32 %v1375, %v1376
      %v1378 = vsel %vm1188, %v1319, 0.0
      %v1379 = vadd.f32 %v1377, %v1378
      %v1380 = vsel %vm1188, %v1320, 0.0
      %v1381 = vadd.f32 %v1379, %v1380
      %v1382 = vsel %vm1188, %v1321, 0.0
      %v1383 = vadd.f32 %v1381, %v1382
      %v1384 = vsel %vm1188, %v1322, 0.0
      %v1385 = vadd.f32 %v1383, %v1384
      %v1386 = vrot.slane %v1385, 4
      %v1387 = vadd.f32 %v1385, %v1386
      %v1388 = vrot.slane %v1387, 2
      %v1389 = vadd.f32 %v1387, %v1388
      %v1390 = vrot.slane %v1389, 1
      %v1391 = vadd.f32 %v1389, %v1390
      %v1392 = vadd.f32 %v1391, 0.0
      %v1393 = vld [vmem:[#allocation2 + $0x1] sm:$0xff]
      %v1394 = vld [vmem:[#allocation2 + $0x9] sm:$0xff]
      %v1395 = vld [vmem:[#allocation2 + $0x19] sm:$0xff]
      %v1396 = vld [vmem:[#allocation2 + $0x21] sm:$0xff]
      %v1397 = vld [vmem:[#allocation2 + $0x31] sm:$0xff]
      %v1398 = vld [vmem:[#allocation2 + $0x39] sm:$0xff]
      %v1399 = vld [vmem:[#allocation2 + $0x49] sm:$0xff]
      %v1400 = vld [vmem:[#allocation2 + $0x51] sm:$0xff]
      %v1401 = vld [vmem:[#allocation2 + $0x61] sm:$0xff]
      %v1402 = vld [vmem:[#allocation2 + $0x69] sm:$0xff]
      %v1403 = vld [vmem:[#allocation2 + $0x79] sm:$0xff]
      %v1404 = vld [vmem:[#allocation2 + $0x81] sm:$0xff]
      %v1405 = vld [vmem:[#allocation2 + $0x91] sm:$0xff]
      %v1406 = vld [vmem:[#allocation2 + $0x99] sm:$0xff]
      %v1407 = vld [vmem:[#allocation2 + $0xa9] sm:$0xff]
      %v1408 = vld [vmem:[#allocation2 + $0xb1] sm:$0xff]
      %v1409 = vld [vmem:[#allocation2 + $0xc1] sm:$0xff]
      %v1410 = vld [vmem:[#allocation2 + $0xc9] sm:$0xff]
      %v1411 = vld [vmem:[#allocation2 + $0xd9] sm:$0xff]
      %v1412 = vld [vmem:[#allocation2 + $0xe1] sm:$0xff]
      %v1413 = vld [vmem:[#allocation2 + $0xf1] sm:$0xff]
      %v1414 = vld [vmem:[#allocation2 + $0xf9] sm:$0xff]
      %v1415 = vld [vmem:[#allocation2 + $0x109] sm:$0xff]
      %v1416 = vld [vmem:[#allocation2 + $0x111] sm:$0xff]
      %v1417 = vld [vmem:[#allocation2 + $0x121] sm:$0xff]
      %v1418 = vld [vmem:[#allocation2 + $0x129] sm:$0xff]
      %v1419 = vld [vmem:[#allocation2 + $0x139] sm:$0xff]
      %v1420 = vld [vmem:[#allocation2 + $0x141] sm:$0xff]
      %v1421 = vld [vmem:[#allocation2 + $0x151] sm:$0xff]
      %v1422 = vld [vmem:[#allocation2 + $0x159] sm:$0xff]
      %v1423 = vld [vmem:[#allocation2 + $0x169] sm:$0xff]
      %v1424 = vld [vmem:[#allocation2 + $0x171] sm:$0xff]
      %v1425 = vadd.f32 %v1393, 0.0
      %v1426 = vadd.f32 %v1394, 0.0
      %v1427 = vadd.f32 %v1395, 0.0
      %v1428 = vadd.f32 %v1396, 0.0
      %v1429 = vadd.f32 %v1397, 0.0
      %v1430 = vadd.f32 %v1398, 0.0
      %v1431 = vadd.f32 %v1399, 0.0
      %v1432 = vadd.f32 %v1400, 0.0
      %v1433 = vadd.f32 %v1401, 0.0
      %v1434 = vadd.f32 %v1402, 0.0
      %v1435 = vadd.f32 %v1403, 0.0
      %v1436 = vadd.f32 %v1404, 0.0
      %v1437 = vadd.f32 %v1405, 0.0
      %v1438 = vadd.f32 %v1406, 0.0
      %v1439 = vadd.f32 %v1407, 0.0
      %v1440 = vadd.f32 %v1408, 0.0
      %v1441 = vadd.f32 %v1409, 0.0
      %v1442 = vadd.f32 %v1410, 0.0
      %v1443 = vadd.f32 %v1411, 0.0
      %v1444 = vadd.f32 %v1412, 0.0
      %v1445 = vadd.f32 %v1413, 0.0
      %v1446 = vadd.f32 %v1414, 0.0
      %v1447 = vadd.f32 %v1415, 0.0
      %v1448 = vadd.f32 %v1416, 0.0
      %v1449 = vadd.f32 %v1417, 0.0
      %v1450 = vadd.f32 %v1418, 0.0
      %v1451 = vadd.f32 %v1419, 0.0
      %v1452 = vadd.f32 %v1420, 0.0
      %v1453 = vadd.f32 %v1421, 0.0
      %v1454 = vadd.f32 %v1422, 0.0
      %v1455 = vadd.f32 %v1423, 0.0
      %v1456 = vadd.f32 %v1424, 0.0
      %v1457 = vld [vmem:[#allocation2 + $0x2] sm:$0xff]
      %v1458 = vld [vmem:[#allocation2 + $0xa] sm:$0xff]
      %v1459 = vld [vmem:[#allocation2 + $0x1a] sm:$0xff]
      %v1460 = vld [vmem:[#allocation2 + $0x22] sm:$0xff]
      %v1461 = vld [vmem:[#allocation2 + $0x32] sm:$0xff]
      %v1462 = vld [vmem:[#allocation2 + $0x3a] sm:$0xff]
      %v1463 = vld [vmem:[#allocation2 + $0x4a] sm:$0xff]
      %v1464 = vld [vmem:[#allocation2 + $0x52] sm:$0xff]
      %v1465 = vld [vmem:[#allocation2 + $0x62] sm:$0xff]
      %v1466 = vld [vmem:[#allocation2 + $0x6a] sm:$0xff]
      %v1467 = vld [vmem:[#allocation2 + $0x7a] sm:$0xff]
      %v1468 = vld [vmem:[#allocation2 + $0x82] sm:$0xff]
      %v1469 = vld [vmem:[#allocation2 + $0x92] sm:$0xff]
      %v1470 = vld [vmem:[#allocation2 + $0x9a] sm:$0xff]
      %v1471 = vld [vmem:[#allocation2 + $0xaa] sm:$0xff]
      %v1472 = vld [vmem:[#allocation2 + $0xb2] sm:$0xff]
      %v1473 = vld [vmem:[#allocation2 + $0xc2] sm:$0xff]
      %v1474 = vld [vmem:[#allocation2 + $0xca] sm:$0xff]
      %v1475 = vld [vmem:[#allocation2 + $0xda] sm:$0xff]
      %v1476 = vld [vmem:[#allocation2 + $0xe2] sm:$0xff]
      %v1477 = vld [vmem:[#allocation2 + $0xf2] sm:$0xff]
      %v1478 = vld [vmem:[#allocation2 + $0xfa] sm:$0xff]
      %v1479 = vld [vmem:[#allocation2 + $0x10a] sm:$0xff]
      %v1480 = vld [vmem:[#allocation2 + $0x112] sm:$0xff]
      %v1481 = vld [vmem:[#allocation2 + $0x122] sm:$0xff]
      %v1482 = vld [vmem:[#allocation2 + $0x12a] sm:$0xff]
      %v1483 = vld [vmem:[#allocation2 + $0x13a] sm:$0xff]
      %v1484 = vld [vmem:[#allocation2 + $0x142] sm:$0xff]
      %v1485 = vld [vmem:[#allocation2 + $0x152] sm:$0xff]
      %v1486 = vld [vmem:[#allocation2 + $0x15a] sm:$0xff]
      %v1487 = vld [vmem:[#allocation2 + $0x16a] sm:$0xff]
      %v1488 = vld [vmem:[#allocation2 + $0x172] sm:$0xff]
      %1521 = vrot.lane.b32.xlu0 %v1457, 120
      %v1522 = vpop.permute.xlu0 %1521
      %1523 = vrot.lane.b32.xlu0 %v1458, 120
      %v1524 = vpop.permute.xlu0 %1523
      %1525 = vrot.lane.b32.xlu0 %v1459, 120
      %v1526 = vpop.permute.xlu0 %1525
      %1527 = vrot.lane.b32.xlu0 %v1460, 120
      %v1528 = vpop.permute.xlu0 %1527
      %1529 = vrot.lane.b32.xlu0 %v1461, 120
      %v1530 = vpop.permute.xlu0 %1529
      %1531 = vrot.lane.b32.xlu0 %v1462, 120
      %v1532 = vpop.permute.xlu0 %1531
      %1533 = vrot.lane.b32.xlu0 %v1463, 120
      %v1534 = vpop.permute.xlu0 %1533
      %1535 = vrot.lane.b32.xlu0 %v1464, 120
      %v1536 = vpop.permute.xlu0 %1535
      %1537 = vrot.lane.b32.xlu0 %v1465, 120
      %v1538 = vpop.permute.xlu0 %1537
      %1539 = vrot.lane.b32.xlu0 %v1466, 120
      %v1540 = vpop.permute.xlu0 %1539
      %1541 = vrot.lane.b32.xlu0 %v1467, 120
      %v1542 = vpop.permute.xlu0 %1541
      %1543 = vrot.lane.b32.xlu0 %v1468, 120
      %v1544 = vpop.permute.xlu0 %1543
      %1545 = vrot.lane.b32.xlu0 %v1469, 120
      %v1546 = vpop.permute.xlu0 %1545
      %1547 = vrot.lane.b32.xlu0 %v1470, 120
      %v1548 = vpop.permute.xlu0 %1547
      %1549 = vrot.lane.b32.xlu0 %v1471, 120
      %v1550 = vpop.permute.xlu0 %1549
      %1551 = vrot.lane.b32.xlu0 %v1472, 120
      %v1552 = vpop.permute.xlu0 %1551
      %1553 = vrot.lane.b32.xlu0 %v1473, 120
      %v1554 = vpop.permute.xlu0 %1553
      %1555 = vrot.lane.b32.xlu0 %v1474, 120
      %v1556 = vpop.permute.xlu0 %1555
      %1557 = vrot.lane.b32.xlu0 %v1475, 120
      %v1558 = vpop.permute.xlu0 %1557
      %1559 = vrot.lane.b32.xlu0 %v1476, 120
      %v1560 = vpop.permute.xlu0 %1559
      %1561 = vrot.lane.b32.xlu0 %v1477, 120
      %v1562 = vpop.permute.xlu0 %1561
      %1563 = vrot.lane.b32.xlu0 %v1478, 120
      %v1564 = vpop.permute.xlu0 %1563
      %1565 = vrot.lane.b32.xlu0 %v1479, 120
      %v1566 = vpop.permute.xlu0 %1565
      %1567 = vrot.lane.b32.xlu0 %v1480, 120
      %v1568 = vpop.permute.xlu0 %1567
      %1569 = vrot.lane.b32.xlu0 %v1481, 120
      %v1570 = vpop.permute.xlu0 %1569
      %1571 = vrot.lane.b32.xlu0 %v1482, 120
      %v1572 = vpop.permute.xlu0 %1571
      %1573 = vrot.lane.b32.xlu0 %v1483, 120
      %v1574 = vpop.permute.xlu0 %1573
      %1575 = vrot.lane.b32.xlu0 %v1484, 120
      %v1576 = vpop.permute.xlu0 %1575
      %1577 = vrot.lane.b32.xlu0 %v1485, 120
      %v1578 = vpop.permute.xlu0 %1577
      %1579 = vrot.lane.b32.xlu0 %v1486, 120
      %v1580 = vpop.permute.xlu0 %1579
      %1581 = vrot.lane.b32.xlu0 %v1487, 120
      %v1582 = vpop.permute.xlu0 %1581
      %1583 = vrot.lane.b32.xlu0 %v1488, 120
      %v1584 = vpop.permute.xlu0 %1583
      %v1617 = vadd.f32 %v1425, %v1522
      %v1618 = vadd.f32 %v1426, %v1524
      %v1619 = vadd.f32 %v1427, %v1526
      %v1620 = vadd.f32 %v1428, %v1528
      %v1621 = vadd.f32 %v1429, %v1530
      %v1622 = vadd.f32 %v1430, %v1532
      %v1623 = vadd.f32 %v1431, %v1534
      %v1624 = vadd.f32 %v1432, %v1536
      %v1625 = vadd.f32 %v1433, %v1538
      %v1626 = vadd.f32 %v1434, %v1540
      %v1627 = vadd.f32 %v1435, %v1542
      %v1628 = vadd.f32 %v1436, %v1544
      %v1629 = vadd.f32 %v1437, %v1546
      %v1630 = vadd.f32 %v1438, %v1548
      %v1631 = vadd.f32 %v1439, %v1550
      %v1632 = vadd.f32 %v1440, %v1552
      %v1633 = vadd.f32 %v1441, %v1554
      %v1634 = vadd.f32 %v1442, %v1556
      %v1635 = vadd.f32 %v1443, %v1558
      %v1636 = vadd.f32 %v1444, %v1560
      %v1637 = vadd.f32 %v1445, %v1562
      %v1638 = vadd.f32 %v1446, %v1564
      %v1639 = vadd.f32 %v1447, %v1566
      %v1640 = vadd.f32 %v1448, %v1568
      %v1641 = vadd.f32 %v1449, %v1570
      %v1642 = vadd.f32 %v1450, %v1572
      %v1643 = vadd.f32 %v1451, %v1574
      %v1644 = vadd.f32 %v1452, %v1576
      %v1645 = vadd.f32 %v1453, %v1578
      %v1646 = vadd.f32 %v1454, %v1580
      %v1647 = vadd.f32 %v1455, %v1582
      %v1648 = vadd.f32 %v1456, %v1584
      %v1649 = vld [vmem:[%s515 + $0x1] sm:$0xff]
      %v1650 = vld [vmem:[%s515 + $0x9] sm:$0xff]
      %v1651 = vld [vmem:[%s515 + $0x19] sm:$0xff]
      %v1652 = vld [vmem:[%s515 + $0x21] sm:$0xff]
      %v1653 = vld [vmem:[%s515 + $0x31] sm:$0xff]
      %v1654 = vld [vmem:[%s515 + $0x39] sm:$0xff]
      %v1655 = vld [vmem:[%s515 + $0x49] sm:$0xff]
      %v1656 = vld [vmem:[%s515 + $0x51] sm:$0xff]
      %v1657 = vld [vmem:[%s515 + $0x61] sm:$0xff]
      %v1658 = vld [vmem:[%s515 + $0x69] sm:$0xff]
      %v1659 = vld [vmem:[%s515 + $0x79] sm:$0xff]
      %v1660 = vld [vmem:[%s515 + $0x81] sm:$0xff]
      %v1661 = vld [vmem:[%s515 + $0x91] sm:$0xff]
      %v1662 = vld [vmem:[%s515 + $0x99] sm:$0xff]
      %v1663 = vld [vmem:[%s515 + $0xa9] sm:$0xff]
      %v1664 = vld [vmem:[%s515 + $0xb1] sm:$0xff]
      %v1665 = vld [vmem:[%s515 + $0xc1] sm:$0xff]
      %v1666 = vld [vmem:[%s515 + $0xc9] sm:$0xff]
      %v1667 = vld [vmem:[%s515 + $0xd9] sm:$0xff]
      %v1668 = vld [vmem:[%s515 + $0xe1] sm:$0xff]
      %v1669 = vld [vmem:[%s515 + $0xf1] sm:$0xff]
      %v1670 = vld [vmem:[%s515 + $0xf9] sm:$0xff]
      %v1671 = vld [vmem:[%s515 + $0x109] sm:$0xff]
      %v1672 = vld [vmem:[%s515 + $0x111] sm:$0xff]
      %v1673 = vld [vmem:[%s515 + $0x121] sm:$0xff]
      %v1674 = vld [vmem:[%s515 + $0x129] sm:$0xff]
      %v1675 = vld [vmem:[%s515 + $0x139] sm:$0xff]
      %v1676 = vld [vmem:[%s515 + $0x141] sm:$0xff]
      %v1677 = vld [vmem:[%s515 + $0x151] sm:$0xff]
      %v1678 = vld [vmem:[%s515 + $0x159] sm:$0xff]
      %v1679 = vld [vmem:[%s515 + $0x169] sm:$0xff]
      %v1680 = vld [vmem:[%s515 + $0x171] sm:$0xff]
      %1713 = vrot.lane.b32.xlu0 %v1649, 112
      %v1714 = vpop.permute.xlu0 %1713
      %1715 = vrot.lane.b32.xlu0 %v1650, 112
      %v1716 = vpop.permute.xlu0 %1715
      %1717 = vrot.lane.b32.xlu0 %v1651, 112
      %v1718 = vpop.permute.xlu0 %1717
      %1719 = vrot.lane.b32.xlu0 %v1652, 112
      %v1720 = vpop.permute.xlu0 %1719
      %1721 = vrot.lane.b32.xlu0 %v1653, 112
      %v1722 = vpop.permute.xlu0 %1721
      %1723 = vrot.lane.b32.xlu0 %v1654, 112
      %v1724 = vpop.permute.xlu0 %1723
      %1725 = vrot.lane.b32.xlu0 %v1655, 112
      %v1726 = vpop.permute.xlu0 %1725
      %1727 = vrot.lane.b32.xlu0 %v1656, 112
      %v1728 = vpop.permute.xlu0 %1727
      %1729 = vrot.lane.b32.xlu0 %v1657, 112
      %v1730 = vpop.permute.xlu0 %1729
      %1731 = vrot.lane.b32.xlu0 %v1658, 112
      %v1732 = vpop.permute.xlu0 %1731
      %1733 = vrot.lane.b32.xlu0 %v1659, 112
      %v1734 = vpop.permute.xlu0 %1733
      %1735 = vrot.lane.b32.xlu0 %v1660, 112
      %v1736 = vpop.permute.xlu0 %1735
      %1737 = vrot.lane.b32.xlu0 %v1661, 112
      %v1738 = vpop.permute.xlu0 %1737
      %1739 = vrot.lane.b32.xlu0 %v1662, 112
      %v1740 = vpop.permute.xlu0 %1739
      %1741 = vrot.lane.b32.xlu0 %v1663, 112
      %v1742 = vpop.permute.xlu0 %1741
      %1743 = vrot.lane.b32.xlu0 %v1664, 112
      %v1744 = vpop.permute.xlu0 %1743
      %1745 = vrot.lane.b32.xlu0 %v1665, 112
      %v1746 = vpop.permute.xlu0 %1745
      %1747 = vrot.lane.b32.xlu0 %v1666, 112
      %v1748 = vpop.permute.xlu0 %1747
      %1749 = vrot.lane.b32.xlu0 %v1667, 112
      %v1750 = vpop.permute.xlu0 %1749
      %1751 = vrot.lane.b32.xlu0 %v1668, 112
      %v1752 = vpop.permute.xlu0 %1751
      %1753 = vrot.lane.b32.xlu0 %v1669, 112
      %v1754 = vpop.permute.xlu0 %1753
      %1755 = vrot.lane.b32.xlu0 %v1670, 112
      %v1756 = vpop.permute.xlu0 %1755
      %1757 = vrot.lane.b32.xlu0 %v1671, 112
      %v1758 = vpop.permute.xlu0 %1757
      %1759 = vrot.lane.b32.xlu0 %v1672, 112
      %v1760 = vpop.permute.xlu0 %1759
      %1761 = vrot.lane.b32.xlu0 %v1673, 112
      %v1762 = vpop.permute.xlu0 %1761
      %1763 = vrot.lane.b32.xlu0 %v1674, 112
      %v1764 = vpop.permute.xlu0 %1763
      %1765 = vrot.lane.b32.xlu0 %v1675, 112
      %v1766 = vpop.permute.xlu0 %1765
      %1767 = vrot.lane.b32.xlu0 %v1676, 112
      %v1768 = vpop.permute.xlu0 %1767
      %1769 = vrot.lane.b32.xlu0 %v1677, 112
      %v1770 = vpop.permute.xlu0 %1769
      %1771 = vrot.lane.b32.xlu0 %v1678, 112
      %v1772 = vpop.permute.xlu0 %1771
      %1773 = vrot.lane.b32.xlu0 %v1679, 112
      %v1774 = vpop.permute.xlu0 %1773
      %1775 = vrot.lane.b32.xlu0 %v1680, 112
      %v1776 = vpop.permute.xlu0 %1775
      %v1809 = vadd.f32 %v1617, %v1714
      %v1810 = vadd.f32 %v1618, %v1716
      %v1811 = vadd.f32 %v1619, %v1718
      %v1812 = vadd.f32 %v1620, %v1720
      %v1813 = vadd.f32 %v1621, %v1722
      %v1814 = vadd.f32 %v1622, %v1724
      %v1815 = vadd.f32 %v1623, %v1726
      %v1816 = vadd.f32 %v1624, %v1728
      %v1817 = vadd.f32 %v1625, %v1730
      %v1818 = vadd.f32 %v1626, %v1732
      %v1819 = vadd.f32 %v1627, %v1734
      %v1820 = vadd.f32 %v1628, %v1736
      %v1821 = vadd.f32 %v1629, %v1738
      %v1822 = vadd.f32 %v1630, %v1740
      %v1823 = vadd.f32 %v1631, %v1742
      %v1824 = vadd.f32 %v1632, %v1744
      %v1825 = vadd.f32 %v1633, %v1746
      %v1826 = vadd.f32 %v1634, %v1748
      %v1827 = vadd.f32 %v1635, %v1750
      %v1828 = vadd.f32 %v1636, %v1752
      %v1829 = vadd.f32 %v1637, %v1754
      %v1830 = vadd.f32 %v1638, %v1756
      %v1831 = vadd.f32 %v1639, %v1758
      %v1832 = vadd.f32 %v1640, %v1760
      %v1833 = vadd.f32 %v1641, %v1762
      %v1834 = vadd.f32 %v1642, %v1764
      %v1835 = vadd.f32 %v1643, %v1766
      %v1836 = vadd.f32 %v1644, %v1768
      %v1837 = vadd.f32 %v1645, %v1770
      %v1838 = vadd.f32 %v1646, %v1772
      %v1839 = vadd.f32 %v1647, %v1774
      %v1840 = vadd.f32 %v1648, %v1776
      %v1841 = vld [vmem:[%s515 + $0x2] sm:$0xff]
      %v1842 = vld [vmem:[%s515 + $0xa] sm:$0xff]
      %v1843 = vld [vmem:[%s515 + $0x1a] sm:$0xff]
      %v1844 = vld [vmem:[%s515 + $0x22] sm:$0xff]
      %v1845 = vld [vmem:[%s515 + $0x32] sm:$0xff]
      %v1846 = vld [vmem:[%s515 + $0x3a] sm:$0xff]
      %v1847 = vld [vmem:[%s515 + $0x4a] sm:$0xff]
      %v1848 = vld [vmem:[%s515 + $0x52] sm:$0xff]
      %v1849 = vld [vmem:[%s515 + $0x62] sm:$0xff]
      %v1850 = vld [vmem:[%s515 + $0x6a] sm:$0xff]
      %v1851 = vld [vmem:[%s515 + $0x7a] sm:$0xff]
      %v1852 = vld [vmem:[%s515 + $0x82] sm:$0xff]
      %v1853 = vld [vmem:[%s515 + $0x92] sm:$0xff]
      %v1854 = vld [vmem:[%s515 + $0x9a] sm:$0xff]
      %v1855 = vld [vmem:[%s515 + $0xaa] sm:$0xff]
      %v1856 = vld [vmem:[%s515 + $0xb2] sm:$0xff]
      %v1857 = vld [vmem:[%s515 + $0xc2] sm:$0xff]
      %v1858 = vld [vmem:[%s515 + $0xca] sm:$0xff]
      %v1859 = vld [vmem:[%s515 + $0xda] sm:$0xff]
      %v1860 = vld [vmem:[%s515 + $0xe2] sm:$0xff]
      %v1861 = vld [vmem:[%s515 + $0xf2] sm:$0xff]
      %v1862 = vld [vmem:[%s515 + $0xfa] sm:$0xff]
      %v1863 = vld [vmem:[%s515 + $0x10a] sm:$0xff]
      %v1864 = vld [vmem:[%s515 + $0x112] sm:$0xff]
      %v1865 = vld [vmem:[%s515 + $0x122] sm:$0xff]
      %v1866 = vld [vmem:[%s515 + $0x12a] sm:$0xff]
      %v1867 = vld [vmem:[%s515 + $0x13a] sm:$0xff]
      %v1868 = vld [vmem:[%s515 + $0x142] sm:$0xff]
      %v1869 = vld [vmem:[%s515 + $0x152] sm:$0xff]
      %v1870 = vld [vmem:[%s515 + $0x15a] sm:$0xff]
      %v1871 = vld [vmem:[%s515 + $0x16a] sm:$0xff]
      %v1872 = vld [vmem:[%s515 + $0x172] sm:$0xff]
      %1905 = vrot.lane.b32.xlu0 %v1841, 104
      %v1906 = vpop.permute.xlu0 %1905
      %1907 = vrot.lane.b32.xlu0 %v1842, 104
      %v1908 = vpop.permute.xlu0 %1907
      %1909 = vrot.lane.b32.xlu0 %v1843, 104
      %v1910 = vpop.permute.xlu0 %1909
      %1911 = vrot.lane.b32.xlu0 %v1844, 104
      %v1912 = vpop.permute.xlu0 %1911
      %1913 = vrot.lane.b32.xlu0 %v1845, 104
      %v1914 = vpop.permute.xlu0 %1913
      %1915 = vrot.lane.b32.xlu0 %v1846, 104
      %v1916 = vpop.permute.xlu0 %1915
      %1917 = vrot.lane.b32.xlu0 %v1847, 104
      %v1918 = vpop.permute.xlu0 %1917
      %1919 = vrot.lane.b32.xlu0 %v1848, 104
      %v1920 = vpop.permute.xlu0 %1919
      %1921 = vrot.lane.b32.xlu0 %v1849, 104
      %v1922 = vpop.permute.xlu0 %1921
      %1923 = vrot.lane.b32.xlu0 %v1850, 104
      %v1924 = vpop.permute.xlu0 %1923
      %1925 = vrot.lane.b32.xlu0 %v1851, 104
      %v1926 = vpop.permute.xlu0 %1925
      %1927 = vrot.lane.b32.xlu0 %v1852, 104
      %v1928 = vpop.permute.xlu0 %1927
      %1929 = vrot.lane.b32.xlu0 %v1853, 104
      %v1930 = vpop.permute.xlu0 %1929
      %1931 = vrot.lane.b32.xlu0 %v1854, 104
      %v1932 = vpop.permute.xlu0 %1931
      %1933 = vrot.lane.b32.xlu0 %v1855, 104
      %v1934 = vpop.permute.xlu0 %1933
      %1935 = vrot.lane.b32.xlu0 %v1856, 104
      %v1936 = vpop.permute.xlu0 %1935
      %1937 = vrot.lane.b32.xlu0 %v1857, 104
      %v1938 = vpop.permute.xlu0 %1937
      %1939 = vrot.lane.b32.xlu0 %v1858, 104
      %v1940 = vpop.permute.xlu0 %1939
      %1941 = vrot.lane.b32.xlu0 %v1859, 104
      %v1942 = vpop.permute.xlu0 %1941
      %1943 = vrot.lane.b32.xlu0 %v1860, 104
      %v1944 = vpop.permute.xlu0 %1943
      %1945 = vrot.lane.b32.xlu0 %v1861, 104
      %v1946 = vpop.permute.xlu0 %1945
      %1947 = vrot.lane.b32.xlu0 %v1862, 104
      %v1948 = vpop.permute.xlu0 %1947
      %1949 = vrot.lane.b32.xlu0 %v1863, 104
      %v1950 = vpop.permute.xlu0 %1949
      %1951 = vrot.lane.b32.xlu0 %v1864, 104
      %v1952 = vpop.permute.xlu0 %1951
      %1953 = vrot.lane.b32.xlu0 %v1865, 104
      %v1954 = vpop.permute.xlu0 %1953
      %1955 = vrot.lane.b32.xlu0 %v1866, 104
      %v1956 = vpop.permute.xlu0 %1955
      %1957 = vrot.lane.b32.xlu0 %v1867, 104
      %v1958 = vpop.permute.xlu0 %1957
      %1959 = vrot.lane.b32.xlu0 %v1868, 104
      %v1960 = vpop.permute.xlu0 %1959
      %1961 = vrot.lane.b32.xlu0 %v1869, 104
      %v1962 = vpop.permute.xlu0 %1961
      %1963 = vrot.lane.b32.xlu0 %v1870, 104
      %v1964 = vpop.permute.xlu0 %1963
      %1965 = vrot.lane.b32.xlu0 %v1871, 104
      %v1966 = vpop.permute.xlu0 %1965
      %1967 = vrot.lane.b32.xlu0 %v1872, 104
      %v1968 = vpop.permute.xlu0 %1967
      %v2001 = vadd.f32 %v1809, %v1906
      %v2002 = vadd.f32 %v1810, %v1908
      %v2003 = vadd.f32 %v1811, %v1910
      %v2004 = vadd.f32 %v1812, %v1912
      %v2005 = vadd.f32 %v1813, %v1914
      %v2006 = vadd.f32 %v1814, %v1916
      %v2007 = vadd.f32 %v1815, %v1918
      %v2008 = vadd.f32 %v1816, %v1920
      %v2009 = vadd.f32 %v1817, %v1922
      %v2010 = vadd.f32 %v1818, %v1924
      %v2011 = vadd.f32 %v1819, %v1926
      %v2012 = vadd.f32 %v1820, %v1928
      %v2013 = vadd.f32 %v1821, %v1930
      %v2014 = vadd.f32 %v1822, %v1932
      %v2015 = vadd.f32 %v1823, %v1934
      %v2016 = vadd.f32 %v1824, %v1936
      %v2017 = vadd.f32 %v1825, %v1938
      %v2018 = vadd.f32 %v1826, %v1940
      %v2019 = vadd.f32 %v1827, %v1942
      %v2020 = vadd.f32 %v1828, %v1944
      %v2021 = vadd.f32 %v1829, %v1946
      %v2022 = vadd.f32 %v1830, %v1948
      %v2023 = vadd.f32 %v1831, %v1950
      %v2024 = vadd.f32 %v1832, %v1952
      %v2025 = vadd.f32 %v1833, %v1954
      %v2026 = vadd.f32 %v1834, %v1956
      %v2027 = vadd.f32 %v1835, %v1958
      %v2028 = vadd.f32 %v1836, %v1960
      %v2029 = vadd.f32 %v1837, %v1962
      %v2030 = vadd.f32 %v1838, %v1964
      %v2031 = vadd.f32 %v1839, %v1966
      %v2032 = vadd.f32 %v1840, %v1968
      %2065 = vrot.lane.b32.xlu0 %v2001, 96
      %v2066 = vpop.permute.xlu0 %2065
      %2067 = vrot.lane.b32.xlu0 %v2002, 96
      %v2068 = vpop.permute.xlu0 %2067
      %2069 = vrot.lane.b32.xlu0 %v2003, 96
      %v2070 = vpop.permute.xlu0 %2069
      %2071 = vrot.lane.b32.xlu0 %v2004, 96
      %v2072 = vpop.permute.xlu0 %2071
      %2073 = vrot.lane.b32.xlu0 %v2005, 96
      %v2074 = vpop.permute.xlu0 %2073
      %2075 = vrot.lane.b32.xlu0 %v2006, 96
      %v2076 = vpop.permute.xlu0 %2075
      %2077 = vrot.lane.b32.xlu0 %v2007, 96
      %v2078 = vpop.permute.xlu0 %2077
      %2079 = vrot.lane.b32.xlu0 %v2008, 96
      %v2080 = vpop.permute.xlu0 %2079
      %2081 = vrot.lane.b32.xlu0 %v2009, 96
      %v2082 = vpop.permute.xlu0 %2081
      %2083 = vrot.lane.b32.xlu0 %v2010, 96
      %v2084 = vpop.permute.xlu0 %2083
      %2085 = vrot.lane.b32.xlu0 %v2011, 96
      %v2086 = vpop.permute.xlu0 %2085
      %2087 = vrot.lane.b32.xlu0 %v2012, 96
      %v2088 = vpop.permute.xlu0 %2087
      %2089 = vrot.lane.b32.xlu0 %v2013, 96
      %v2090 = vpop.permute.xlu0 %2089
      %2091 = vrot.lane.b32.xlu0 %v2014, 96
      %v2092 = vpop.permute.xlu0 %2091
      %2093 = vrot.lane.b32.xlu0 %v2015, 96
      %v2094 = vpop.permute.xlu0 %2093
      %2095 = vrot.lane.b32.xlu0 %v2016, 96
      %v2096 = vpop.permute.xlu0 %2095
      %2097 = vrot.lane.b32.xlu0 %v2017, 96
      %v2098 = vpop.permute.xlu0 %2097
      %2099 = vrot.lane.b32.xlu0 %v2018, 96
      %v2100 = vpop.permute.xlu0 %2099
      %2101 = vrot.lane.b32.xlu0 %v2019, 96
      %v2102 = vpop.permute.xlu0 %2101
      %2103 = vrot.lane.b32.xlu0 %v2020, 96
      %v2104 = vpop.permute.xlu0 %2103
      %2105 = vrot.lane.b32.xlu0 %v2021, 96
      %v2106 = vpop.permute.xlu0 %2105
      %2107 = vrot.lane.b32.xlu0 %v2022, 96
      %v2108 = vpop.permute.xlu0 %2107
      %2109 = vrot.lane.b32.xlu0 %v2023, 96
      %v2110 = vpop.permute.xlu0 %2109
      %2111 = vrot.lane.b32.xlu0 %v2024, 96
      %v2112 = vpop.permute.xlu0 %2111
      %2113 = vrot.lane.b32.xlu0 %v2025, 96
      %v2114 = vpop.permute.xlu0 %2113
      %2115 = vrot.lane.b32.xlu0 %v2026, 96
      %v2116 = vpop.permute.xlu0 %2115
      %2117 = vrot.lane.b32.xlu0 %v2027, 96
      %v2118 = vpop.permute.xlu0 %2117
      %2119 = vrot.lane.b32.xlu0 %v2028, 96
      %v2120 = vpop.permute.xlu0 %2119
      %2121 = vrot.lane.b32.xlu0 %v2029, 96
      %v2122 = vpop.permute.xlu0 %2121
      %2123 = vrot.lane.b32.xlu0 %v2030, 96
      %v2124 = vpop.permute.xlu0 %2123
      %2125 = vrot.lane.b32.xlu0 %v2031, 96
      %v2126 = vpop.permute.xlu0 %2125
      %2127 = vrot.lane.b32.xlu0 %v2032, 96
      %v2128 = vpop.permute.xlu0 %2127
      %s2161 = scalar_lea.vmem [#allocation3], 256
      %2162 = vst.msk [vmem:[%s2161] sm:$0xff] %vm1188, %v2066
      %2163 = vst.msk [vmem:[%s2161 + $0x8] sm:$0xff] %vm1188, %v2068
      %2164 = vst.msk [vmem:[%s2161 + $0x10] sm:$0xff] %vm1188, %v2070
      %2165 = vst.msk [vmem:[%s2161 + $0x18] sm:$0xff] %vm1188, %v2072
      %2166 = vst.msk [vmem:[%s2161 + $0x20] sm:$0xff] %vm1188, %v2074
      %2167 = vst.msk [vmem:[%s2161 + $0x28] sm:$0xff] %vm1188, %v2076
      %2168 = vst.msk [vmem:[%s2161 + $0x30] sm:$0xff] %vm1188, %v2078
      %2169 = vst.msk [vmem:[%s2161 + $0x38] sm:$0xff] %vm1188, %v2080
      %2170 = vst.msk [vmem:[%s2161 + $0x40] sm:$0xff] %vm1188, %v2082
      %2171 = vst.msk [vmem:[%s2161 + $0x48] sm:$0xff] %vm1188, %v2084
      %2172 = vst.msk [vmem:[%s2161 + $0x50] sm:$0xff] %vm1188, %v2086
      %2173 = vst.msk [vmem:[%s2161 + $0x58] sm:$0xff] %vm1188, %v2088
      %2174 = vst.msk [vmem:[%s2161 + $0x60] sm:$0xff] %vm1188, %v2090
      %2175 = vst.msk [vmem:[%s2161 + $0x68] sm:$0xff] %vm1188, %v2092
      %2176 = vst.msk [vmem:[%s2161 + $0x70] sm:$0xff] %vm1188, %v2094
      %2177 = vst.msk [vmem:[%s2161 + $0x78] sm:$0xff] %vm1188, %v2096
      %2178 = vst.msk [vmem:[%s2161 + $0x80] sm:$0xff] %vm1188, %v2098
      %2179 = vst.msk [vmem:[%s2161 + $0x88] sm:$0xff] %vm1188, %v2100
      %2180 = vst.msk [vmem:[%s2161 + $0x90] sm:$0xff] %vm1188, %v2102
      %2181 = vst.msk [vmem:[%s2161 + $0x98] sm:$0xff] %vm1188, %v2104
      %2182 = vst.msk [vmem:[%s2161 + $0xa0] sm:$0xff] %vm1188, %v2106
      %2183 = vst.msk [vmem:[%s2161 + $0xa8] sm:$0xff] %vm1188, %v2108
      %2184 = vst.msk [vmem:[%s2161 + $0xb0] sm:$0xff] %vm1188, %v2110
      %2185 = vst.msk [vmem:[%s2161 + $0xb8] sm:$0xff] %vm1188, %v2112
      %2186 = vst.msk [vmem:[%s2161 + $0xc0] sm:$0xff] %vm1188, %v2114
      %2187 = vst.msk [vmem:[%s2161 + $0xc8] sm:$0xff] %vm1188, %v2116
      %2188 = vst.msk [vmem:[%s2161 + $0xd0] sm:$0xff] %vm1188, %v2118
      %2189 = vst.msk [vmem:[%s2161 + $0xd8] sm:$0xff] %vm1188, %v2120
      %2190 = vst.msk [vmem:[%s2161 + $0xe0] sm:$0xff] %vm1188, %v2122
      %2191 = vst.msk [vmem:[%s2161 + $0xe8] sm:$0xff] %vm1188, %v2124
      %2192 = vst.msk [vmem:[%s2161 + $0xf0] sm:$0xff] %vm1188, %v2126
      %2193 = vst.msk [vmem:[%s2161 + $0xf8] sm:$0xff] %vm1188, %v2128
      %vm2194 = vcmask 326912
      %v2195 = vsel %vm2194, %v2001, 0.0
      %v2196 = vsel %vm2194, %v2002, 0.0
      %v2197 = vadd.f32 %v2195, %v2196
      %v2198 = vsel %vm2194, %v2003, 0.0
      %v2199 = vadd.f32 %v2197, %v2198
      %v2200 = vsel %vm2194, %v2004, 0.0
      %v2201 = vadd.f32 %v2199, %v2200
      %v2202 = vsel %vm2194, %v2005, 0.0
      %v2203 = vadd.f32 %v2201, %v2202
      %v2204 = vsel %vm2194, %v2006, 0.0
      %v2205 = vadd.f32 %v2203, %v2204
      %v2206 = vsel %vm2194, %v2007, 0.0
      %v2207 = vadd.f32 %v2205, %v2206
      %v2208 = vsel %vm2194, %v2008, 0.0
      %v2209 = vadd.f32 %v2207, %v2208
      %v2210 = vsel %vm2194, %v2009, 0.0
      %v2211 = vadd.f32 %v2209, %v2210
      %v2212 = vsel %vm2194, %v2010, 0.0
      %v2213 = vadd.f32 %v2211, %v2212
      %v2214 = vsel %vm2194, %v2011, 0.0
      %v2215 = vadd.f32 %v2213, %v2214
      %v2216 = vsel %vm2194, %v2012, 0.0
      %v2217 = vadd.f32 %v2215, %v2216
      %v2218 = vsel %vm2194, %v2013, 0.0
      %v2219 = vadd.f32 %v2217, %v2218
      %v2220 = vsel %vm2194, %v2014, 0.0
      %v2221 = vadd.f32 %v2219, %v2220
      %v2222 = vsel %vm2194, %v2015, 0.0
      %v2223 = vadd.f32 %v2221, %v2222
      %v2224 = vsel %vm2194, %v2016, 0.0
      %v2225 = vadd.f32 %v2223, %v2224
      %v2226 = vsel %vm2194, %v2017, 0.0
      %v2227 = vadd.f32 %v2225, %v2226
      %v2228 = vsel %vm2194, %v2018, 0.0
      %v2229 = vadd.f32 %v2227, %v2228
      %v2230 = vsel %vm2194, %v2019, 0.0
      %v2231 = vadd.f32 %v2229, %v2230
      %v2232 = vsel %vm2194, %v2020, 0.0
      %v2233 = vadd.f32 %v2231, %v2232
      %v2234 = vsel %vm2194, %v2021, 0.0
      %v2235 = vadd.f32 %v2233, %v2234
      %v2236 = vsel %vm2194, %v2022, 0.0
      %v2237 = vadd.f32 %v2235, %v2236
      %v2238 = vsel %vm2194, %v2023, 0.0
      %v2239 = vadd.f32 %v2237, %v2238
      %v2240 = vsel %vm2194, %v2024, 0.0
      %v2241 = vadd.f32 %v2239, %v2240
      %v2242 = vsel %vm2194, %v2025, 0.0
      %v2243 = vadd.f32 %v2241, %v2242
      %v2244 = vsel %vm2194, %v2026, 0.0
      %v2245 = vadd.f32 %v2243, %v2244
      %v2246 = vsel %vm2194, %v2027, 0.0
      %v2247 = vadd.f32 %v2245, %v2246
      %v2248 = vsel %vm2194, %v2028, 0.0
      %v2249 = vadd.f32 %v2247, %v2248
      %v2250 = vsel %vm2194, %v2029, 0.0
      %v2251 = vadd.f32 %v2249, %v2250
      %v2252 = vsel %vm2194, %v2030, 0.0
      %v2253 = vadd.f32 %v2251, %v2252
      %v2254 = vsel %vm2194, %v2031, 0.0
      %v2255 = vadd.f32 %v2253, %v2254
      %v2256 = vsel %vm2194, %v2032, 0.0
      %v2257 = vadd.f32 %v2255, %v2256
      %v2258 = vrot.slane %v2257, 4
      %v2259 = vadd.f32 %v2257, %v2258
      %v2260 = vrot.slane %v2259, 2
      %v2261 = vadd.f32 %v2259, %v2260
      %v2262 = vrot.slane %v2261, 1
      %v2263 = vadd.f32 %v2261, %v2262
      %2265 = vrot.lane.b32.xlu0 %v2263, 96
      %v2266 = vpop.permute.xlu0 %2265
      %v2268 = vadd.f32 %v1290, %v2266
      %v2269 = vmul.f32 %v2001, %v2001
      %v2270 = vmul.f32 %v2002, %v2002
      %v2271 = vmul.f32 %v2003, %v2003
      %v2272 = vmul.f32 %v2004, %v2004
      %v2273 = vmul.f32 %v2005, %v2005
      %v2274 = vmul.f32 %v2006, %v2006
      %v2275 = vmul.f32 %v2007, %v2007
      %v2276 = vmul.f32 %v2008, %v2008
      %v2277 = vmul.f32 %v2009, %v2009
      %v2278 = vmul.f32 %v2010, %v2010
      %v2279 = vmul.f32 %v2011, %v2011
      %v2280 = vmul.f32 %v2012, %v2012
      %v2281 = vmul.f32 %v2013, %v2013
      %v2282 = vmul.f32 %v2014, %v2014
      %v2283 = vmul.f32 %v2015, %v2015
      %v2284 = vmul.f32 %v2016, %v2016
      %v2285 = vmul.f32 %v2017, %v2017
      %v2286 = vmul.f32 %v2018, %v2018
      %v2287 = vmul.f32 %v2019, %v2019
      %v2288 = vmul.f32 %v2020, %v2020
      %v2289 = vmul.f32 %v2021, %v2021
      %v2290 = vmul.f32 %v2022, %v2022
      %v2291 = vmul.f32 %v2023, %v2023
      %v2292 = vmul.f32 %v2024, %v2024
      %v2293 = vmul.f32 %v2025, %v2025
      %v2294 = vmul.f32 %v2026, %v2026
      %v2295 = vmul.f32 %v2027, %v2027
      %v2296 = vmul.f32 %v2028, %v2028
      %v2297 = vmul.f32 %v2029, %v2029
      %v2298 = vmul.f32 %v2030, %v2030
      %v2299 = vmul.f32 %v2031, %v2031
      %v2300 = vmul.f32 %v2032, %v2032
      %v2301 = vsel %vm2194, %v2269, 0.0
      %v2302 = vsel %vm2194, %v2270, 0.0
      %v2303 = vadd.f32 %v2301, %v2302
      %v2304 = vsel %vm2194, %v2271, 0.0
      %v2305 = vadd.f32 %v2303, %v2304
      %v2306 = vsel %vm2194, %v2272, 0.0
      %v2307 = vadd.f32 %v2305, %v2306
      %v2308 = vsel %vm2194, %v2273, 0.0
      %v2309 = vadd.f32 %v2307, %v2308
      %v2310 = vsel %vm2194, %v2274, 0.0
      %v2311 = vadd.f32 %v2309, %v2310
      %v2312 = vsel %vm2194, %v2275, 0.0
      %v2313 = vadd.f32 %v2311, %v2312
      %v2314 = vsel %vm2194, %v2276, 0.0
      %v2315 = vadd.f32 %v2313, %v2314
      %v2316 = vsel %vm2194, %v2277, 0.0
      %v2317 = vadd.f32 %v2315, %v2316
      %v2318 = vsel %vm2194, %v2278, 0.0
      %v2319 = vadd.f32 %v2317, %v2318
      %v2320 = vsel %vm2194, %v2279, 0.0
      %v2321 = vadd.f32 %v2319, %v2320
      %v2322 = vsel %vm2194, %v2280, 0.0
      %v2323 = vadd.f32 %v2321, %v2322
      %v2324 = vsel %vm2194, %v2281, 0.0
      %v2325 = vadd.f32 %v2323, %v2324
      %v2326 = vsel %vm2194, %v2282, 0.0
      %v2327 = vadd.f32 %v2325, %v2326
      %v2328 = vsel %vm2194, %v2283, 0.0
      %v2329 = vadd.f32 %v2327, %v2328
      %v2330 = vsel %vm2194, %v2284, 0.0
      %v2331 = vadd.f32 %v2329, %v2330
      %v2332 = vsel %vm2194, %v2285, 0.0
      %v2333 = vadd.f32 %v2331, %v2332
      %v2334 = vsel %vm2194, %v2286, 0.0
      %v2335 = vadd.f32 %v2333, %v2334
      %v2336 = vsel %vm2194, %v2287, 0.0
      %v2337 = vadd.f32 %v2335, %v2336
      %v2338 = vsel %vm2194, %v2288, 0.0
      %v2339 = vadd.f32 %v2337, %v2338
      %v2340 = vsel %vm2194, %v2289, 0.0
      %v2341 = vadd.f32 %v2339, %v2340
      %v2342 = vsel %vm2194, %v2290, 0.0
      %v2343 = vadd.f32 %v2341, %v2342
      %v2344 = vsel %vm2194, %v2291, 0.0
      %v2345 = vadd.f32 %v2343, %v2344
      %v2346 = vsel %vm2194, %v2292, 0.0
      %v2347 = vadd.f32 %v2345, %v2346
      %v2348 = vsel %vm2194, %v2293, 0.0
      %v2349 = vadd.f32 %v2347, %v2348
      %v2350 = vsel %vm2194, %v2294, 0.0
      %v2351 = vadd.f32 %v2349, %v2350
      %v2352 = vsel %vm2194, %v2295, 0.0
      %v2353 = vadd.f32 %v2351, %v2352
      %v2354 = vsel %vm2194, %v2296, 0.0
      %v2355 = vadd.f32 %v2353, %v2354
      %v2356 = vsel %vm2194, %v2297, 0.0
      %v2357 = vadd.f32 %v2355, %v2356
      %v2358 = vsel %vm2194, %v2298, 0.0
      %v2359 = vadd.f32 %v2357, %v2358
      %v2360 = vsel %vm2194, %v2299, 0.0
      %v2361 = vadd.f32 %v2359, %v2360
      %v2362 = vsel %vm2194, %v2300, 0.0
      %v2363 = vadd.f32 %v2361, %v2362
      %v2364 = vrot.slane %v2363, 4
      %v2365 = vadd.f32 %v2363, %v2364
      %v2366 = vrot.slane %v2365, 2
      %v2367 = vadd.f32 %v2365, %v2366
      %v2368 = vrot.slane %v2367, 1
      %v2369 = vadd.f32 %v2367, %v2368
      %2371 = vrot.lane.b32.xlu0 %v2369, 96
      %v2372 = vpop.permute.xlu0 %2371
      %v2374 = vadd.f32 %v1392, %v2372
      %v2375 = vld [vmem:[%s515] sm:$0xff]
      %v2376 = vld [vmem:[%s515 + $0x8] sm:$0xff]
      %v2377 = vld [vmem:[%s515 + $0x18] sm:$0xff]
      %v2378 = vld [vmem:[%s515 + $0x20] sm:$0xff]
      %v2379 = vld [vmem:[%s515 + $0x30] sm:$0xff]
      %v2380 = vld [vmem:[%s515 + $0x38] sm:$0xff]
      %v2381 = vld [vmem:[%s515 + $0x48] sm:$0xff]
      %v2382 = vld [vmem:[%s515 + $0x50] sm:$0xff]
      %v2383 = vld [vmem:[%s515 + $0x60] sm:$0xff]
      %v2384 = vld [vmem:[%s515 + $0x68] sm:$0xff]
      %v2385 = vld [vmem:[%s515 + $0x78] sm:$0xff]
      %v2386 = vld [vmem:[%s515 + $0x80] sm:$0xff]
      %v2387 = vld [vmem:[%s515 + $0x90] sm:$0xff]
      %v2388 = vld [vmem:[%s515 + $0x98] sm:$0xff]
      %v2389 = vld [vmem:[%s515 + $0xa8] sm:$0xff]
      %v2390 = vld [vmem:[%s515 + $0xb0] sm:$0xff]
      %v2391 = vld [vmem:[%s515 + $0xc0] sm:$0xff]
      %v2392 = vld [vmem:[%s515 + $0xc8] sm:$0xff]
      %v2393 = vld [vmem:[%s515 + $0xd8] sm:$0xff]
      %v2394 = vld [vmem:[%s515 + $0xe0] sm:$0xff]
      %v2395 = vld [vmem:[%s515 + $0xf0] sm:$0xff]
      %v2396 = vld [vmem:[%s515 + $0xf8] sm:$0xff]
      %v2397 = vld [vmem:[%s515 + $0x108] sm:$0xff]
      %v2398 = vld [vmem:[%s515 + $0x110] sm:$0xff]
      %v2399 = vld [vmem:[%s515 + $0x120] sm:$0xff]
      %v2400 = vld [vmem:[%s515 + $0x128] sm:$0xff]
      %v2401 = vld [vmem:[%s515 + $0x138] sm:$0xff]
      %v2402 = vld [vmem:[%s515 + $0x140] sm:$0xff]
      %v2403 = vld [vmem:[%s515 + $0x150] sm:$0xff]
      %v2404 = vld [vmem:[%s515 + $0x158] sm:$0xff]
      %v2405 = vld [vmem:[%s515 + $0x168] sm:$0xff]
      %v2406 = vld [vmem:[%s515 + $0x170] sm:$0xff]
      %v2407 = vadd.f32 %v2375, 0.0
      %v2408 = vadd.f32 %v2376, 0.0
      %v2409 = vadd.f32 %v2377, 0.0
      %v2410 = vadd.f32 %v2378, 0.0
      %v2411 = vadd.f32 %v2379, 0.0
      %v2412 = vadd.f32 %v2380, 0.0
      %v2413 = vadd.f32 %v2381, 0.0
      %v2414 = vadd.f32 %v2382, 0.0
      %v2415 = vadd.f32 %v2383, 0.0
      %v2416 = vadd.f32 %v2384, 0.0
      %v2417 = vadd.f32 %v2385, 0.0
      %v2418 = vadd.f32 %v2386, 0.0
      %v2419 = vadd.f32 %v2387, 0.0
      %v2420 = vadd.f32 %v2388, 0.0
      %v2421 = vadd.f32 %v2389, 0.0
      %v2422 = vadd.f32 %v2390, 0.0
      %v2423 = vadd.f32 %v2391, 0.0
      %v2424 = vadd.f32 %v2392, 0.0
      %v2425 = vadd.f32 %v2393, 0.0
      %v2426 = vadd.f32 %v2394, 0.0
      %v2427 = vadd.f32 %v2395, 0.0
      %v2428 = vadd.f32 %v2396, 0.0
      %v2429 = vadd.f32 %v2397, 0.0
      %v2430 = vadd.f32 %v2398, 0.0
      %v2431 = vadd.f32 %v2399, 0.0
      %v2432 = vadd.f32 %v2400, 0.0
      %v2433 = vadd.f32 %v2401, 0.0
      %v2434 = vadd.f32 %v2402, 0.0
      %v2435 = vadd.f32 %v2403, 0.0
      %v2436 = vadd.f32 %v2404, 0.0
      %v2437 = vadd.f32 %v2405, 0.0
      %v2438 = vadd.f32 %v2406, 0.0
      %v2439 = vld [vmem:[%s515 + $0x1] sm:$0xff]
      %v2440 = vld [vmem:[%s515 + $0x9] sm:$0xff]
      %v2441 = vld [vmem:[%s515 + $0x19] sm:$0xff]
      %v2442 = vld [vmem:[%s515 + $0x21] sm:$0xff]
      %v2443 = vld [vmem:[%s515 + $0x31] sm:$0xff]
      %v2444 = vld [vmem:[%s515 + $0x39] sm:$0xff]
      %v2445 = vld [vmem:[%s515 + $0x49] sm:$0xff]
      %v2446 = vld [vmem:[%s515 + $0x51] sm:$0xff]
      %v2447 = vld [vmem:[%s515 + $0x61] sm:$0xff]
      %v2448 = vld [vmem:[%s515 + $0x69] sm:$0xff]
      %v2449 = vld [vmem:[%s515 + $0x79] sm:$0xff]
      %v2450 = vld [vmem:[%s515 + $0x81] sm:$0xff]
      %v2451 = vld [vmem:[%s515 + $0x91] sm:$0xff]
      %v2452 = vld [vmem:[%s515 + $0x99] sm:$0xff]
      %v2453 = vld [vmem:[%s515 + $0xa9] sm:$0xff]
      %v2454 = vld [vmem:[%s515 + $0xb1] sm:$0xff]
      %v2455 = vld [vmem:[%s515 + $0xc1] sm:$0xff]
      %v2456 = vld [vmem:[%s515 + $0xc9] sm:$0xff]
      %v2457 = vld [vmem:[%s515 + $0xd9] sm:$0xff]
      %v2458 = vld [vmem:[%s515 + $0xe1] sm:$0xff]
      %v2459 = vld [vmem:[%s515 + $0xf1] sm:$0xff]
      %v2460 = vld [vmem:[%s515 + $0xf9] sm:$0xff]
      %v2461 = vld [vmem:[%s515 + $0x109] sm:$0xff]
      %v2462 = vld [vmem:[%s515 + $0x111] sm:$0xff]
      %v2463 = vld [vmem:[%s515 + $0x121] sm:$0xff]
      %v2464 = vld [vmem:[%s515 + $0x129] sm:$0xff]
      %v2465 = vld [vmem:[%s515 + $0x139] sm:$0xff]
      %v2466 = vld [vmem:[%s515 + $0x141] sm:$0xff]
      %v2467 = vld [vmem:[%s515 + $0x151] sm:$0xff]
      %v2468 = vld [vmem:[%s515 + $0x159] sm:$0xff]
      %v2469 = vld [vmem:[%s515 + $0x169] sm:$0xff]
      %v2470 = vld [vmem:[%s515 + $0x171] sm:$0xff]
      %2503 = vrot.lane.b32.xlu0 %v2439, 120
      %v2504 = vpop.permute.xlu0 %2503
      %2505 = vrot.lane.b32.xlu0 %v2440, 120
      %v2506 = vpop.permute.xlu0 %2505
      %2507 = vrot.lane.b32.xlu0 %v2441, 120
      %v2508 = vpop.permute.xlu0 %2507
      %2509 = vrot.lane.b32.xlu0 %v2442, 120
      %v2510 = vpop.permute.xlu0 %2509
      %2511 = vrot.lane.b32.xlu0 %v2443, 120
      %v2512 = vpop.permute.xlu0 %2511
      %2513 = vrot.lane.b32.xlu0 %v2444, 120
      %v2514 = vpop.permute.xlu0 %2513
      %2515 = vrot.lane.b32.xlu0 %v2445, 120
      %v2516 = vpop.permute.xlu0 %2515
      %2517 = vrot.lane.b32.xlu0 %v2446, 120
      %v2518 = vpop.permute.xlu0 %2517
      %2519 = vrot.lane.b32.xlu0 %v2447, 120
      %v2520 = vpop.permute.xlu0 %2519
      %2521 = vrot.lane.b32.xlu0 %v2448, 120
      %v2522 = vpop.permute.xlu0 %2521
      %2523 = vrot.lane.b32.xlu0 %v2449, 120
      %v2524 = vpop.permute.xlu0 %2523
      %2525 = vrot.lane.b32.xlu0 %v2450, 120
      %v2526 = vpop.permute.xlu0 %2525
      %2527 = vrot.lane.b32.xlu0 %v2451, 120
      %v2528 = vpop.permute.xlu0 %2527
      %2529 = vrot.lane.b32.xlu0 %v2452, 120
      %v2530 = vpop.permute.xlu0 %2529
      %2531 = vrot.lane.b32.xlu0 %v2453, 120
      %v2532 = vpop.permute.xlu0 %2531
      %2533 = vrot.lane.b32.xlu0 %v2454, 120
      %v2534 = vpop.permute.xlu0 %2533
      %2535 = vrot.lane.b32.xlu0 %v2455, 120
      %v2536 = vpop.permute.xlu0 %2535
      %2537 = vrot.lane.b32.xlu0 %v2456, 120
      %v2538 = vpop.permute.xlu0 %2537
      %2539 = vrot.lane.b32.xlu0 %v2457, 120
      %v2540 = vpop.permute.xlu0 %2539
      %2541 = vrot.lane.b32.xlu0 %v2458, 120
      %v2542 = vpop.permute.xlu0 %2541
      %2543 = vrot.lane.b32.xlu0 %v2459, 120
      %v2544 = vpop.permute.xlu0 %2543
      %2545 = vrot.lane.b32.xlu0 %v2460, 120
      %v2546 = vpop.permute.xlu0 %2545
      %2547 = vrot.lane.b32.xlu0 %v2461, 120
      %v2548 = vpop.permute.xlu0 %2547
      %2549 = vrot.lane.b32.xlu0 %v2462, 120
      %v2550 = vpop.permute.xlu0 %2549
      %2551 = vrot.lane.b32.xlu0 %v2463, 120
      %v2552 = vpop.permute.xlu0 %2551
      %2553 = vrot.lane.b32.xlu0 %v2464, 120
      %v2554 = vpop.permute.xlu0 %2553
      %2555 = vrot.lane.b32.xlu0 %v2465, 120
      %v2556 = vpop.permute.xlu0 %2555
      %2557 = vrot.lane.b32.xlu0 %v2466, 120
      %v2558 = vpop.permute.xlu0 %2557
      %2559 = vrot.lane.b32.xlu0 %v2467, 120
      %v2560 = vpop.permute.xlu0 %2559
      %2561 = vrot.lane.b32.xlu0 %v2468, 120
      %v2562 = vpop.permute.xlu0 %2561
      %2563 = vrot.lane.b32.xlu0 %v2469, 120
      %v2564 = vpop.permute.xlu0 %2563
      %2565 = vrot.lane.b32.xlu0 %v2470, 120
      %v2566 = vpop.permute.xlu0 %2565
      %v2599 = vadd.f32 %v2407, %v2504
      %v2600 = vadd.f32 %v2408, %v2506
      %v2601 = vadd.f32 %v2409, %v2508
      %v2602 = vadd.f32 %v2410, %v2510
      %v2603 = vadd.f32 %v2411, %v2512
      %v2604 = vadd.f32 %v2412, %v2514
      %v2605 = vadd.f32 %v2413, %v2516
      %v2606 = vadd.f32 %v2414, %v2518
      %v2607 = vadd.f32 %v2415, %v2520
      %v2608 = vadd.f32 %v2416, %v2522
      %v2609 = vadd.f32 %v2417, %v2524
      %v2610 = vadd.f32 %v2418, %v2526
      %v2611 = vadd.f32 %v2419, %v2528
      %v2612 = vadd.f32 %v2420, %v2530
      %v2613 = vadd.f32 %v2421, %v2532
      %v2614 = vadd.f32 %v2422, %v2534
      %v2615 = vadd.f32 %v2423, %v2536
      %v2616 = vadd.f32 %v2424, %v2538
      %v2617 = vadd.f32 %v2425, %v2540
      %v2618 = vadd.f32 %v2426, %v2542
      %v2619 = vadd.f32 %v2427, %v2544
      %v2620 = vadd.f32 %v2428, %v2546
      %v2621 = vadd.f32 %v2429, %v2548
      %v2622 = vadd.f32 %v2430, %v2550
      %v2623 = vadd.f32 %v2431, %v2552
      %v2624 = vadd.f32 %v2432, %v2554
      %v2625 = vadd.f32 %v2433, %v2556
      %v2626 = vadd.f32 %v2434, %v2558
      %v2627 = vadd.f32 %v2435, %v2560
      %v2628 = vadd.f32 %v2436, %v2562
      %v2629 = vadd.f32 %v2437, %v2564
      %v2630 = vadd.f32 %v2438, %v2566
      %s2631 = scalar_lea.vmem [#allocation2], 48
      %v2632 = vld [vmem:[%s2631] sm:$0xff]
      %v2633 = vld [vmem:[%s2631 + $0x8] sm:$0xff]
      %v2634 = vld [vmem:[%s2631 + $0x18] sm:$0xff]
      %v2635 = vld [vmem:[%s2631 + $0x20] sm:$0xff]
      %v2636 = vld [vmem:[%s2631 + $0x30] sm:$0xff]
      %v2637 = vld [vmem:[%s2631 + $0x38] sm:$0xff]
      %v2638 = vld [vmem:[%s2631 + $0x48] sm:$0xff]
      %v2639 = vld [vmem:[%s2631 + $0x50] sm:$0xff]
      %v2640 = vld [vmem:[%s2631 + $0x60] sm:$0xff]
      %v2641 = vld [vmem:[%s2631 + $0x68] sm:$0xff]
      %v2642 = vld [vmem:[%s2631 + $0x78] sm:$0xff]
      %v2643 = vld [vmem:[%s2631 + $0x80] sm:$0xff]
      %v2644 = vld [vmem:[%s2631 + $0x90] sm:$0xff]
      %v2645 = vld [vmem:[%s2631 + $0x98] sm:$0xff]
      %v2646 = vld [vmem:[%s2631 + $0xa8] sm:$0xff]
      %v2647 = vld [vmem:[%s2631 + $0xb0] sm:$0xff]
      %v2648 = vld [vmem:[%s2631 + $0xc0] sm:$0xff]
      %v2649 = vld [vmem:[%s2631 + $0xc8] sm:$0xff]
      %v2650 = vld [vmem:[%s2631 + $0xd8] sm:$0xff]
      %v2651 = vld [vmem:[%s2631 + $0xe0] sm:$0xff]
      %v2652 = vld [vmem:[%s2631 + $0xf0] sm:$0xff]
      %v2653 = vld [vmem:[%s2631 + $0xf8] sm:$0xff]
      %v2654 = vld [vmem:[%s2631 + $0x108] sm:$0xff]
      %v2655 = vld [vmem:[%s2631 + $0x110] sm:$0xff]
      %v2656 = vld [vmem:[%s2631 + $0x120] sm:$0xff]
      %v2657 = vld [vmem:[%s2631 + $0x128] sm:$0xff]
      %v2658 = vld [vmem:[%s2631 + $0x138] sm:$0xff]
      %v2659 = vld [vmem:[%s2631 + $0x140] sm:$0xff]
      %v2660 = vld [vmem:[%s2631 + $0x150] sm:$0xff]
      %v2661 = vld [vmem:[%s2631 + $0x158] sm:$0xff]
      %v2662 = vld [vmem:[%s2631 + $0x168] sm:$0xff]
      %v2663 = vld [vmem:[%s2631 + $0x170] sm:$0xff]
      %2696 = vrot.lane.b32.xlu0 %v2632, 112
      %v2697 = vpop.permute.xlu0 %2696
      %2698 = vrot.lane.b32.xlu0 %v2633, 112
      %v2699 = vpop.permute.xlu0 %2698
      %2700 = vrot.lane.b32.xlu0 %v2634, 112
      %v2701 = vpop.permute.xlu0 %2700
      %2702 = vrot.lane.b32.xlu0 %v2635, 112
      %v2703 = vpop.permute.xlu0 %2702
      %2704 = vrot.lane.b32.xlu0 %v2636, 112
      %v2705 = vpop.permute.xlu0 %2704
      %2706 = vrot.lane.b32.xlu0 %v2637, 112
      %v2707 = vpop.permute.xlu0 %2706
      %2708 = vrot.lane.b32.xlu0 %v2638, 112
      %v2709 = vpop.permute.xlu0 %2708
      %2710 = vrot.lane.b32.xlu0 %v2639, 112
      %v2711 = vpop.permute.xlu0 %2710
      %2712 = vrot.lane.b32.xlu0 %v2640, 112
      %v2713 = vpop.permute.xlu0 %2712
      %2714 = vrot.lane.b32.xlu0 %v2641, 112
      %v2715 = vpop.permute.xlu0 %2714
      %2716 = vrot.lane.b32.xlu0 %v2642, 112
      %v2717 = vpop.permute.xlu0 %2716
      %2718 = vrot.lane.b32.xlu0 %v2643, 112
      %v2719 = vpop.permute.xlu0 %2718
      %2720 = vrot.lane.b32.xlu0 %v2644, 112
      %v2721 = vpop.permute.xlu0 %2720
      %2722 = vrot.lane.b32.xlu0 %v2645, 112
      %v2723 = vpop.permute.xlu0 %2722
      %2724 = vrot.lane.b32.xlu0 %v2646, 112
      %v2725 = vpop.permute.xlu0 %2724
      %2726 = vrot.lane.b32.xlu0 %v2647, 112
      %v2727 = vpop.permute.xlu0 %2726
      %2728 = vrot.lane.b32.xlu0 %v2648, 112
      %v2729 = vpop.permute.xlu0 %2728
      %2730 = vrot.lane.b32.xlu0 %v2649, 112
      %v2731 = vpop.permute.xlu0 %2730
      %2732 = vrot.lane.b32.xlu0 %v2650, 112
      %v2733 = vpop.permute.xlu0 %2732
      %2734 = vrot.lane.b32.xlu0 %v2651, 112
      %v2735 = vpop.permute.xlu0 %2734
      %2736 = vrot.lane.b32.xlu0 %v2652, 112
      %v2737 = vpop.permute.xlu0 %2736
      %2738 = vrot.lane.b32.xlu0 %v2653, 112
      %v2739 = vpop.permute.xlu0 %2738
      %2740 = vrot.lane.b32.xlu0 %v2654, 112
      %v2741 = vpop.permute.xlu0 %2740
      %2742 = vrot.lane.b32.xlu0 %v2655, 112
      %v2743 = vpop.permute.xlu0 %2742
      %2744 = vrot.lane.b32.xlu0 %v2656, 112
      %v2745 = vpop.permute.xlu0 %2744
      %2746 = vrot.lane.b32.xlu0 %v2657, 112
      %v2747 = vpop.permute.xlu0 %2746
      %2748 = vrot.lane.b32.xlu0 %v2658, 112
      %v2749 = vpop.permute.xlu0 %2748
      %2750 = vrot.lane.b32.xlu0 %v2659, 112
      %v2751 = vpop.permute.xlu0 %2750
      %2752 = vrot.lane.b32.xlu0 %v2660, 112
      %v2753 = vpop.permute.xlu0 %2752
      %2754 = vrot.lane.b32.xlu0 %v2661, 112
      %v2755 = vpop.permute.xlu0 %2754
      %2756 = vrot.lane.b32.xlu0 %v2662, 112
      %v2757 = vpop.permute.xlu0 %2756
      %2758 = vrot.lane.b32.xlu0 %v2663, 112
      %v2759 = vpop.permute.xlu0 %2758
      %v2792 = vadd.f32 %v2599, %v2697
      %v2793 = vadd.f32 %v2600, %v2699
      %v2794 = vadd.f32 %v2601, %v2701
      %v2795 = vadd.f32 %v2602, %v2703
      %v2796 = vadd.f32 %v2603, %v2705
      %v2797 = vadd.f32 %v2604, %v2707
      %v2798 = vadd.f32 %v2605, %v2709
      %v2799 = vadd.f32 %v2606, %v2711
      %v2800 = vadd.f32 %v2607, %v2713
      %v2801 = vadd.f32 %v2608, %v2715
      %v2802 = vadd.f32 %v2609, %v2717
      %v2803 = vadd.f32 %v2610, %v2719
      %v2804 = vadd.f32 %v2611, %v2721
      %v2805 = vadd.f32 %v2612, %v2723
      %v2806 = vadd.f32 %v2613, %v2725
      %v2807 = vadd.f32 %v2614, %v2727
      %v2808 = vadd.f32 %v2615, %v2729
      %v2809 = vadd.f32 %v2616, %v2731
      %v2810 = vadd.f32 %v2617, %v2733
      %v2811 = vadd.f32 %v2618, %v2735
      %v2812 = vadd.f32 %v2619, %v2737
      %v2813 = vadd.f32 %v2620, %v2739
      %v2814 = vadd.f32 %v2621, %v2741
      %v2815 = vadd.f32 %v2622, %v2743
      %v2816 = vadd.f32 %v2623, %v2745
      %v2817 = vadd.f32 %v2624, %v2747
      %v2818 = vadd.f32 %v2625, %v2749
      %v2819 = vadd.f32 %v2626, %v2751
      %v2820 = vadd.f32 %v2627, %v2753
      %v2821 = vadd.f32 %v2628, %v2755
      %v2822 = vadd.f32 %v2629, %v2757
      %v2823 = vadd.f32 %v2630, %v2759
      %v2824 = vld [vmem:[%s2631 + $0x1] sm:$0xff]
      %v2825 = vld [vmem:[%s2631 + $0x9] sm:$0xff]
      %v2826 = vld [vmem:[%s2631 + $0x19] sm:$0xff]
      %v2827 = vld [vmem:[%s2631 + $0x21] sm:$0xff]
      %v2828 = vld [vmem:[%s2631 + $0x31] sm:$0xff]
      %v2829 = vld [vmem:[%s2631 + $0x39] sm:$0xff]
      %v2830 = vld [vmem:[%s2631 + $0x49] sm:$0xff]
      %v2831 = vld [vmem:[%s2631 + $0x51] sm:$0xff]
      %v2832 = vld [vmem:[%s2631 + $0x61] sm:$0xff]
      %v2833 = vld [vmem:[%s2631 + $0x69] sm:$0xff]
      %v2834 = vld [vmem:[%s2631 + $0x79] sm:$0xff]
      %v2835 = vld [vmem:[%s2631 + $0x81] sm:$0xff]
      %v2836 = vld [vmem:[%s2631 + $0x91] sm:$0xff]
      %v2837 = vld [vmem:[%s2631 + $0x99] sm:$0xff]
      %v2838 = vld [vmem:[%s2631 + $0xa9] sm:$0xff]
      %v2839 = vld [vmem:[%s2631 + $0xb1] sm:$0xff]
      %v2840 = vld [vmem:[%s2631 + $0xc1] sm:$0xff]
      %v2841 = vld [vmem:[%s2631 + $0xc9] sm:$0xff]
      %v2842 = vld [vmem:[%s2631 + $0xd9] sm:$0xff]
      %v2843 = vld [vmem:[%s2631 + $0xe1] sm:$0xff]
      %v2844 = vld [vmem:[%s2631 + $0xf1] sm:$0xff]
      %v2845 = vld [vmem:[%s2631 + $0xf9] sm:$0xff]
      %v2846 = vld [vmem:[%s2631 + $0x109] sm:$0xff]
      %v2847 = vld [vmem:[%s2631 + $0x111] sm:$0xff]
      %v2848 = vld [vmem:[%s2631 + $0x121] sm:$0xff]
      %v2849 = vld [vmem:[%s2631 + $0x129] sm:$0xff]
      %v2850 = vld [vmem:[%s2631 + $0x139] sm:$0xff]
      %v2851 = vld [vmem:[%s2631 + $0x141] sm:$0xff]
      %v2852 = vld [vmem:[%s2631 + $0x151] sm:$0xff]
      %v2853 = vld [vmem:[%s2631 + $0x159] sm:$0xff]
      %v2854 = vld [vmem:[%s2631 + $0x169] sm:$0xff]
      %v2855 = vld [vmem:[%s2631 + $0x171] sm:$0xff]
      %2888 = vrot.lane.b32.xlu0 %v2824, 104
      %v2889 = vpop.permute.xlu0 %2888
      %2890 = vrot.lane.b32.xlu0 %v2825, 104
      %v2891 = vpop.permute.xlu0 %2890
      %2892 = vrot.lane.b32.xlu0 %v2826, 104
      %v2893 = vpop.permute.xlu0 %2892
      %2894 = vrot.lane.b32.xlu0 %v2827, 104
      %v2895 = vpop.permute.xlu0 %2894
      %2896 = vrot.lane.b32.xlu0 %v2828, 104
      %v2897 = vpop.permute.xlu0 %2896
      %2898 = vrot.lane.b32.xlu0 %v2829, 104
      %v2899 = vpop.permute.xlu0 %2898
      %2900 = vrot.lane.b32.xlu0 %v2830, 104
      %v2901 = vpop.permute.xlu0 %2900
      %2902 = vrot.lane.b32.xlu0 %v2831, 104
      %v2903 = vpop.permute.xlu0 %2902
      %2904 = vrot.lane.b32.xlu0 %v2832, 104
      %v2905 = vpop.permute.xlu0 %2904
      %2906 = vrot.lane.b32.xlu0 %v2833, 104
      %v2907 = vpop.permute.xlu0 %2906
      %2908 = vrot.lane.b32.xlu0 %v2834, 104
      %v2909 = vpop.permute.xlu0 %2908
      %2910 = vrot.lane.b32.xlu0 %v2835, 104
      %v2911 = vpop.permute.xlu0 %2910
      %2912 = vrot.lane.b32.xlu0 %v2836, 104
      %v2913 = vpop.permute.xlu0 %2912
      %2914 = vrot.lane.b32.xlu0 %v2837, 104
      %v2915 = vpop.permute.xlu0 %2914
      %2916 = vrot.lane.b32.xlu0 %v2838, 104
      %v2917 = vpop.permute.xlu0 %2916
      %2918 = vrot.lane.b32.xlu0 %v2839, 104
      %v2919 = vpop.permute.xlu0 %2918
      %2920 = vrot.lane.b32.xlu0 %v2840, 104
      %v2921 = vpop.permute.xlu0 %2920
      %2922 = vrot.lane.b32.xlu0 %v2841, 104
      %v2923 = vpop.permute.xlu0 %2922
      %2924 = vrot.lane.b32.xlu0 %v2842, 104
      %v2925 = vpop.permute.xlu0 %2924
      %2926 = vrot.lane.b32.xlu0 %v2843, 104
      %v2927 = vpop.permute.xlu0 %2926
      %2928 = vrot.lane.b32.xlu0 %v2844, 104
      %v2929 = vpop.permute.xlu0 %2928
      %2930 = vrot.lane.b32.xlu0 %v2845, 104
      %v2931 = vpop.permute.xlu0 %2930
      %2932 = vrot.lane.b32.xlu0 %v2846, 104
      %v2933 = vpop.permute.xlu0 %2932
      %2934 = vrot.lane.b32.xlu0 %v2847, 104
      %v2935 = vpop.permute.xlu0 %2934
      %2936 = vrot.lane.b32.xlu0 %v2848, 104
      %v2937 = vpop.permute.xlu0 %2936
      %2938 = vrot.lane.b32.xlu0 %v2849, 104
      %v2939 = vpop.permute.xlu0 %2938
      %2940 = vrot.lane.b32.xlu0 %v2850, 104
      %v2941 = vpop.permute.xlu0 %2940
      %2942 = vrot.lane.b32.xlu0 %v2851, 104
      %v2943 = vpop.permute.xlu0 %2942
      %2944 = vrot.lane.b32.xlu0 %v2852, 104
      %v2945 = vpop.permute.xlu0 %2944
      %2946 = vrot.lane.b32.xlu0 %v2853, 104
      %v2947 = vpop.permute.xlu0 %2946
      %2948 = vrot.lane.b32.xlu0 %v2854, 104
      %v2949 = vpop.permute.xlu0 %2948
      %2950 = vrot.lane.b32.xlu0 %v2855, 104
      %v2951 = vpop.permute.xlu0 %2950
      %v2984 = vadd.f32 %v2792, %v2889
      %v2985 = vadd.f32 %v2793, %v2891
      %v2986 = vadd.f32 %v2794, %v2893
      %v2987 = vadd.f32 %v2795, %v2895
      %v2988 = vadd.f32 %v2796, %v2897
      %v2989 = vadd.f32 %v2797, %v2899
      %v2990 = vadd.f32 %v2798, %v2901
      %v2991 = vadd.f32 %v2799, %v2903
      %v2992 = vadd.f32 %v2800, %v2905
      %v2993 = vadd.f32 %v2801, %v2907
      %v2994 = vadd.f32 %v2802, %v2909
      %v2995 = vadd.f32 %v2803, %v2911
      %v2996 = vadd.f32 %v2804, %v2913
      %v2997 = vadd.f32 %v2805, %v2915
      %v2998 = vadd.f32 %v2806, %v2917
      %v2999 = vadd.f32 %v2807, %v2919
      %v3000 = vadd.f32 %v2808, %v2921
      %v3001 = vadd.f32 %v2809, %v2923
      %v3002 = vadd.f32 %v2810, %v2925
      %v3003 = vadd.f32 %v2811, %v2927
      %v3004 = vadd.f32 %v2812, %v2929
      %v3005 = vadd.f32 %v2813, %v2931
      %v3006 = vadd.f32 %v2814, %v2933
      %v3007 = vadd.f32 %v2815, %v2935
      %v3008 = vadd.f32 %v2816, %v2937
      %v3009 = vadd.f32 %v2817, %v2939
      %v3010 = vadd.f32 %v2818, %v2941
      %v3011 = vadd.f32 %v2819, %v2943
      %v3012 = vadd.f32 %v2820, %v2945
      %v3013 = vadd.f32 %v2821, %v2947
      %v3014 = vadd.f32 %v2822, %v2949
      %v3015 = vadd.f32 %v2823, %v2951
      %3048 = vrot.lane.b32.xlu0 %v2984, 64
      %v3049 = vpop.permute.xlu0 %3048
      %3050 = vrot.lane.b32.xlu0 %v2985, 64
      %v3051 = vpop.permute.xlu0 %3050
      %3052 = vrot.lane.b32.xlu0 %v2986, 64
      %v3053 = vpop.permute.xlu0 %3052
      %3054 = vrot.lane.b32.xlu0 %v2987, 64
      %v3055 = vpop.permute.xlu0 %3054
      %3056 = vrot.lane.b32.xlu0 %v2988, 64
      %v3057 = vpop.permute.xlu0 %3056
      %3058 = vrot.lane.b32.xlu0 %v2989, 64
      %v3059 = vpop.permute.xlu0 %3058
      %3060 = vrot.lane.b32.xlu0 %v2990, 64
      %v3061 = vpop.permute.xlu0 %3060
      %3062 = vrot.lane.b32.xlu0 %v2991, 64
      %v3063 = vpop.permute.xlu0 %3062
      %3064 = vrot.lane.b32.xlu0 %v2992, 64
      %v3065 = vpop.permute.xlu0 %3064
      %3066 = vrot.lane.b32.xlu0 %v2993, 64
      %v3067 = vpop.permute.xlu0 %3066
      %3068 = vrot.lane.b32.xlu0 %v2994, 64
      %v3069 = vpop.permute.xlu0 %3068
      %3070 = vrot.lane.b32.xlu0 %v2995, 64
      %v3071 = vpop.permute.xlu0 %3070
      %3072 = vrot.lane.b32.xlu0 %v2996, 64
      %v3073 = vpop.permute.xlu0 %3072
      %3074 = vrot.lane.b32.xlu0 %v2997, 64
      %v3075 = vpop.permute.xlu0 %3074
      %3076 = vrot.lane.b32.xlu0 %v2998, 64
      %v3077 = vpop.permute.xlu0 %3076
      %3078 = vrot.lane.b32.xlu0 %v2999, 64
      %v3079 = vpop.permute.xlu0 %3078
      %3080 = vrot.lane.b32.xlu0 %v3000, 64
      %v3081 = vpop.permute.xlu0 %3080
      %3082 = vrot.lane.b32.xlu0 %v3001, 64
      %v3083 = vpop.permute.xlu0 %3082
      %3084 = vrot.lane.b32.xlu0 %v3002, 64
      %v3085 = vpop.permute.xlu0 %3084
      %3086 = vrot.lane.b32.xlu0 %v3003, 64
      %v3087 = vpop.permute.xlu0 %3086
      %3088 = vrot.lane.b32.xlu0 %v3004, 64
      %v3089 = vpop.permute.xlu0 %3088
      %3090 = vrot.lane.b32.xlu0 %v3005, 64
      %v3091 = vpop.permute.xlu0 %3090
      %3092 = vrot.lane.b32.xlu0 %v3006, 64
      %v3093 = vpop.permute.xlu0 %3092
      %3094 = vrot.lane.b32.xlu0 %v3007, 64
      %v3095 = vpop.permute.xlu0 %3094
      %3096 = vrot.lane.b32.xlu0 %v3008, 64
      %v3097 = vpop.permute.xlu0 %3096
      %3098 = vrot.lane.b32.xlu0 %v3009, 64
      %v3099 = vpop.permute.xlu0 %3098
      %3100 = vrot.lane.b32.xlu0 %v3010, 64
      %v3101 = vpop.permute.xlu0 %3100
      %3102 = vrot.lane.b32.xlu0 %v3011, 64
      %v3103 = vpop.permute.xlu0 %3102
      %3104 = vrot.lane.b32.xlu0 %v3012, 64
      %v3105 = vpop.permute.xlu0 %3104
      %3106 = vrot.lane.b32.xlu0 %v3013, 64
      %v3107 = vpop.permute.xlu0 %3106
      %3108 = vrot.lane.b32.xlu0 %v3014, 64
      %v3109 = vpop.permute.xlu0 %3108
      %3110 = vrot.lane.b32.xlu0 %v3015, 64
      %v3111 = vpop.permute.xlu0 %3110
      %s3144 = scalar_lea.vmem [#allocation3], 512
      %3145 = vst.msk [vmem:[%s3144] sm:$0xff] %vm1188, %v3049
      %3146 = vst.msk [vmem:[%s3144 + $0x8] sm:$0xff] %vm1188, %v3051
      %3147 = vst.msk [vmem:[%s3144 + $0x10] sm:$0xff] %vm1188, %v3053
      %3148 = vst.msk [vmem:[%s3144 + $0x18] sm:$0xff] %vm1188, %v3055
      %3149 = vst.msk [vmem:[%s3144 + $0x20] sm:$0xff] %vm1188, %v3057
      %3150 = vst.msk [vmem:[%s3144 + $0x28] sm:$0xff] %vm1188, %v3059
      %3151 = vst.msk [vmem:[%s3144 + $0x30] sm:$0xff] %vm1188, %v3061
      %3152 = vst.msk [vmem:[%s3144 + $0x38] sm:$0xff] %vm1188, %v3063
      %3153 = vst.msk [vmem:[%s3144 + $0x40] sm:$0xff] %vm1188, %v3065
      %3154 = vst.msk [vmem:[%s3144 + $0x48] sm:$0xff] %vm1188, %v3067
      %3155 = vst.msk [vmem:[%s3144 + $0x50] sm:$0xff] %vm1188, %v3069
      %3156 = vst.msk [vmem:[%s3144 + $0x58] sm:$0xff] %vm1188, %v3071
      %3157 = vst.msk [vmem:[%s3144 + $0x60] sm:$0xff] %vm1188, %v3073
      %3158 = vst.msk [vmem:[%s3144 + $0x68] sm:$0xff] %vm1188, %v3075
      %3159 = vst.msk [vmem:[%s3144 + $0x70] sm:$0xff] %vm1188, %v3077
      %3160 = vst.msk [vmem:[%s3144 + $0x78] sm:$0xff] %vm1188, %v3079
      %3161 = vst.msk [vmem:[%s3144 + $0x80] sm:$0xff] %vm1188, %v3081
      %3162 = vst.msk [vmem:[%s3144 + $0x88] sm:$0xff] %vm1188, %v3083
      %3163 = vst.msk [vmem:[%s3144 + $0x90] sm:$0xff] %vm1188, %v3085
      %3164 = vst.msk [vmem:[%s3144 + $0x98] sm:$0xff] %vm1188, %v3087
      %3165 = vst.msk [vmem:[%s3144 + $0xa0] sm:$0xff] %vm1188, %v3089
      %3166 = vst.msk [vmem:[%s3144 + $0xa8] sm:$0xff] %vm1188, %v3091
      %3167 = vst.msk [vmem:[%s3144 + $0xb0] sm:$0xff] %vm1188, %v3093
      %3168 = vst.msk [vmem:[%s3144 + $0xb8] sm:$0xff] %vm1188, %v3095
      %3169 = vst.msk [vmem:[%s3144 + $0xc0] sm:$0xff] %vm1188, %v3097
      %3170 = vst.msk [vmem:[%s3144 + $0xc8] sm:$0xff] %vm1188, %v3099
      %3171 = vst.msk [vmem:[%s3144 + $0xd0] sm:$0xff] %vm1188, %v3101
      %3172 = vst.msk [vmem:[%s3144 + $0xd8] sm:$0xff] %vm1188, %v3103
      %3173 = vst.msk [vmem:[%s3144 + $0xe0] sm:$0xff] %vm1188, %v3105
      %3174 = vst.msk [vmem:[%s3144 + $0xe8] sm:$0xff] %vm1188, %v3107
      %3175 = vst.msk [vmem:[%s3144 + $0xf0] sm:$0xff] %vm1188, %v3109
      %3176 = vst.msk [vmem:[%s3144 + $0xf8] sm:$0xff] %vm1188, %v3111
      %vm3177 = vcmask 589312
      %v3178 = vsel %vm3177, %v2984, 0.0
      %v3179 = vsel %vm3177, %v2985, 0.0
      %v3180 = vadd.f32 %v3178, %v3179
      %v3181 = vsel %vm3177, %v2986, 0.0
      %v3182 = vadd.f32 %v3180, %v3181
      %v3183 = vsel %vm3177, %v2987, 0.0
      %v3184 = vadd.f32 %v3182, %v3183
      %v3185 = vsel %vm3177, %v2988, 0.0
      %v3186 = vadd.f32 %v3184, %v3185
      %v3187 = vsel %vm3177, %v2989, 0.0
      %v3188 = vadd.f32 %v3186, %v3187
      %v3189 = vsel %vm3177, %v2990, 0.0
      %v3190 = vadd.f32 %v3188, %v3189
      %v3191 = vsel %vm3177, %v2991, 0.0
      %v3192 = vadd.f32 %v3190, %v3191
      %v3193 = vsel %vm3177, %v2992, 0.0
      %v3194 = vadd.f32 %v3192, %v3193
      %v3195 = vsel %vm3177, %v2993, 0.0
      %v3196 = vadd.f32 %v3194, %v3195
      %v3197 = vsel %vm3177, %v2994, 0.0
      %v3198 = vadd.f32 %v3196, %v3197
      %v3199 = vsel %vm3177, %v2995, 0.0
      %v3200 = vadd.f32 %v3198, %v3199
      %v3201 = vsel %vm3177, %v2996, 0.0
      %v3202 = vadd.f32 %v3200, %v3201
      %v3203 = vsel %vm3177, %v2997, 0.0
      %v3204 = vadd.f32 %v3202, %v3203
      %v3205 = vsel %vm3177, %v2998, 0.0
      %v3206 = vadd.f32 %v3204, %v3205
      %v3207 = vsel %vm3177, %v2999, 0.0
      %v3208 = vadd.f32 %v3206, %v3207
      %v3209 = vsel %vm3177, %v3000, 0.0
      %v3210 = vadd.f32 %v3208, %v3209
      %v3211 = vsel %vm3177, %v3001, 0.0
      %v3212 = vadd.f32 %v3210, %v3211
      %v3213 = vsel %vm3177, %v3002, 0.0
      %v3214 = vadd.f32 %v3212, %v3213
      %v3215 = vsel %vm3177, %v3003, 0.0
      %v3216 = vadd.f32 %v3214, %v3215
      %v3217 = vsel %vm3177, %v3004, 0.0
      %v3218 = vadd.f32 %v3216, %v3217
      %v3219 = vsel %vm3177, %v3005, 0.0
      %v3220 = vadd.f32 %v3218, %v3219
      %v3221 = vsel %vm3177, %v3006, 0.0
      %v3222 = vadd.f32 %v3220, %v3221
      %v3223 = vsel %vm3177, %v3007, 0.0
      %v3224 = vadd.f32 %v3222, %v3223
      %v3225 = vsel %vm3177, %v3008, 0.0
      %v3226 = vadd.f32 %v3224, %v3225
      %v3227 = vsel %vm3177, %v3009, 0.0
      %v3228 = vadd.f32 %v3226, %v3227
      %v3229 = vsel %vm3177, %v3010, 0.0
      %v3230 = vadd.f32 %v3228, %v3229
      %v3231 = vsel %vm3177, %v3011, 0.0
      %v3232 = vadd.f32 %v3230, %v3231
      %v3233 = vsel %vm3177, %v3012, 0.0
      %v3234 = vadd.f32 %v3232, %v3233
      %v3235 = vsel %vm3177, %v3013, 0.0
      %v3236 = vadd.f32 %v3234, %v3235
      %v3237 = vsel %vm3177, %v3014, 0.0
      %v3238 = vadd.f32 %v3236, %v3237
      %v3239 = vsel %vm3177, %v3015, 0.0
      %v3240 = vadd.f32 %v3238, %v3239
      %v3241 = vrot.slane %v3240, 4
      %v3242 = vadd.f32 %v3240, %v3241
      %v3243 = vrot.slane %v3242, 2
      %v3244 = vadd.f32 %v3242, %v3243
      %v3245 = vrot.slane %v3244, 1
      %v3246 = vadd.f32 %v3244, %v3245
      %3248 = vrot.lane.b32.xlu0 %v3246, 64
      %v3249 = vpop.permute.xlu0 %3248
      %v3251 = vadd.f32 %v2268, %v3249
      %v3252 = vmul.f32 %v2984, %v2984
      %v3253 = vmul.f32 %v2985, %v2985
      %v3254 = vmul.f32 %v2986, %v2986
      %v3255 = vmul.f32 %v2987, %v2987
      %v3256 = vmul.f32 %v2988, %v2988
      %v3257 = vmul.f32 %v2989, %v2989
      %v3258 = vmul.f32 %v2990, %v2990
      %v3259 = vmul.f32 %v2991, %v2991
      %v3260 = vmul.f32 %v2992, %v2992
      %v3261 = vmul.f32 %v2993, %v2993
      %v3262 = vmul.f32 %v2994, %v2994
      %v3263 = vmul.f32 %v2995, %v2995
      %v3264 = vmul.f32 %v2996, %v2996
      %v3265 = vmul.f32 %v2997, %v2997
      %v3266 = vmul.f32 %v2998, %v2998
      %v3267 = vmul.f32 %v2999, %v2999
      %v3268 = vmul.f32 %v3000, %v3000
      %v3269 = vmul.f32 %v3001, %v3001
      %v3270 = vmul.f32 %v3002, %v3002
      %v3271 = vmul.f32 %v3003, %v3003
      %v3272 = vmul.f32 %v3004, %v3004
      %v3273 = vmul.f32 %v3005, %v3005
      %v3274 = vmul.f32 %v3006, %v3006
      %v3275 = vmul.f32 %v3007, %v3007
      %v3276 = vmul.f32 %v3008, %v3008
      %v3277 = vmul.f32 %v3009, %v3009
      %v3278 = vmul.f32 %v3010, %v3010
      %v3279 = vmul.f32 %v3011, %v3011
      %v3280 = vmul.f32 %v3012, %v3012
      %v3281 = vmul.f32 %v3013, %v3013
      %v3282 = vmul.f32 %v3014, %v3014
      %v3283 = vmul.f32 %v3015, %v3015
      %v3284 = vsel %vm3177, %v3252, 0.0
      %v3285 = vsel %vm3177, %v3253, 0.0
      %v3286 = vadd.f32 %v3284, %v3285
      %v3287 = vsel %vm3177, %v3254, 0.0
      %v3288 = vadd.f32 %v3286, %v3287
      %v3289 = vsel %vm3177, %v3255, 0.0
      %v3290 = vadd.f32 %v3288, %v3289
      %v3291 = vsel %vm3177, %v3256, 0.0
      %v3292 = vadd.f32 %v3290, %v3291
      %v3293 = vsel %vm3177, %v3257, 0.0
      %v3294 = vadd.f32 %v3292, %v3293
      %v3295 = vsel %vm3177, %v3258, 0.0
      %v3296 = vadd.f32 %v3294, %v3295
      %v3297 = vsel %vm3177, %v3259, 0.0
      %v3298 = vadd.f32 %v3296, %v3297
      %v3299 = vsel %vm3177, %v3260, 0.0
      %v3300 = vadd.f32 %v3298, %v3299
      %v3301 = vsel %vm3177, %v3261, 0.0
      %v3302 = vadd.f32 %v3300, %v3301
      %v3303 = vsel %vm3177, %v3262, 0.0
      %v3304 = vadd.f32 %v3302, %v3303
      %v3305 = vsel %vm3177, %v3263, 0.0
      %v3306 = vadd.f32 %v3304, %v3305
      %v3307 = vsel %vm3177, %v3264, 0.0
      %v3308 = vadd.f32 %v3306, %v3307
      %v3309 = vsel %vm3177, %v3265, 0.0
      %v3310 = vadd.f32 %v3308, %v3309
      %v3311 = vsel %vm3177, %v3266, 0.0
      %v3312 = vadd.f32 %v3310, %v3311
      %v3313 = vsel %vm3177, %v3267, 0.0
      %v3314 = vadd.f32 %v3312, %v3313
      %v3315 = vsel %vm3177, %v3268, 0.0
      %v3316 = vadd.f32 %v3314, %v3315
      %v3317 = vsel %vm3177, %v3269, 0.0
      %v3318 = vadd.f32 %v3316, %v3317
      %v3319 = vsel %vm3177, %v3270, 0.0
      %v3320 = vadd.f32 %v3318, %v3319
      %v3321 = vsel %vm3177, %v3271, 0.0
      %v3322 = vadd.f32 %v3320, %v3321
      %v3323 = vsel %vm3177, %v3272, 0.0
      %v3324 = vadd.f32 %v3322, %v3323
      %v3325 = vsel %vm3177, %v3273, 0.0
      %v3326 = vadd.f32 %v3324, %v3325
      %v3327 = vsel %vm3177, %v3274, 0.0
      %v3328 = vadd.f32 %v3326, %v3327
      %v3329 = vsel %vm3177, %v3275, 0.0
      %v3330 = vadd.f32 %v3328, %v3329
      %v3331 = vsel %vm3177, %v3276, 0.0
      %v3332 = vadd.f32 %v3330, %v3331
      %v3333 = vsel %vm3177, %v3277, 0.0
      %v3334 = vadd.f32 %v3332, %v3333
      %v3335 = vsel %vm3177, %v3278, 0.0
      %v3336 = vadd.f32 %v3334, %v3335
      %v3337 = vsel %vm3177, %v3279, 0.0
      %v3338 = vadd.f32 %v3336, %v3337
      %v3339 = vsel %vm3177, %v3280, 0.0
      %v3340 = vadd.f32 %v3338, %v3339
      %v3341 = vsel %vm3177, %v3281, 0.0
      %v3342 = vadd.f32 %v3340, %v3341
      %v3343 = vsel %vm3177, %v3282, 0.0
      %v3344 = vadd.f32 %v3342, %v3343
      %v3345 = vsel %vm3177, %v3283, 0.0
      %v3346 = vadd.f32 %v3344, %v3345
      %v3347 = vrot.slane %v3346, 4
      %v3348 = vadd.f32 %v3346, %v3347
      %v3349 = vrot.slane %v3348, 2
      %v3350 = vadd.f32 %v3348, %v3349
      %v3351 = vrot.slane %v3350, 1
      %v3352 = vadd.f32 %v3350, %v3351
      %3354 = vrot.lane.b32.xlu0 %v3352, 64
      %v3355 = vpop.permute.xlu0 %3354
      %v3357 = vadd.f32 %v2374, %v3355
      %v3358 = vld [vmem:[%s515 + $0x1] sm:$0xff]
      %v3359 = vld [vmem:[%s515 + $0x9] sm:$0xff]
      %v3360 = vld [vmem:[%s515 + $0x19] sm:$0xff]
      %v3361 = vld [vmem:[%s515 + $0x21] sm:$0xff]
      %v3362 = vld [vmem:[%s515 + $0x31] sm:$0xff]
      %v3363 = vld [vmem:[%s515 + $0x39] sm:$0xff]
      %v3364 = vld [vmem:[%s515 + $0x49] sm:$0xff]
      %v3365 = vld [vmem:[%s515 + $0x51] sm:$0xff]
      %v3366 = vld [vmem:[%s515 + $0x61] sm:$0xff]
      %v3367 = vld [vmem:[%s515 + $0x69] sm:$0xff]
      %v3368 = vld [vmem:[%s515 + $0x79] sm:$0xff]
      %v3369 = vld [vmem:[%s515 + $0x81] sm:$0xff]
      %v3370 = vld [vmem:[%s515 + $0x91] sm:$0xff]
      %v3371 = vld [vmem:[%s515 + $0x99] sm:$0xff]
      %v3372 = vld [vmem:[%s515 + $0xa9] sm:$0xff]
      %v3373 = vld [vmem:[%s515 + $0xb1] sm:$0xff]
      %v3374 = vld [vmem:[%s515 + $0xc1] sm:$0xff]
      %v3375 = vld [vmem:[%s515 + $0xc9] sm:$0xff]
      %v3376 = vld [vmem:[%s515 + $0xd9] sm:$0xff]
      %v3377 = vld [vmem:[%s515 + $0xe1] sm:$0xff]
      %v3378 = vld [vmem:[%s515 + $0xf1] sm:$0xff]
      %v3379 = vld [vmem:[%s515 + $0xf9] sm:$0xff]
      %v3380 = vld [vmem:[%s515 + $0x109] sm:$0xff]
      %v3381 = vld [vmem:[%s515 + $0x111] sm:$0xff]
      %v3382 = vld [vmem:[%s515 + $0x121] sm:$0xff]
      %v3383 = vld [vmem:[%s515 + $0x129] sm:$0xff]
      %v3384 = vld [vmem:[%s515 + $0x139] sm:$0xff]
      %v3385 = vld [vmem:[%s515 + $0x141] sm:$0xff]
      %v3386 = vld [vmem:[%s515 + $0x151] sm:$0xff]
      %v3387 = vld [vmem:[%s515 + $0x159] sm:$0xff]
      %v3388 = vld [vmem:[%s515 + $0x169] sm:$0xff]
      %v3389 = vld [vmem:[%s515 + $0x171] sm:$0xff]
      %v3390 = vadd.f32 %v3358, 0.0
      %v3391 = vadd.f32 %v3359, 0.0
      %v3392 = vadd.f32 %v3360, 0.0
      %v3393 = vadd.f32 %v3361, 0.0
      %v3394 = vadd.f32 %v3362, 0.0
      %v3395 = vadd.f32 %v3363, 0.0
      %v3396 = vadd.f32 %v3364, 0.0
      %v3397 = vadd.f32 %v3365, 0.0
      %v3398 = vadd.f32 %v3366, 0.0
      %v3399 = vadd.f32 %v3367, 0.0
      %v3400 = vadd.f32 %v3368, 0.0
      %v3401 = vadd.f32 %v3369, 0.0
      %v3402 = vadd.f32 %v3370, 0.0
      %v3403 = vadd.f32 %v3371, 0.0
      %v3404 = vadd.f32 %v3372, 0.0
      %v3405 = vadd.f32 %v3373, 0.0
      %v3406 = vadd.f32 %v3374, 0.0
      %v3407 = vadd.f32 %v3375, 0.0
      %v3408 = vadd.f32 %v3376, 0.0
      %v3409 = vadd.f32 %v3377, 0.0
      %v3410 = vadd.f32 %v3378, 0.0
      %v3411 = vadd.f32 %v3379, 0.0
      %v3412 = vadd.f32 %v3380, 0.0
      %v3413 = vadd.f32 %v3381, 0.0
      %v3414 = vadd.f32 %v3382, 0.0
      %v3415 = vadd.f32 %v3383, 0.0
      %v3416 = vadd.f32 %v3384, 0.0
      %v3417 = vadd.f32 %v3385, 0.0
      %v3418 = vadd.f32 %v3386, 0.0
      %v3419 = vadd.f32 %v3387, 0.0
      %v3420 = vadd.f32 %v3388, 0.0
      %v3421 = vadd.f32 %v3389, 0.0
      %v3422 = vld [vmem:[%s515 + $0x2] sm:$0xff]
      %v3423 = vld [vmem:[%s515 + $0xa] sm:$0xff]
      %v3424 = vld [vmem:[%s515 + $0x1a] sm:$0xff]
      %v3425 = vld [vmem:[%s515 + $0x22] sm:$0xff]
      %v3426 = vld [vmem:[%s515 + $0x32] sm:$0xff]
      %v3427 = vld [vmem:[%s515 + $0x3a] sm:$0xff]
      %v3428 = vld [vmem:[%s515 + $0x4a] sm:$0xff]
      %v3429 = vld [vmem:[%s515 + $0x52] sm:$0xff]
      %v3430 = vld [vmem:[%s515 + $0x62] sm:$0xff]
      %v3431 = vld [vmem:[%s515 + $0x6a] sm:$0xff]
      %v3432 = vld [vmem:[%s515 + $0x7a] sm:$0xff]
      %v3433 = vld [vmem:[%s515 + $0x82] sm:$0xff]
      %v3434 = vld [vmem:[%s515 + $0x92] sm:$0xff]
      %v3435 = vld [vmem:[%s515 + $0x9a] sm:$0xff]
      %v3436 = vld [vmem:[%s515 + $0xaa] sm:$0xff]
      %v3437 = vld [vmem:[%s515 + $0xb2] sm:$0xff]
      %v3438 = vld [vmem:[%s515 + $0xc2] sm:$0xff]
      %v3439 = vld [vmem:[%s515 + $0xca] sm:$0xff]
      %v3440 = vld [vmem:[%s515 + $0xda] sm:$0xff]
      %v3441 = vld [vmem:[%s515 + $0xe2] sm:$0xff]
      %v3442 = vld [vmem:[%s515 + $0xf2] sm:$0xff]
      %v3443 = vld [vmem:[%s515 + $0xfa] sm:$0xff]
      %v3444 = vld [vmem:[%s515 + $0x10a] sm:$0xff]
      %v3445 = vld [vmem:[%s515 + $0x112] sm:$0xff]
      %v3446 = vld [vmem:[%s515 + $0x122] sm:$0xff]
      %v3447 = vld [vmem:[%s515 + $0x12a] sm:$0xff]
      %v3448 = vld [vmem:[%s515 + $0x13a] sm:$0xff]
      %v3449 = vld [vmem:[%s515 + $0x142] sm:$0xff]
      %v3450 = vld [vmem:[%s515 + $0x152] sm:$0xff]
      %v3451 = vld [vmem:[%s515 + $0x15a] sm:$0xff]
      %v3452 = vld [vmem:[%s515 + $0x16a] sm:$0xff]
      %v3453 = vld [vmem:[%s515 + $0x172] sm:$0xff]
      %3486 = vrot.lane.b32.xlu0 %v3422, 120
      %v3487 = vpop.permute.xlu0 %3486
      %3488 = vrot.lane.b32.xlu0 %v3423, 120
      %v3489 = vpop.permute.xlu0 %3488
      %3490 = vrot.lane.b32.xlu0 %v3424, 120
      %v3491 = vpop.permute.xlu0 %3490
      %3492 = vrot.lane.b32.xlu0 %v3425, 120
      %v3493 = vpop.permute.xlu0 %3492
      %3494 = vrot.lane.b32.xlu0 %v3426, 120
      %v3495 = vpop.permute.xlu0 %3494
      %3496 = vrot.lane.b32.xlu0 %v3427, 120
      %v3497 = vpop.permute.xlu0 %3496
      %3498 = vrot.lane.b32.xlu0 %v3428, 120
      %v3499 = vpop.permute.xlu0 %3498
      %3500 = vrot.lane.b32.xlu0 %v3429, 120
      %v3501 = vpop.permute.xlu0 %3500
      %3502 = vrot.lane.b32.xlu0 %v3430, 120
      %v3503 = vpop.permute.xlu0 %3502
      %3504 = vrot.lane.b32.xlu0 %v3431, 120
      %v3505 = vpop.permute.xlu0 %3504
      %3506 = vrot.lane.b32.xlu0 %v3432, 120
      %v3507 = vpop.permute.xlu0 %3506
      %3508 = vrot.lane.b32.xlu0 %v3433, 120
      %v3509 = vpop.permute.xlu0 %3508
      %3510 = vrot.lane.b32.xlu0 %v3434, 120
      %v3511 = vpop.permute.xlu0 %3510
      %3512 = vrot.lane.b32.xlu0 %v3435, 120
      %v3513 = vpop.permute.xlu0 %3512
      %3514 = vrot.lane.b32.xlu0 %v3436, 120
      %v3515 = vpop.permute.xlu0 %3514
      %3516 = vrot.lane.b32.xlu0 %v3437, 120
      %v3517 = vpop.permute.xlu0 %3516
      %3518 = vrot.lane.b32.xlu0 %v3438, 120
      %v3519 = vpop.permute.xlu0 %3518
      %3520 = vrot.lane.b32.xlu0 %v3439, 120
      %v3521 = vpop.permute.xlu0 %3520
      %3522 = vrot.lane.b32.xlu0 %v3440, 120
      %v3523 = vpop.permute.xlu0 %3522
      %3524 = vrot.lane.b32.xlu0 %v3441, 120
      %v3525 = vpop.permute.xlu0 %3524
      %3526 = vrot.lane.b32.xlu0 %v3442, 120
      %v3527 = vpop.permute.xlu0 %3526
      %3528 = vrot.lane.b32.xlu0 %v3443, 120
      %v3529 = vpop.permute.xlu0 %3528
      %3530 = vrot.lane.b32.xlu0 %v3444, 120
      %v3531 = vpop.permute.xlu0 %3530
      %3532 = vrot.lane.b32.xlu0 %v3445, 120
      %v3533 = vpop.permute.xlu0 %3532
      %3534 = vrot.lane.b32.xlu0 %v3446, 120
      %v3535 = vpop.permute.xlu0 %3534
      %3536 = vrot.lane.b32.xlu0 %v3447, 120
      %v3537 = vpop.permute.xlu0 %3536
      %3538 = vrot.lane.b32.xlu0 %v3448, 120
      %v3539 = vpop.permute.xlu0 %3538
      %3540 = vrot.lane.b32.xlu0 %v3449, 120
      %v3541 = vpop.permute.xlu0 %3540
      %3542 = vrot.lane.b32.xlu0 %v3450, 120
      %v3543 = vpop.permute.xlu0 %3542
      %3544 = vrot.lane.b32.xlu0 %v3451, 120
      %v3545 = vpop.permute.xlu0 %3544
      %3546 = vrot.lane.b32.xlu0 %v3452, 120
      %v3547 = vpop.permute.xlu0 %3546
      %3548 = vrot.lane.b32.xlu0 %v3453, 120
      %v3549 = vpop.permute.xlu0 %3548
      %v3582 = vadd.f32 %v3390, %v3487
      %v3583 = vadd.f32 %v3391, %v3489
      %v3584 = vadd.f32 %v3392, %v3491
      %v3585 = vadd.f32 %v3393, %v3493
      %v3586 = vadd.f32 %v3394, %v3495
      %v3587 = vadd.f32 %v3395, %v3497
      %v3588 = vadd.f32 %v3396, %v3499
      %v3589 = vadd.f32 %v3397, %v3501
      %v3590 = vadd.f32 %v3398, %v3503
      %v3591 = vadd.f32 %v3399, %v3505
      %v3592 = vadd.f32 %v3400, %v3507
      %v3593 = vadd.f32 %v3401, %v3509
      %v3594 = vadd.f32 %v3402, %v3511
      %v3595 = vadd.f32 %v3403, %v3513
      %v3596 = vadd.f32 %v3404, %v3515
      %v3597 = vadd.f32 %v3405, %v3517
      %v3598 = vadd.f32 %v3406, %v3519
      %v3599 = vadd.f32 %v3407, %v3521
      %v3600 = vadd.f32 %v3408, %v3523
      %v3601 = vadd.f32 %v3409, %v3525
      %v3602 = vadd.f32 %v3410, %v3527
      %v3603 = vadd.f32 %v3411, %v3529
      %v3604 = vadd.f32 %v3412, %v3531
      %v3605 = vadd.f32 %v3413, %v3533
      %v3606 = vadd.f32 %v3414, %v3535
      %v3607 = vadd.f32 %v3415, %v3537
      %v3608 = vadd.f32 %v3416, %v3539
      %v3609 = vadd.f32 %v3417, %v3541
      %v3610 = vadd.f32 %v3418, %v3543
      %v3611 = vadd.f32 %v3419, %v3545
      %v3612 = vadd.f32 %v3420, %v3547
      %v3613 = vadd.f32 %v3421, %v3549
      %v3614 = vld [vmem:[%s2631 + $0x1] sm:$0xff]
      %v3615 = vld [vmem:[%s2631 + $0x9] sm:$0xff]
      %v3616 = vld [vmem:[%s2631 + $0x19] sm:$0xff]
      %v3617 = vld [vmem:[%s2631 + $0x21] sm:$0xff]
      %v3618 = vld [vmem:[%s2631 + $0x31] sm:$0xff]
      %v3619 = vld [vmem:[%s2631 + $0x39] sm:$0xff]
      %v3620 = vld [vmem:[%s2631 + $0x49] sm:$0xff]
      %v3621 = vld [vmem:[%s2631 + $0x51] sm:$0xff]
      %v3622 = vld [vmem:[%s2631 + $0x61] sm:$0xff]
      %v3623 = vld [vmem:[%s2631 + $0x69] sm:$0xff]
      %v3624 = vld [vmem:[%s2631 + $0x79] sm:$0xff]
      %v3625 = vld [vmem:[%s2631 + $0x81] sm:$0xff]
      %v3626 = vld [vmem:[%s2631 + $0x91] sm:$0xff]
      %v3627 = vld [vmem:[%s2631 + $0x99] sm:$0xff]
      %v3628 = vld [vmem:[%s2631 + $0xa9] sm:$0xff]
      %v3629 = vld [vmem:[%s2631 + $0xb1] sm:$0xff]
      %v3630 = vld [vmem:[%s2631 + $0xc1] sm:$0xff]
      %v3631 = vld [vmem:[%s2631 + $0xc9] sm:$0xff]
      %v3632 = vld [vmem:[%s2631 + $0xd9] sm:$0xff]
      %v3633 = vld [vmem:[%s2631 + $0xe1] sm:$0xff]
      %v3634 = vld [vmem:[%s2631 + $0xf1] sm:$0xff]
      %v3635 = vld [vmem:[%s2631 + $0xf9] sm:$0xff]
      %v3636 = vld [vmem:[%s2631 + $0x109] sm:$0xff]
      %v3637 = vld [vmem:[%s2631 + $0x111] sm:$0xff]
      %v3638 = vld [vmem:[%s2631 + $0x121] sm:$0xff]
      %v3639 = vld [vmem:[%s2631 + $0x129] sm:$0xff]
      %v3640 = vld [vmem:[%s2631 + $0x139] sm:$0xff]
      %v3641 = vld [vmem:[%s2631 + $0x141] sm:$0xff]
      %v3642 = vld [vmem:[%s2631 + $0x151] sm:$0xff]
      %v3643 = vld [vmem:[%s2631 + $0x159] sm:$0xff]
      %v3644 = vld [vmem:[%s2631 + $0x169] sm:$0xff]
      %v3645 = vld [vmem:[%s2631 + $0x171] sm:$0xff]
      %3678 = vrot.lane.b32.xlu0 %v3614, 112
      %v3679 = vpop.permute.xlu0 %3678
      %3680 = vrot.lane.b32.xlu0 %v3615, 112
      %v3681 = vpop.permute.xlu0 %3680
      %3682 = vrot.lane.b32.xlu0 %v3616, 112
      %v3683 = vpop.permute.xlu0 %3682
      %3684 = vrot.lane.b32.xlu0 %v3617, 112
      %v3685 = vpop.permute.xlu0 %3684
      %3686 = vrot.lane.b32.xlu0 %v3618, 112
      %v3687 = vpop.permute.xlu0 %3686
      %3688 = vrot.lane.b32.xlu0 %v3619, 112
      %v3689 = vpop.permute.xlu0 %3688
      %3690 = vrot.lane.b32.xlu0 %v3620, 112
      %v3691 = vpop.permute.xlu0 %3690
      %3692 = vrot.lane.b32.xlu0 %v3621, 112
      %v3693 = vpop.permute.xlu0 %3692
      %3694 = vrot.lane.b32.xlu0 %v3622, 112
      %v3695 = vpop.permute.xlu0 %3694
      %3696 = vrot.lane.b32.xlu0 %v3623, 112
      %v3697 = vpop.permute.xlu0 %3696
      %3698 = vrot.lane.b32.xlu0 %v3624, 112
      %v3699 = vpop.permute.xlu0 %3698
      %3700 = vrot.lane.b32.xlu0 %v3625, 112
      %v3701 = vpop.permute.xlu0 %3700
      %3702 = vrot.lane.b32.xlu0 %v3626, 112
      %v3703 = vpop.permute.xlu0 %3702
      %3704 = vrot.lane.b32.xlu0 %v3627, 112
      %v3705 = vpop.permute.xlu0 %3704
      %3706 = vrot.lane.b32.xlu0 %v3628, 112
      %v3707 = vpop.permute.xlu0 %3706
      %3708 = vrot.lane.b32.xlu0 %v3629, 112
      %v3709 = vpop.permute.xlu0 %3708
      %3710 = vrot.lane.b32.xlu0 %v3630, 112
      %v3711 = vpop.permute.xlu0 %3710
      %3712 = vrot.lane.b32.xlu0 %v3631, 112
      %v3713 = vpop.permute.xlu0 %3712
      %3714 = vrot.lane.b32.xlu0 %v3632, 112
      %v3715 = vpop.permute.xlu0 %3714
      %3716 = vrot.lane.b32.xlu0 %v3633, 112
      %v3717 = vpop.permute.xlu0 %3716
      %3718 = vrot.lane.b32.xlu0 %v3634, 112
      %v3719 = vpop.permute.xlu0 %3718
      %3720 = vrot.lane.b32.xlu0 %v3635, 112
      %v3721 = vpop.permute.xlu0 %3720
      %3722 = vrot.lane.b32.xlu0 %v3636, 112
      %v3723 = vpop.permute.xlu0 %3722
      %3724 = vrot.lane.b32.xlu0 %v3637, 112
      %v3725 = vpop.permute.xlu0 %3724
      %3726 = vrot.lane.b32.xlu0 %v3638, 112
      %v3727 = vpop.permute.xlu0 %3726
      %3728 = vrot.lane.b32.xlu0 %v3639, 112
      %v3729 = vpop.permute.xlu0 %3728
      %3730 = vrot.lane.b32.xlu0 %v3640, 112
      %v3731 = vpop.permute.xlu0 %3730
      %3732 = vrot.lane.b32.xlu0 %v3641, 112
      %v3733 = vpop.permute.xlu0 %3732
      %3734 = vrot.lane.b32.xlu0 %v3642, 112
      %v3735 = vpop.permute.xlu0 %3734
      %3736 = vrot.lane.b32.xlu0 %v3643, 112
      %v3737 = vpop.permute.xlu0 %3736
      %3738 = vrot.lane.b32.xlu0 %v3644, 112
      %v3739 = vpop.permute.xlu0 %3738
      %3740 = vrot.lane.b32.xlu0 %v3645, 112
      %v3741 = vpop.permute.xlu0 %3740
      %v3774 = vadd.f32 %v3582, %v3679
      %v3775 = vadd.f32 %v3583, %v3681
      %v3776 = vadd.f32 %v3584, %v3683
      %v3777 = vadd.f32 %v3585, %v3685
      %v3778 = vadd.f32 %v3586, %v3687
      %v3779 = vadd.f32 %v3587, %v3689
      %v3780 = vadd.f32 %v3588, %v3691
      %v3781 = vadd.f32 %v3589, %v3693
      %v3782 = vadd.f32 %v3590, %v3695
      %v3783 = vadd.f32 %v3591, %v3697
      %v3784 = vadd.f32 %v3592, %v3699
      %v3785 = vadd.f32 %v3593, %v3701
      %v3786 = vadd.f32 %v3594, %v3703
      %v3787 = vadd.f32 %v3595, %v3705
      %v3788 = vadd.f32 %v3596, %v3707
      %v3789 = vadd.f32 %v3597, %v3709
      %v3790 = vadd.f32 %v3598, %v3711
      %v3791 = vadd.f32 %v3599, %v3713
      %v3792 = vadd.f32 %v3600, %v3715
      %v3793 = vadd.f32 %v3601, %v3717
      %v3794 = vadd.f32 %v3602, %v3719
      %v3795 = vadd.f32 %v3603, %v3721
      %v3796 = vadd.f32 %v3604, %v3723
      %v3797 = vadd.f32 %v3605, %v3725
      %v3798 = vadd.f32 %v3606, %v3727
      %v3799 = vadd.f32 %v3607, %v3729
      %v3800 = vadd.f32 %v3608, %v3731
      %v3801 = vadd.f32 %v3609, %v3733
      %v3802 = vadd.f32 %v3610, %v3735
      %v3803 = vadd.f32 %v3611, %v3737
      %v3804 = vadd.f32 %v3612, %v3739
      %v3805 = vadd.f32 %v3613, %v3741
      %v3806 = vld [vmem:[%s2631 + $0x2] sm:$0xff]
      %v3807 = vld [vmem:[%s2631 + $0xa] sm:$0xff]
      %v3808 = vld [vmem:[%s2631 + $0x1a] sm:$0xff]
      %v3809 = vld [vmem:[%s2631 + $0x22] sm:$0xff]
      %v3810 = vld [vmem:[%s2631 + $0x32] sm:$0xff]
      %v3811 = vld [vmem:[%s2631 + $0x3a] sm:$0xff]
      %v3812 = vld [vmem:[%s2631 + $0x4a] sm:$0xff]
      %v3813 = vld [vmem:[%s2631 + $0x52] sm:$0xff]
      %v3814 = vld [vmem:[%s2631 + $0x62] sm:$0xff]
      %v3815 = vld [vmem:[%s2631 + $0x6a] sm:$0xff]
      %v3816 = vld [vmem:[%s2631 + $0x7a] sm:$0xff]
      %v3817 = vld [vmem:[%s2631 + $0x82] sm:$0xff]
      %v3818 = vld [vmem:[%s2631 + $0x92] sm:$0xff]
      %v3819 = vld [vmem:[%s2631 + $0x9a] sm:$0xff]
      %v3820 = vld [vmem:[%s2631 + $0xaa] sm:$0xff]
      %v3821 = vld [vmem:[%s2631 + $0xb2] sm:$0xff]
      %v3822 = vld [vmem:[%s2631 + $0xc2] sm:$0xff]
      %v3823 = vld [vmem:[%s2631 + $0xca] sm:$0xff]
      %v3824 = vld [vmem:[%s2631 + $0xda] sm:$0xff]
      %v3825 = vld [vmem:[%s2631 + $0xe2] sm:$0xff]
      %v3826 = vld [vmem:[%s2631 + $0xf2] sm:$0xff]
      %v3827 = vld [vmem:[%s2631 + $0xfa] sm:$0xff]
      %v3828 = vld [vmem:[%s2631 + $0x10a] sm:$0xff]
      %v3829 = vld [vmem:[%s2631 + $0x112] sm:$0xff]
      %v3830 = vld [vmem:[%s2631 + $0x122] sm:$0xff]
      %v3831 = vld [vmem:[%s2631 + $0x12a] sm:$0xff]
      %v3832 = vld [vmem:[%s2631 + $0x13a] sm:$0xff]
      %v3833 = vld [vmem:[%s2631 + $0x142] sm:$0xff]
      %v3834 = vld [vmem:[%s2631 + $0x152] sm:$0xff]
      %v3835 = vld [vmem:[%s2631 + $0x15a] sm:$0xff]
      %v3836 = vld [vmem:[%s2631 + $0x16a] sm:$0xff]
      %v3837 = vld [vmem:[%s2631 + $0x172] sm:$0xff]
      %3870 = vrot.lane.b32.xlu0 %v3806, 104
      %v3871 = vpop.permute.xlu0 %3870
      %3872 = vrot.lane.b32.xlu0 %v3807, 104
      %v3873 = vpop.permute.xlu0 %3872
      %3874 = vrot.lane.b32.xlu0 %v3808, 104
      %v3875 = vpop.permute.xlu0 %3874
      %3876 = vrot.lane.b32.xlu0 %v3809, 104
      %v3877 = vpop.permute.xlu0 %3876
      %3878 = vrot.lane.b32.xlu0 %v3810, 104
      %v3879 = vpop.permute.xlu0 %3878
      %3880 = vrot.lane.b32.xlu0 %v3811, 104
      %v3881 = vpop.permute.xlu0 %3880
      %3882 = vrot.lane.b32.xlu0 %v3812, 104
      %v3883 = vpop.permute.xlu0 %3882
      %3884 = vrot.lane.b32.xlu0 %v3813, 104
      %v3885 = vpop.permute.xlu0 %3884
      %3886 = vrot.lane.b32.xlu0 %v3814, 104
      %v3887 = vpop.permute.xlu0 %3886
      %3888 = vrot.lane.b32.xlu0 %v3815, 104
      %v3889 = vpop.permute.xlu0 %3888
      %3890 = vrot.lane.b32.xlu0 %v3816, 104
      %v3891 = vpop.permute.xlu0 %3890
      %3892 = vrot.lane.b32.xlu0 %v3817, 104
      %v3893 = vpop.permute.xlu0 %3892
      %3894 = vrot.lane.b32.xlu0 %v3818, 104
      %v3895 = vpop.permute.xlu0 %3894
      %3896 = vrot.lane.b32.xlu0 %v3819, 104
      %v3897 = vpop.permute.xlu0 %3896
      %3898 = vrot.lane.b32.xlu0 %v3820, 104
      %v3899 = vpop.permute.xlu0 %3898
      %3900 = vrot.lane.b32.xlu0 %v3821, 104
      %v3901 = vpop.permute.xlu0 %3900
      %3902 = vrot.lane.b32.xlu0 %v3822, 104
      %v3903 = vpop.permute.xlu0 %3902
      %3904 = vrot.lane.b32.xlu0 %v3823, 104
      %v3905 = vpop.permute.xlu0 %3904
      %3906 = vrot.lane.b32.xlu0 %v3824, 104
      %v3907 = vpop.permute.xlu0 %3906
      %3908 = vrot.lane.b32.xlu0 %v3825, 104
      %v3909 = vpop.permute.xlu0 %3908
      %3910 = vrot.lane.b32.xlu0 %v3826, 104
      %v3911 = vpop.permute.xlu0 %3910
      %3912 = vrot.lane.b32.xlu0 %v3827, 104
      %v3913 = vpop.permute.xlu0 %3912
      %3914 = vrot.lane.b32.xlu0 %v3828, 104
      %v3915 = vpop.permute.xlu0 %3914
      %3916 = vrot.lane.b32.xlu0 %v3829, 104
      %v3917 = vpop.permute.xlu0 %3916
      %3918 = vrot.lane.b32.xlu0 %v3830, 104
      %v3919 = vpop.permute.xlu0 %3918
      %3920 = vrot.lane.b32.xlu0 %v3831, 104
      %v3921 = vpop.permute.xlu0 %3920
      %3922 = vrot.lane.b32.xlu0 %v3832, 104
      %v3923 = vpop.permute.xlu0 %3922
      %3924 = vrot.lane.b32.xlu0 %v3833, 104
      %v3925 = vpop.permute.xlu0 %3924
      %3926 = vrot.lane.b32.xlu0 %v3834, 104
      %v3927 = vpop.permute.xlu0 %3926
      %3928 = vrot.lane.b32.xlu0 %v3835, 104
      %v3929 = vpop.permute.xlu0 %3928
      %3930 = vrot.lane.b32.xlu0 %v3836, 104
      %v3931 = vpop.permute.xlu0 %3930
      %3932 = vrot.lane.b32.xlu0 %v3837, 104
      %v3933 = vpop.permute.xlu0 %3932
      %v3966 = vadd.f32 %v3774, %v3871
      %v3967 = vadd.f32 %v3775, %v3873
      %v3968 = vadd.f32 %v3776, %v3875
      %v3969 = vadd.f32 %v3777, %v3877
      %v3970 = vadd.f32 %v3778, %v3879
      %v3971 = vadd.f32 %v3779, %v3881
      %v3972 = vadd.f32 %v3780, %v3883
      %v3973 = vadd.f32 %v3781, %v3885
      %v3974 = vadd.f32 %v3782, %v3887
      %v3975 = vadd.f32 %v3783, %v3889
      %v3976 = vadd.f32 %v3784, %v3891
      %v3977 = vadd.f32 %v3785, %v3893
      %v3978 = vadd.f32 %v3786, %v3895
      %v3979 = vadd.f32 %v3787, %v3897
      %v3980 = vadd.f32 %v3788, %v3899
      %v3981 = vadd.f32 %v3789, %v3901
      %v3982 = vadd.f32 %v3790, %v3903
      %v3983 = vadd.f32 %v3791, %v3905
      %v3984 = vadd.f32 %v3792, %v3907
      %v3985 = vadd.f32 %v3793, %v3909
      %v3986 = vadd.f32 %v3794, %v3911
      %v3987 = vadd.f32 %v3795, %v3913
      %v3988 = vadd.f32 %v3796, %v3915
      %v3989 = vadd.f32 %v3797, %v3917
      %v3990 = vadd.f32 %v3798, %v3919
      %v3991 = vadd.f32 %v3799, %v3921
      %v3992 = vadd.f32 %v3800, %v3923
      %v3993 = vadd.f32 %v3801, %v3925
      %v3994 = vadd.f32 %v3802, %v3927
      %v3995 = vadd.f32 %v3803, %v3929
      %v3996 = vadd.f32 %v3804, %v3931
      %v3997 = vadd.f32 %v3805, %v3933
      %4030 = vrot.lane.b32.xlu0 %v3966, 32
      %v4031 = vpop.permute.xlu0 %4030
      %4032 = vrot.lane.b32.xlu0 %v3967, 32
      %v4033 = vpop.permute.xlu0 %4032
      %4034 = vrot.lane.b32.xlu0 %v3968, 32
      %v4035 = vpop.permute.xlu0 %4034
      %4036 = vrot.lane.b32.xlu0 %v3969, 32
      %v4037 = vpop.permute.xlu0 %4036
      %4038 = vrot.lane.b32.xlu0 %v3970, 32
      %v4039 = vpop.permute.xlu0 %4038
      %4040 = vrot.lane.b32.xlu0 %v3971, 32
      %v4041 = vpop.permute.xlu0 %4040
      %4042 = vrot.lane.b32.xlu0 %v3972, 32
      %v4043 = vpop.permute.xlu0 %4042
      %4044 = vrot.lane.b32.xlu0 %v3973, 32
      %v4045 = vpop.permute.xlu0 %4044
      %4046 = vrot.lane.b32.xlu0 %v3974, 32
      %v4047 = vpop.permute.xlu0 %4046
      %4048 = vrot.lane.b32.xlu0 %v3975, 32
      %v4049 = vpop.permute.xlu0 %4048
      %4050 = vrot.lane.b32.xlu0 %v3976, 32
      %v4051 = vpop.permute.xlu0 %4050
      %4052 = vrot.lane.b32.xlu0 %v3977, 32
      %v4053 = vpop.permute.xlu0 %4052
      %4054 = vrot.lane.b32.xlu0 %v3978, 32
      %v4055 = vpop.permute.xlu0 %4054
      %4056 = vrot.lane.b32.xlu0 %v3979, 32
      %v4057 = vpop.permute.xlu0 %4056
      %4058 = vrot.lane.b32.xlu0 %v3980, 32
      %v4059 = vpop.permute.xlu0 %4058
      %4060 = vrot.lane.b32.xlu0 %v3981, 32
      %v4061 = vpop.permute.xlu0 %4060
      %4062 = vrot.lane.b32.xlu0 %v3982, 32
      %v4063 = vpop.permute.xlu0 %4062
      %4064 = vrot.lane.b32.xlu0 %v3983, 32
      %v4065 = vpop.permute.xlu0 %4064
      %4066 = vrot.lane.b32.xlu0 %v3984, 32
      %v4067 = vpop.permute.xlu0 %4066
      %4068 = vrot.lane.b32.xlu0 %v3985, 32
      %v4069 = vpop.permute.xlu0 %4068
      %4070 = vrot.lane.b32.xlu0 %v3986, 32
      %v4071 = vpop.permute.xlu0 %4070
      %4072 = vrot.lane.b32.xlu0 %v3987, 32
      %v4073 = vpop.permute.xlu0 %4072
      %4074 = vrot.lane.b32.xlu0 %v3988, 32
      %v4075 = vpop.permute.xlu0 %4074
      %4076 = vrot.lane.b32.xlu0 %v3989, 32
      %v4077 = vpop.permute.xlu0 %4076
      %4078 = vrot.lane.b32.xlu0 %v3990, 32
      %v4079 = vpop.permute.xlu0 %4078
      %4080 = vrot.lane.b32.xlu0 %v3991, 32
      %v4081 = vpop.permute.xlu0 %4080
      %4082 = vrot.lane.b32.xlu0 %v3992, 32
      %v4083 = vpop.permute.xlu0 %4082
      %4084 = vrot.lane.b32.xlu0 %v3993, 32
      %v4085 = vpop.permute.xlu0 %4084
      %4086 = vrot.lane.b32.xlu0 %v3994, 32
      %v4087 = vpop.permute.xlu0 %4086
      %4088 = vrot.lane.b32.xlu0 %v3995, 32
      %v4089 = vpop.permute.xlu0 %4088
      %4090 = vrot.lane.b32.xlu0 %v3996, 32
      %v4091 = vpop.permute.xlu0 %4090
      %4092 = vrot.lane.b32.xlu0 %v3997, 32
      %v4093 = vpop.permute.xlu0 %4092
      %s4126 = scalar_lea.vmem [#allocation3], 768
      %4127 = vst.msk [vmem:[%s4126] sm:$0xff] %vm1188, %v4031
      %4128 = vst.msk [vmem:[%s4126 + $0x8] sm:$0xff] %vm1188, %v4033
      %4129 = vst.msk [vmem:[%s4126 + $0x10] sm:$0xff] %vm1188, %v4035
      %4130 = vst.msk [vmem:[%s4126 + $0x18] sm:$0xff] %vm1188, %v4037
      %4131 = vst.msk [vmem:[%s4126 + $0x20] sm:$0xff] %vm1188, %v4039
      %4132 = vst.msk [vmem:[%s4126 + $0x28] sm:$0xff] %vm1188, %v4041
      %4133 = vst.msk [vmem:[%s4126 + $0x30] sm:$0xff] %vm1188, %v4043
      %4134 = vst.msk [vmem:[%s4126 + $0x38] sm:$0xff] %vm1188, %v4045
      %4135 = vst.msk [vmem:[%s4126 + $0x40] sm:$0xff] %vm1188, %v4047
      %4136 = vst.msk [vmem:[%s4126 + $0x48] sm:$0xff] %vm1188, %v4049
      %4137 = vst.msk [vmem:[%s4126 + $0x50] sm:$0xff] %vm1188, %v4051
      %4138 = vst.msk [vmem:[%s4126 + $0x58] sm:$0xff] %vm1188, %v4053
      %4139 = vst.msk [vmem:[%s4126 + $0x60] sm:$0xff] %vm1188, %v4055
      %4140 = vst.msk [vmem:[%s4126 + $0x68] sm:$0xff] %vm1188, %v4057
      %4141 = vst.msk [vmem:[%s4126 + $0x70] sm:$0xff] %vm1188, %v4059
      %4142 = vst.msk [vmem:[%s4126 + $0x78] sm:$0xff] %vm1188, %v4061
      %4143 = vst.msk [vmem:[%s4126 + $0x80] sm:$0xff] %vm1188, %v4063
      %4144 = vst.msk [vmem:[%s4126 + $0x88] sm:$0xff] %vm1188, %v4065
      %4145 = vst.msk [vmem:[%s4126 + $0x90] sm:$0xff] %vm1188, %v4067
      %4146 = vst.msk [vmem:[%s4126 + $0x98] sm:$0xff] %vm1188, %v4069
      %4147 = vst.msk [vmem:[%s4126 + $0xa0] sm:$0xff] %vm1188, %v4071
      %4148 = vst.msk [vmem:[%s4126 + $0xa8] sm:$0xff] %vm1188, %v4073
      %4149 = vst.msk [vmem:[%s4126 + $0xb0] sm:$0xff] %vm1188, %v4075
      %4150 = vst.msk [vmem:[%s4126 + $0xb8] sm:$0xff] %vm1188, %v4077
      %4151 = vst.msk [vmem:[%s4126 + $0xc0] sm:$0xff] %vm1188, %v4079
      %4152 = vst.msk [vmem:[%s4126 + $0xc8] sm:$0xff] %vm1188, %v4081
      %4153 = vst.msk [vmem:[%s4126 + $0xd0] sm:$0xff] %vm1188, %v4083
      %4154 = vst.msk [vmem:[%s4126 + $0xd8] sm:$0xff] %vm1188, %v4085
      %4155 = vst.msk [vmem:[%s4126 + $0xe0] sm:$0xff] %vm1188, %v4087
      %4156 = vst.msk [vmem:[%s4126 + $0xe8] sm:$0xff] %vm1188, %v4089
      %4157 = vst.msk [vmem:[%s4126 + $0xf0] sm:$0xff] %vm1188, %v4091
      %4158 = vst.msk [vmem:[%s4126 + $0xf8] sm:$0xff] %vm1188, %v4093
      %vm4159 = vcmask 851712
      %v4160 = vsel %vm4159, %v3966, 0.0
      %v4161 = vsel %vm4159, %v3967, 0.0
      %v4162 = vadd.f32 %v4160, %v4161
      %v4163 = vsel %vm4159, %v3968, 0.0
      %v4164 = vadd.f32 %v4162, %v4163
      %v4165 = vsel %vm4159, %v3969, 0.0
      %v4166 = vadd.f32 %v4164, %v4165
      %v4167 = vsel %vm4159, %v3970, 0.0
      %v4168 = vadd.f32 %v4166, %v4167
      %v4169 = vsel %vm4159, %v3971, 0.0
      %v4170 = vadd.f32 %v4168, %v4169
      %v4171 = vsel %vm4159, %v3972, 0.0
      %v4172 = vadd.f32 %v4170, %v4171
      %v4173 = vsel %vm4159, %v3973, 0.0
      %v4174 = vadd.f32 %v4172, %v4173
      %v4175 = vsel %vm4159, %v3974, 0.0
      %v4176 = vadd.f32 %v4174, %v4175
      %v4177 = vsel %vm4159, %v3975, 0.0
      %v4178 = vadd.f32 %v4176, %v4177
      %v4179 = vsel %vm4159, %v3976, 0.0
      %v4180 = vadd.f32 %v4178, %v4179
      %v4181 = vsel %vm4159, %v3977, 0.0
      %v4182 = vadd.f32 %v4180, %v4181
      %v4183 = vsel %vm4159, %v3978, 0.0
      %v4184 = vadd.f32 %v4182, %v4183
      %v4185 = vsel %vm4159, %v3979, 0.0
      %v4186 = vadd.f32 %v4184, %v4185
      %v4187 = vsel %vm4159, %v3980, 0.0
      %v4188 = vadd.f32 %v4186, %v4187
      %v4189 = vsel %vm4159, %v3981, 0.0
      %v4190 = vadd.f32 %v4188, %v4189
      %v4191 = vsel %vm4159, %v3982, 0.0
      %v4192 = vadd.f32 %v4190, %v4191
      %v4193 = vsel %vm4159, %v3983, 0.0
      %v4194 = vadd.f32 %v4192, %v4193
      %v4195 = vsel %vm4159, %v3984, 0.0
      %v4196 = vadd.f32 %v4194, %v4195
      %v4197 = vsel %vm4159, %v3985, 0.0
      %v4198 = vadd.f32 %v4196, %v4197
      %v4199 = vsel %vm4159, %v3986, 0.0
      %v4200 = vadd.f32 %v4198, %v4199
      %v4201 = vsel %vm4159, %v3987, 0.0
      %v4202 = vadd.f32 %v4200, %v4201
      %v4203 = vsel %vm4159, %v3988, 0.0
      %v4204 = vadd.f32 %v4202, %v4203
      %v4205 = vsel %vm4159, %v3989, 0.0
      %v4206 = vadd.f32 %v4204, %v4205
      %v4207 = vsel %vm4159, %v3990, 0.0
      %v4208 = vadd.f32 %v4206, %v4207
      %v4209 = vsel %vm4159, %v3991, 0.0
      %v4210 = vadd.f32 %v4208, %v4209
      %v4211 = vsel %vm4159, %v3992, 0.0
      %v4212 = vadd.f32 %v4210, %v4211
      %v4213 = vsel %vm4159, %v3993, 0.0
      %v4214 = vadd.f32 %v4212, %v4213
      %v4215 = vsel %vm4159, %v3994, 0.0
      %v4216 = vadd.f32 %v4214, %v4215
      %v4217 = vsel %vm4159, %v3995, 0.0
      %v4218 = vadd.f32 %v4216, %v4217
      %v4219 = vsel %vm4159, %v3996, 0.0
      %v4220 = vadd.f32 %v4218, %v4219
      %v4221 = vsel %vm4159, %v3997, 0.0
      %v4222 = vadd.f32 %v4220, %v4221
      %v4223 = vrot.slane %v4222, 4
      %v4224 = vadd.f32 %v4222, %v4223
      %v4225 = vrot.slane %v4224, 2
      %v4226 = vadd.f32 %v4224, %v4225
      %v4227 = vrot.slane %v4226, 1
      %v4228 = vadd.f32 %v4226, %v4227
      %4230 = vrot.lane.b32.xlu0 %v4228, 32
      %v4231 = vpop.permute.xlu0 %4230
      %v4233 = vadd.f32 %v3251, %v4231
      %v4234 = vmul.f32 %v3966, %v3966
      %v4235 = vmul.f32 %v3967, %v3967
      %v4236 = vmul.f32 %v3968, %v3968
      %v4237 = vmul.f32 %v3969, %v3969
      %v4238 = vmul.f32 %v3970, %v3970
      %v4239 = vmul.f32 %v3971, %v3971
      %v4240 = vmul.f32 %v3972, %v3972
      %v4241 = vmul.f32 %v3973, %v3973
      %v4242 = vmul.f32 %v3974, %v3974
      %v4243 = vmul.f32 %v3975, %v3975
      %v4244 = vmul.f32 %v3976, %v3976
      %v4245 = vmul.f32 %v3977, %v3977
      %v4246 = vmul.f32 %v3978, %v3978
      %v4247 = vmul.f32 %v3979, %v3979
      %v4248 = vmul.f32 %v3980, %v3980
      %v4249 = vmul.f32 %v3981, %v3981
      %v4250 = vmul.f32 %v3982, %v3982
      %v4251 = vmul.f32 %v3983, %v3983
      %v4252 = vmul.f32 %v3984, %v3984
      %v4253 = vmul.f32 %v3985, %v3985
      %v4254 = vmul.f32 %v3986, %v3986
      %v4255 = vmul.f32 %v3987, %v3987
      %v4256 = vmul.f32 %v3988, %v3988
      %v4257 = vmul.f32 %v3989, %v3989
      %v4258 = vmul.f32 %v3990, %v3990
      %v4259 = vmul.f32 %v3991, %v3991
      %v4260 = vmul.f32 %v3992, %v3992
      %v4261 = vmul.f32 %v3993, %v3993
      %v4262 = vmul.f32 %v3994, %v3994
      %v4263 = vmul.f32 %v3995, %v3995
      %v4264 = vmul.f32 %v3996, %v3996
      %v4265 = vmul.f32 %v3997, %v3997
      %v4266 = vsel %vm4159, %v4234, 0.0
      %v4267 = vsel %vm4159, %v4235, 0.0
      %v4268 = vadd.f32 %v4266, %v4267
      %v4269 = vsel %vm4159, %v4236, 0.0
      %v4270 = vadd.f32 %v4268, %v4269
      %v4271 = vsel %vm4159, %v4237, 0.0
      %v4272 = vadd.f32 %v4270, %v4271
      %v4273 = vsel %vm4159, %v4238, 0.0
      %v4274 = vadd.f32 %v4272, %v4273
      %v4275 = vsel %vm4159, %v4239, 0.0
      %v4276 = vadd.f32 %v4274, %v4275
      %v4277 = vsel %vm4159, %v4240, 0.0
      %v4278 = vadd.f32 %v4276, %v4277
      %v4279 = vsel %vm4159, %v4241, 0.0
      %v4280 = vadd.f32 %v4278, %v4279
      %v4281 = vsel %vm4159, %v4242, 0.0
      %v4282 = vadd.f32 %v4280, %v4281
      %v4283 = vsel %vm4159, %v4243, 0.0
      %v4284 = vadd.f32 %v4282, %v4283
      %v4285 = vsel %vm4159, %v4244, 0.0
      %v4286 = vadd.f32 %v4284, %v4285
      %v4287 = vsel %vm4159, %v4245, 0.0
      %v4288 = vadd.f32 %v4286, %v4287
      %v4289 = vsel %vm4159, %v4246, 0.0
      %v4290 = vadd.f32 %v4288, %v4289
      %v4291 = vsel %vm4159, %v4247, 0.0
      %v4292 = vadd.f32 %v4290, %v4291
      %v4293 = vsel %vm4159, %v4248, 0.0
      %v4294 = vadd.f32 %v4292, %v4293
      %v4295 = vsel %vm4159, %v4249, 0.0
      %v4296 = vadd.f32 %v4294, %v4295
      %v4297 = vsel %vm4159, %v4250, 0.0
      %v4298 = vadd.f32 %v4296, %v4297
      %v4299 = vsel %vm4159, %v4251, 0.0
      %v4300 = vadd.f32 %v4298, %v4299
      %v4301 = vsel %vm4159, %v4252, 0.0
      %v4302 = vadd.f32 %v4300, %v4301
      %v4303 = vsel %vm4159, %v4253, 0.0
      %v4304 = vadd.f32 %v4302, %v4303
      %v4305 = vsel %vm4159, %v4254, 0.0
      %v4306 = vadd.f32 %v4304, %v4305
      %v4307 = vsel %vm4159, %v4255, 0.0
      %v4308 = vadd.f32 %v4306, %v4307
      %v4309 = vsel %vm4159, %v4256, 0.0
      %v4310 = vadd.f32 %v4308, %v4309
      %v4311 = vsel %vm4159, %v4257, 0.0
      %v4312 = vadd.f32 %v4310, %v4311
      %v4313 = vsel %vm4159, %v4258, 0.0
      %v4314 = vadd.f32 %v4312, %v4313
      %v4315 = vsel %vm4159, %v4259, 0.0
      %v4316 = vadd.f32 %v4314, %v4315
      %v4317 = vsel %vm4159, %v4260, 0.0
      %v4318 = vadd.f32 %v4316, %v4317
      %v4319 = vsel %vm4159, %v4261, 0.0
      %v4320 = vadd.f32 %v4318, %v4319
      %v4321 = vsel %vm4159, %v4262, 0.0
      %v4322 = vadd.f32 %v4320, %v4321
      %v4323 = vsel %vm4159, %v4263, 0.0
      %v4324 = vadd.f32 %v4322, %v4323
      %v4325 = vsel %vm4159, %v4264, 0.0
      %v4326 = vadd.f32 %v4324, %v4325
      %v4327 = vsel %vm4159, %v4265, 0.0
      %v4328 = vadd.f32 %v4326, %v4327
      %v4329 = vrot.slane %v4328, 4
      %v4330 = vadd.f32 %v4328, %v4329
      %v4331 = vrot.slane %v4330, 2
      %v4332 = vadd.f32 %v4330, %v4331
      %v4333 = vrot.slane %v4332, 1
      %v4334 = vadd.f32 %v4332, %v4333
      %4336 = vrot.lane.b32.xlu0 %v4334, 32
      %v4337 = vpop.permute.xlu0 %4336
      %v4339 = vadd.f32 %v3357, %v4337
      %v4340 = vmul.f32 %v4233, 0.0009765625
      %v4341 = vmul.f32 %v4339, 0.0009765625
      %v4342 = vmul.f32 %v4340, %v4340
      %v4343 = vsub.f32 %v4341, %v4342
      %v4344 = vmax.f32 %v4343, 0.0
      %v4345 = vadd.f32 %v4344, 1e-05
      %v4346 = vrsqrt.pop %v4345
      %v4347 = vld [vmem:[#allocation3] sm:$0xff]
      %v4348 = vld [vmem:[#allocation3 + $0x8] sm:$0xff]
      %v4349 = vld [vmem:[#allocation3 + $0x10] sm:$0xff]
      %v4350 = vld [vmem:[#allocation3 + $0x18] sm:$0xff]
      %v4351 = vld [vmem:[#allocation3 + $0x20] sm:$0xff]
      %v4352 = vld [vmem:[#allocation3 + $0x28] sm:$0xff]
      %v4353 = vld [vmem:[#allocation3 + $0x30] sm:$0xff]
      %v4354 = vld [vmem:[#allocation3 + $0x38] sm:$0xff]
      %v4355 = vld [vmem:[#allocation3 + $0x40] sm:$0xff]
      %v4356 = vld [vmem:[#allocation3 + $0x48] sm:$0xff]
      %v4357 = vld [vmem:[#allocation3 + $0x50] sm:$0xff]
      %v4358 = vld [vmem:[#allocation3 + $0x58] sm:$0xff]
      %v4359 = vld [vmem:[#allocation3 + $0x60] sm:$0xff]
      %v4360 = vld [vmem:[#allocation3 + $0x68] sm:$0xff]
      %v4361 = vld [vmem:[#allocation3 + $0x70] sm:$0xff]
      %v4362 = vld [vmem:[#allocation3 + $0x78] sm:$0xff]
      %v4363 = vld [vmem:[#allocation3 + $0x80] sm:$0xff]
      %v4364 = vld [vmem:[#allocation3 + $0x88] sm:$0xff]
      %v4365 = vld [vmem:[#allocation3 + $0x90] sm:$0xff]
      %v4366 = vld [vmem:[#allocation3 + $0x98] sm:$0xff]
      %v4367 = vld [vmem:[#allocation3 + $0xa0] sm:$0xff]
      %v4368 = vld [vmem:[#allocation3 + $0xa8] sm:$0xff]
      %v4369 = vld [vmem:[#allocation3 + $0xb0] sm:$0xff]
      %v4370 = vld [vmem:[#allocation3 + $0xb8] sm:$0xff]
      %v4371 = vld [vmem:[#allocation3 + $0xc0] sm:$0xff]
      %v4372 = vld [vmem:[#allocation3 + $0xc8] sm:$0xff]
      %v4373 = vld [vmem:[#allocation3 + $0xd0] sm:$0xff]
      %v4374 = vld [vmem:[#allocation3 + $0xd8] sm:$0xff]
      %v4375 = vld [vmem:[#allocation3 + $0xe0] sm:$0xff]
      %v4376 = vld [vmem:[#allocation3 + $0xe8] sm:$0xff]
      %v4377 = vld [vmem:[#allocation3 + $0xf0] sm:$0xff]
      %v4378 = vld [vmem:[#allocation3 + $0xf8] sm:$0xff]
      %v4379 = vlaneseq
      %v4380 = vshrl.u32 %v4379, 7
      %v4381 = vsub.s32 0, %v4380
      %v4382 = vrot.slane %v4340, %v4381
      %v4383 = vsub.f32 %v4347, %v4382
      %v4384 = vsub.f32 %v4348, %v4382
      %v4385 = vsub.f32 %v4349, %v4382
      %v4386 = vsub.f32 %v4350, %v4382
      %v4387 = vsub.f32 %v4351, %v4382
      %v4388 = vsub.f32 %v4352, %v4382
      %v4389 = vsub.f32 %v4353, %v4382
      %v4390 = vsub.f32 %v4354, %v4382
      %v4391 = vsub.f32 %v4355, %v4382
      %v4392 = vsub.f32 %v4356, %v4382
      %v4393 = vsub.f32 %v4357, %v4382
      %v4394 = vsub.f32 %v4358, %v4382
      %v4395 = vsub.f32 %v4359, %v4382
      %v4396 = vsub.f32 %v4360, %v4382
      %v4397 = vsub.f32 %v4361, %v4382
      %v4398 = vsub.f32 %v4362, %v4382
      %v4399 = vsub.f32 %v4363, %v4382
      %v4400 = vsub.f32 %v4364, %v4382
      %v4401 = vsub.f32 %v4365, %v4382
      %v4402 = vsub.f32 %v4366, %v4382
      %v4403 = vsub.f32 %v4367, %v4382
      %v4404 = vsub.f32 %v4368, %v4382
      %v4405 = vsub.f32 %v4369, %v4382
      %v4406 = vsub.f32 %v4370, %v4382
      %v4407 = vsub.f32 %v4371, %v4382
      %v4408 = vsub.f32 %v4372, %v4382
      %v4409 = vsub.f32 %v4373, %v4382
      %v4410 = vsub.f32 %v4374, %v4382
      %v4411 = vsub.f32 %v4375, %v4382
      %v4412 = vsub.f32 %v4376, %v4382
      %v4413 = vsub.f32 %v4377, %v4382
      %v4414 = vsub.f32 %v4378, %v4382
      %v4415 = vlaneseq
      %v4416 = vshrl.u32 %v4415, 7
      %v4417 = vsub.s32 0, %v4416
      %v4418 = vrot.slane %v4346, %v4417
      %v4419 = vmul.f32 %v4383, %v4418
      %v4420 = vmul.f32 %v4384, %v4418
      %v4421 = vmul.f32 %v4385, %v4418
      %v4422 = vmul.f32 %v4386, %v4418
      %v4423 = vmul.f32 %v4387, %v4418
      %v4424 = vmul.f32 %v4388, %v4418
      %v4425 = vmul.f32 %v4389, %v4418
      %v4426 = vmul.f32 %v4390, %v4418
      %v4427 = vmul.f32 %v4391, %v4418
      %v4428 = vmul.f32 %v4392, %v4418
      %v4429 = vmul.f32 %v4393, %v4418
      %v4430 = vmul.f32 %v4394, %v4418
      %v4431 = vmul.f32 %v4395, %v4418
      %v4432 = vmul.f32 %v4396, %v4418
      %v4433 = vmul.f32 %v4397, %v4418
      %v4434 = vmul.f32 %v4398, %v4418
      %v4435 = vmul.f32 %v4399, %v4418
      %v4436 = vmul.f32 %v4400, %v4418
      %v4437 = vmul.f32 %v4401, %v4418
      %v4438 = vmul.f32 %v4402, %v4418
      %v4439 = vmul.f32 %v4403, %v4418
      %v4440 = vmul.f32 %v4404, %v4418
      %v4441 = vmul.f32 %v4405, %v4418
      %v4442 = vmul.f32 %v4406, %v4418
      %v4443 = vmul.f32 %v4407, %v4418
      %v4444 = vmul.f32 %v4408, %v4418
      %v4445 = vmul.f32 %v4409, %v4418
      %v4446 = vmul.f32 %v4410, %v4418
      %v4447 = vmul.f32 %v4411, %v4418
      %v4448 = vmul.f32 %v4412, %v4418
      %v4449 = vmul.f32 %v4413, %v4418
      %v4450 = vmul.f32 %v4414, %v4418
      %v4451 = vmax.f32 %v4419, 0.0
      %v4452 = vmax.f32 %v4420, 0.0
      %v4453 = vmax.f32 %v4421, 0.0
      %v4454 = vmax.f32 %v4422, 0.0
      %v4455 = vmax.f32 %v4423, 0.0
      %v4456 = vmax.f32 %v4424, 0.0
      %v4457 = vmax.f32 %v4425, 0.0
      %v4458 = vmax.f32 %v4426, 0.0
      %v4459 = vmax.f32 %v4427, 0.0
      %v4460 = vmax.f32 %v4428, 0.0
      %v4461 = vmax.f32 %v4429, 0.0
      %v4462 = vmax.f32 %v4430, 0.0
      %v4463 = vmax.f32 %v4431, 0.0
      %v4464 = vmax.f32 %v4432, 0.0
      %v4465 = vmax.f32 %v4433, 0.0
      %v4466 = vmax.f32 %v4434, 0.0
      %v4467 = vmax.f32 %v4435, 0.0
      %v4468 = vmax.f32 %v4436, 0.0
      %v4469 = vmax.f32 %v4437, 0.0
      %v4470 = vmax.f32 %v4438, 0.0
      %v4471 = vmax.f32 %v4439, 0.0
      %v4472 = vmax.f32 %v4440, 0.0
      %v4473 = vmax.f32 %v4441, 0.0
      %v4474 = vmax.f32 %v4442, 0.0
      %v4475 = vmax.f32 %v4443, 0.0
      %v4476 = vmax.f32 %v4444, 0.0
      %v4477 = vmax.f32 %v4445, 0.0
      %v4478 = vmax.f32 %v4446, 0.0
      %v4479 = vmax.f32 %v4447, 0.0
      %v4480 = vmax.f32 %v4448, 0.0
      %v4481 = vmax.f32 %v4449, 0.0
      %v4482 = vmax.f32 %v4450, 0.0
      %v4483 = vpack.c.bf16 %v4452, %v4451
      %v4484 = vpack.c.bf16 %v4454, %v4453
      %v4485 = vpack.c.bf16 %v4456, %v4455
      %v4486 = vpack.c.bf16 %v4458, %v4457
      %v4487 = vpack.c.bf16 %v4460, %v4459
      %v4488 = vpack.c.bf16 %v4462, %v4461
      %v4489 = vpack.c.bf16 %v4464, %v4463
      %v4490 = vpack.c.bf16 %v4466, %v4465
      %v4491 = vpack.c.bf16 %v4468, %v4467
      %v4492 = vpack.c.bf16 %v4470, %v4469
      %v4493 = vpack.c.bf16 %v4472, %v4471
      %v4494 = vpack.c.bf16 %v4474, %v4473
      %v4495 = vpack.c.bf16 %v4476, %v4475
      %v4496 = vpack.c.bf16 %v4478, %v4477
      %v4497 = vpack.c.bf16 %v4480, %v4479
      %v4498 = vpack.c.bf16 %v4482, %v4481
      %v4515 = vunpack.c.l.b16 %v4483
      %v4516 = vunpack.c.h.b16 %v4483
      %v4517 = vunpack.c.l.b16 %v4484
      %v4518 = vunpack.c.h.b16 %v4484
      %v4519 = vunpack.c.l.b16 %v4485
      %v4520 = vunpack.c.h.b16 %v4485
      %v4521 = vunpack.c.l.b16 %v4486
      %v4522 = vunpack.c.h.b16 %v4486
      %v4523 = vunpack.c.l.b16 %v4487
      %v4524 = vunpack.c.h.b16 %v4487
      %v4525 = vunpack.c.l.b16 %v4488
      %v4526 = vunpack.c.h.b16 %v4488
      %v4527 = vunpack.c.l.b16 %v4489
      %v4528 = vunpack.c.h.b16 %v4489
      %v4529 = vunpack.c.l.b16 %v4490
      %v4530 = vunpack.c.h.b16 %v4490
      %v4531 = vunpack.c.l.b16 %v4491
      %v4532 = vunpack.c.h.b16 %v4491
      %v4533 = vunpack.c.l.b16 %v4492
      %v4534 = vunpack.c.h.b16 %v4492
      %v4535 = vunpack.c.l.b16 %v4493
      %v4536 = vunpack.c.h.b16 %v4493
      %v4537 = vunpack.c.l.b16 %v4494
      %v4538 = vunpack.c.h.b16 %v4494
      %v4539 = vunpack.c.l.b16 %v4495
      %v4540 = vunpack.c.h.b16 %v4495
      %v4541 = vunpack.c.l.b16 %v4496
      %v4542 = vunpack.c.h.b16 %v4496
      %v4543 = vunpack.c.l.b16 %v4497
      %v4544 = vunpack.c.h.b16 %v4497
      %v4545 = vunpack.c.l.b16 %v4498
      %v4546 = vunpack.c.h.b16 %v4498
      %v4547 = vpack.c.b16 %v4515, %v4515
      %v4548 = vpack.c.b16 %v4516, %v4516
      %v4549 = vpack.c.b16 %v4517, %v4517
      %v4550 = vpack.c.b16 %v4518, %v4518
      %v4551 = vpack.c.b16 %v4519, %v4519
      %v4552 = vpack.c.b16 %v4520, %v4520
      %v4553 = vpack.c.b16 %v4521, %v4521
      %v4554 = vpack.c.b16 %v4522, %v4522
      %v4555 = vpack.c.b16 %v4523, %v4523
      %v4556 = vpack.c.b16 %v4524, %v4524
      %v4557 = vpack.c.b16 %v4525, %v4525
      %v4558 = vpack.c.b16 %v4526, %v4526
      %v4559 = vpack.c.b16 %v4527, %v4527
      %v4560 = vpack.c.b16 %v4528, %v4528
      %v4561 = vpack.c.b16 %v4529, %v4529
      %v4562 = vpack.c.b16 %v4530, %v4530
      %v4563 = vpack.c.b16 %v4531, %v4531
      %v4564 = vpack.c.b16 %v4532, %v4532
      %v4565 = vpack.c.b16 %v4533, %v4533
      %v4566 = vpack.c.b16 %v4534, %v4534
      %v4567 = vpack.c.b16 %v4535, %v4535
      %v4568 = vpack.c.b16 %v4536, %v4536
      %v4569 = vpack.c.b16 %v4537, %v4537
      %v4570 = vpack.c.b16 %v4538, %v4538
      %v4571 = vpack.c.b16 %v4539, %v4539
      %v4572 = vpack.c.b16 %v4540, %v4540
      %v4573 = vpack.c.b16 %v4541, %v4541
      %v4574 = vpack.c.b16 %v4542, %v4542
      %v4575 = vpack.c.b16 %v4543, %v4543
      %v4576 = vpack.c.b16 %v4544, %v4544
      %v4577 = vpack.c.b16 %v4545, %v4545
      %v4578 = vpack.c.b16 %v4546, %v4546
      %vm4611 = vcmask 60416
      %4612 = vst.msk [vmem:[%s143] sm:$0xf] %vm4611, %v4547
      %4613 = vst.msk [vmem:[%s143 + $0x4] sm:$0xf] %vm4611, %v4548
      %4614 = vst.msk [vmem:[%s143 + $0x8] sm:$0xf] %vm4611, %v4549
      %4615 = vst.msk [vmem:[%s143 + $0xc] sm:$0xf] %vm4611, %v4550
      %4616 = vst.msk [vmem:[%s143 + $0x10] sm:$0xf] %vm4611, %v4551
      %4617 = vst.msk [vmem:[%s143 + $0x14] sm:$0xf] %vm4611, %v4552
      %4618 = vst.msk [vmem:[%s143 + $0x18] sm:$0xf] %vm4611, %v4553
      %4619 = vst.msk [vmem:[%s143 + $0x1c] sm:$0xf] %vm4611, %v4554
      %4620 = vst.msk [vmem:[%s143 + $0x20] sm:$0xf] %vm4611, %v4555
      %4621 = vst.msk [vmem:[%s143 + $0x24] sm:$0xf] %vm4611, %v4556
      %4622 = vst.msk [vmem:[%s143 + $0x28] sm:$0xf] %vm4611, %v4557
      %4623 = vst.msk [vmem:[%s143 + $0x2c] sm:$0xf] %vm4611, %v4558
      %4624 = vst.msk [vmem:[%s143 + $0x30] sm:$0xf] %vm4611, %v4559
      %4625 = vst.msk [vmem:[%s143 + $0x34] sm:$0xf] %vm4611, %v4560
      %4626 = vst.msk [vmem:[%s143 + $0x38] sm:$0xf] %vm4611, %v4561
      %4627 = vst.msk [vmem:[%s143 + $0x3c] sm:$0xf] %vm4611, %v4562
      %4628 = vst.msk [vmem:[%s143 + $0x40] sm:$0xf] %vm4611, %v4563
      %4629 = vst.msk [vmem:[%s143 + $0x44] sm:$0xf] %vm4611, %v4564
      %4630 = vst.msk [vmem:[%s143 + $0x48] sm:$0xf] %vm4611, %v4565
      %4631 = vst.msk [vmem:[%s143 + $0x4c] sm:$0xf] %vm4611, %v4566
      %4632 = vst.msk [vmem:[%s143 + $0x50] sm:$0xf] %vm4611, %v4567
      %4633 = vst.msk [vmem:[%s143 + $0x54] sm:$0xf] %vm4611, %v4568
      %4634 = vst.msk [vmem:[%s143 + $0x58] sm:$0xf] %vm4611, %v4569
      %4635 = vst.msk [vmem:[%s143 + $0x5c] sm:$0xf] %vm4611, %v4570
      %4636 = vst.msk [vmem:[%s143 + $0x60] sm:$0xf] %vm4611, %v4571
      %4637 = vst.msk [vmem:[%s143 + $0x64] sm:$0xf] %vm4611, %v4572
      %4638 = vst.msk [vmem:[%s143 + $0x68] sm:$0xf] %vm4611, %v4573
      %4639 = vst.msk [vmem:[%s143 + $0x6c] sm:$0xf] %vm4611, %v4574
      %4640 = vst.msk [vmem:[%s143 + $0x70] sm:$0xf] %vm4611, %v4575
      %4641 = vst.msk [vmem:[%s143 + $0x74] sm:$0xf] %vm4611, %v4576
      %4642 = vst.msk [vmem:[%s143 + $0x78] sm:$0xf] %vm4611, %v4577
      %4643 = vst.msk [vmem:[%s143 + $0x7c] sm:$0xf] %vm4611, %v4578
      %v4644 = vld [vmem:[%s2161] sm:$0xff]
      %v4645 = vld [vmem:[%s2161 + $0x8] sm:$0xff]
      %v4646 = vld [vmem:[%s2161 + $0x10] sm:$0xff]
      %v4647 = vld [vmem:[%s2161 + $0x18] sm:$0xff]
      %v4648 = vld [vmem:[%s2161 + $0x20] sm:$0xff]
      %v4649 = vld [vmem:[%s2161 + $0x28] sm:$0xff]
      %v4650 = vld [vmem:[%s2161 + $0x30] sm:$0xff]
      %v4651 = vld [vmem:[%s2161 + $0x38] sm:$0xff]
      %v4652 = vld [vmem:[%s2161 + $0x40] sm:$0xff]
      %v4653 = vld [vmem:[%s2161 + $0x48] sm:$0xff]
      %v4654 = vld [vmem:[%s2161 + $0x50] sm:$0xff]
      %v4655 = vld [vmem:[%s2161 + $0x58] sm:$0xff]
      %v4656 = vld [vmem:[%s2161 + $0x60] sm:$0xff]
      %v4657 = vld [vmem:[%s2161 + $0x68] sm:$0xff]
      %v4658 = vld [vmem:[%s2161 + $0x70] sm:$0xff]
      %v4659 = vld [vmem:[%s2161 + $0x78] sm:$0xff]
      %v4660 = vld [vmem:[%s2161 + $0x80] sm:$0xff]
      %v4661 = vld [vmem:[%s2161 + $0x88] sm:$0xff]
      %v4662 = vld [vmem:[%s2161 + $0x90] sm:$0xff]
      %v4663 = vld [vmem:[%s2161 + $0x98] sm:$0xff]
      %v4664 = vld [vmem:[%s2161 + $0xa0] sm:$0xff]
      %v4665 = vld [vmem:[%s2161 + $0xa8] sm:$0xff]
      %v4666 = vld [vmem:[%s2161 + $0xb0] sm:$0xff]
      %v4667 = vld [vmem:[%s2161 + $0xb8] sm:$0xff]
      %v4668 = vld [vmem:[%s2161 + $0xc0] sm:$0xff]
      %v4669 = vld [vmem:[%s2161 + $0xc8] sm:$0xff]
      %v4670 = vld [vmem:[%s2161 + $0xd0] sm:$0xff]
      %v4671 = vld [vmem:[%s2161 + $0xd8] sm:$0xff]
      %v4672 = vld [vmem:[%s2161 + $0xe0] sm:$0xff]
      %v4673 = vld [vmem:[%s2161 + $0xe8] sm:$0xff]
      %v4674 = vld [vmem:[%s2161 + $0xf0] sm:$0xff]
      %v4675 = vld [vmem:[%s2161 + $0xf8] sm:$0xff]
      %v4676 = vsub.f32 %v4644, %v4382
      %v4677 = vsub.f32 %v4645, %v4382
      %v4678 = vsub.f32 %v4646, %v4382
      %v4679 = vsub.f32 %v4647, %v4382
      %v4680 = vsub.f32 %v4648, %v4382
      %v4681 = vsub.f32 %v4649, %v4382
      %v4682 = vsub.f32 %v4650, %v4382
      %v4683 = vsub.f32 %v4651, %v4382
      %v4684 = vsub.f32 %v4652, %v4382
      %v4685 = vsub.f32 %v4653, %v4382
      %v4686 = vsub.f32 %v4654, %v4382
      %v4687 = vsub.f32 %v4655, %v4382
      %v4688 = vsub.f32 %v4656, %v4382
      %v4689 = vsub.f32 %v4657, %v4382
      %v4690 = vsub.f32 %v4658, %v4382
      %v4691 = vsub.f32 %v4659, %v4382
      %v4692 = vsub.f32 %v4660, %v4382
      %v4693 = vsub.f32 %v4661, %v4382
      %v4694 = vsub.f32 %v4662, %v4382
      %v4695 = vsub.f32 %v4663, %v4382
      %v4696 = vsub.f32 %v4664, %v4382
      %v4697 = vsub.f32 %v4665, %v4382
      %v4698 = vsub.f32 %v4666, %v4382
      %v4699 = vsub.f32 %v4667, %v4382
      %v4700 = vsub.f32 %v4668, %v4382
      %v4701 = vsub.f32 %v4669, %v4382
      %v4702 = vsub.f32 %v4670, %v4382
      %v4703 = vsub.f32 %v4671, %v4382
      %v4704 = vsub.f32 %v4672, %v4382
      %v4705 = vsub.f32 %v4673, %v4382
      %v4706 = vsub.f32 %v4674, %v4382
      %v4707 = vsub.f32 %v4675, %v4382
      %v4708 = vmul.f32 %v4676, %v4418
      %v4709 = vmul.f32 %v4677, %v4418
      %v4710 = vmul.f32 %v4678, %v4418
      %v4711 = vmul.f32 %v4679, %v4418
      %v4712 = vmul.f32 %v4680, %v4418
      %v4713 = vmul.f32 %v4681, %v4418
      %v4714 = vmul.f32 %v4682, %v4418
      %v4715 = vmul.f32 %v4683, %v4418
      %v4716 = vmul.f32 %v4684, %v4418
      %v4717 = vmul.f32 %v4685, %v4418
      %v4718 = vmul.f32 %v4686, %v4418
      %v4719 = vmul.f32 %v4687, %v4418
      %v4720 = vmul.f32 %v4688, %v4418
      %v4721 = vmul.f32 %v4689, %v4418
      %v4722 = vmul.f32 %v4690, %v4418
      %v4723 = vmul.f32 %v4691, %v4418
      %v4724 = vmul.f32 %v4692, %v4418
      %v4725 = vmul.f32 %v4693, %v4418
      %v4726 = vmul.f32 %v4694, %v4418
      %v4727 = vmul.f32 %v4695, %v4418
      %v4728 = vmul.f32 %v4696, %v4418
      %v4729 = vmul.f32 %v4697, %v4418
      %v4730 = vmul.f32 %v4698, %v4418
      %v4731 = vmul.f32 %v4699, %v4418
      %v4732 = vmul.f32 %v4700, %v4418
      %v4733 = vmul.f32 %v4701, %v4418
      %v4734 = vmul.f32 %v4702, %v4418
      %v4735 = vmul.f32 %v4703, %v4418
      %v4736 = vmul.f32 %v4704, %v4418
      %v4737 = vmul.f32 %v4705, %v4418
      %v4738 = vmul.f32 %v4706, %v4418
      %v4739 = vmul.f32 %v4707, %v4418
      %v4740 = vmax.f32 %v4708, 0.0
      %v4741 = vmax.f32 %v4709, 0.0
      %v4742 = vmax.f32 %v4710, 0.0
      %v4743 = vmax.f32 %v4711, 0.0
      %v4744 = vmax.f32 %v4712, 0.0
      %v4745 = vmax.f32 %v4713, 0.0
      %v4746 = vmax.f32 %v4714, 0.0
      %v4747 = vmax.f32 %v4715, 0.0
      %v4748 = vmax.f32 %v4716, 0.0
      %v4749 = vmax.f32 %v4717, 0.0
      %v4750 = vmax.f32 %v4718, 0.0
      %v4751 = vmax.f32 %v4719, 0.0
      %v4752 = vmax.f32 %v4720, 0.0
      %v4753 = vmax.f32 %v4721, 0.0
      %v4754 = vmax.f32 %v4722, 0.0
      %v4755 = vmax.f32 %v4723, 0.0
      %v4756 = vmax.f32 %v4724, 0.0
      %v4757 = vmax.f32 %v4725, 0.0
      %v4758 = vmax.f32 %v4726, 0.0
      %v4759 = vmax.f32 %v4727, 0.0
      %v4760 = vmax.f32 %v4728, 0.0
      %v4761 = vmax.f32 %v4729, 0.0
      %v4762 = vmax.f32 %v4730, 0.0
      %v4763 = vmax.f32 %v4731, 0.0
      %v4764 = vmax.f32 %v4732, 0.0
      %v4765 = vmax.f32 %v4733, 0.0
      %v4766 = vmax.f32 %v4734, 0.0
      %v4767 = vmax.f32 %v4735, 0.0
      %v4768 = vmax.f32 %v4736, 0.0
      %v4769 = vmax.f32 %v4737, 0.0
      %v4770 = vmax.f32 %v4738, 0.0
      %v4771 = vmax.f32 %v4739, 0.0
      %v4772 = vpack.c.bf16 %v4741, %v4740
      %v4773 = vpack.c.bf16 %v4743, %v4742
      %v4774 = vpack.c.bf16 %v4745, %v4744
      %v4775 = vpack.c.bf16 %v4747, %v4746
      %v4776 = vpack.c.bf16 %v4749, %v4748
      %v4777 = vpack.c.bf16 %v4751, %v4750
      %v4778 = vpack.c.bf16 %v4753, %v4752
      %v4779 = vpack.c.bf16 %v4755, %v4754
      %v4780 = vpack.c.bf16 %v4757, %v4756
      %v4781 = vpack.c.bf16 %v4759, %v4758
      %v4782 = vpack.c.bf16 %v4761, %v4760
      %v4783 = vpack.c.bf16 %v4763, %v4762
      %v4784 = vpack.c.bf16 %v4765, %v4764
      %v4785 = vpack.c.bf16 %v4767, %v4766
      %v4786 = vpack.c.bf16 %v4769, %v4768
      %v4787 = vpack.c.bf16 %v4771, %v4770
      %v4804 = vunpack.c.l.b16 %v4772
      %v4805 = vunpack.c.h.b16 %v4772
      %v4806 = vunpack.c.l.b16 %v4773
      %v4807 = vunpack.c.h.b16 %v4773
      %v4808 = vunpack.c.l.b16 %v4774
      %v4809 = vunpack.c.h.b16 %v4774
      %v4810 = vunpack.c.l.b16 %v4775
      %v4811 = vunpack.c.h.b16 %v4775
      %v4812 = vunpack.c.l.b16 %v4776
      %v4813 = vunpack.c.h.b16 %v4776
      %v4814 = vunpack.c.l.b16 %v4777
      %v4815 = vunpack.c.h.b16 %v4777
      %v4816 = vunpack.c.l.b16 %v4778
      %v4817 = vunpack.c.h.b16 %v4778
      %v4818 = vunpack.c.l.b16 %v4779
      %v4819 = vunpack.c.h.b16 %v4779
      %v4820 = vunpack.c.l.b16 %v4780
      %v4821 = vunpack.c.h.b16 %v4780
      %v4822 = vunpack.c.l.b16 %v4781
      %v4823 = vunpack.c.h.b16 %v4781
      %v4824 = vunpack.c.l.b16 %v4782
      %v4825 = vunpack.c.h.b16 %v4782
      %v4826 = vunpack.c.l.b16 %v4783
      %v4827 = vunpack.c.h.b16 %v4783
      %v4828 = vunpack.c.l.b16 %v4784
      %v4829 = vunpack.c.h.b16 %v4784
      %v4830 = vunpack.c.l.b16 %v4785
      %v4831 = vunpack.c.h.b16 %v4785
      %v4832 = vunpack.c.l.b16 %v4786
      %v4833 = vunpack.c.h.b16 %v4786
      %v4834 = vunpack.c.l.b16 %v4787
      %v4835 = vunpack.c.h.b16 %v4787
      %v4836 = vpack.c.b16 %v4804, %v4804
      %v4837 = vpack.c.b16 %v4805, %v4805
      %v4838 = vpack.c.b16 %v4806, %v4806
      %v4839 = vpack.c.b16 %v4807, %v4807
      %v4840 = vpack.c.b16 %v4808, %v4808
      %v4841 = vpack.c.b16 %v4809, %v4809
      %v4842 = vpack.c.b16 %v4810, %v4810
      %v4843 = vpack.c.b16 %v4811, %v4811
      %v4844 = vpack.c.b16 %v4812, %v4812
      %v4845 = vpack.c.b16 %v4813, %v4813
      %v4846 = vpack.c.b16 %v4814, %v4814
      %v4847 = vpack.c.b16 %v4815, %v4815
      %v4848 = vpack.c.b16 %v4816, %v4816
      %v4849 = vpack.c.b16 %v4817, %v4817
      %v4850 = vpack.c.b16 %v4818, %v4818
      %v4851 = vpack.c.b16 %v4819, %v4819
      %v4852 = vpack.c.b16 %v4820, %v4820
      %v4853 = vpack.c.b16 %v4821, %v4821
      %v4854 = vpack.c.b16 %v4822, %v4822
      %v4855 = vpack.c.b16 %v4823, %v4823
      %v4856 = vpack.c.b16 %v4824, %v4824
      %v4857 = vpack.c.b16 %v4825, %v4825
      %v4858 = vpack.c.b16 %v4826, %v4826
      %v4859 = vpack.c.b16 %v4827, %v4827
      %v4860 = vpack.c.b16 %v4828, %v4828
      %v4861 = vpack.c.b16 %v4829, %v4829
      %v4862 = vpack.c.b16 %v4830, %v4830
      %v4863 = vpack.c.b16 %v4831, %v4831
      %v4864 = vpack.c.b16 %v4832, %v4832
      %v4865 = vpack.c.b16 %v4833, %v4833
      %v4866 = vpack.c.b16 %v4834, %v4834
      %v4867 = vpack.c.b16 %v4835, %v4835
      %s4900 = scalar_lea.vmem %s143, 128
      %4901 = vst.msk [vmem:[%s4900] sm:$0xf] %vm4611, %v4836
      %4902 = vst.msk [vmem:[%s4900 + $0x4] sm:$0xf] %vm4611, %v4837
      %4903 = vst.msk [vmem:[%s4900 + $0x8] sm:$0xf] %vm4611, %v4838
      %4904 = vst.msk [vmem:[%s4900 + $0xc] sm:$0xf] %vm4611, %v4839
      %4905 = vst.msk [vmem:[%s4900 + $0x10] sm:$0xf] %vm4611, %v4840
      %4906 = vst.msk [vmem:[%s4900 + $0x14] sm:$0xf] %vm4611, %v4841
      %4907 = vst.msk [vmem:[%s4900 + $0x18] sm:$0xf] %vm4611, %v4842
      %4908 = vst.msk [vmem:[%s4900 + $0x1c] sm:$0xf] %vm4611, %v4843
      %4909 = vst.msk [vmem:[%s4900 + $0x20] sm:$0xf] %vm4611, %v4844
      %4910 = vst.msk [vmem:[%s4900 + $0x24] sm:$0xf] %vm4611, %v4845
      %4911 = vst.msk [vmem:[%s4900 + $0x28] sm:$0xf] %vm4611, %v4846
      %4912 = vst.msk [vmem:[%s4900 + $0x2c] sm:$0xf] %vm4611, %v4847
      %4913 = vst.msk [vmem:[%s4900 + $0x30] sm:$0xf] %vm4611, %v4848
      %4914 = vst.msk [vmem:[%s4900 + $0x34] sm:$0xf] %vm4611, %v4849
      %4915 = vst.msk [vmem:[%s4900 + $0x38] sm:$0xf] %vm4611, %v4850
      %4916 = vst.msk [vmem:[%s4900 + $0x3c] sm:$0xf] %vm4611, %v4851
      %4917 = vst.msk [vmem:[%s4900 + $0x40] sm:$0xf] %vm4611, %v4852
      %4918 = vst.msk [vmem:[%s4900 + $0x44] sm:$0xf] %vm4611, %v4853
      %4919 = vst.msk [vmem:[%s4900 + $0x48] sm:$0xf] %vm4611, %v4854
      %4920 = vst.msk [vmem:[%s4900 + $0x4c] sm:$0xf] %vm4611, %v4855
      %4921 = vst.msk [vmem:[%s4900 + $0x50] sm:$0xf] %vm4611, %v4856
      %4922 = vst.msk [vmem:[%s4900 + $0x54] sm:$0xf] %vm4611, %v4857
      %4923 = vst.msk [vmem:[%s4900 + $0x58] sm:$0xf] %vm4611, %v4858
      %4924 = vst.msk [vmem:[%s4900 + $0x5c] sm:$0xf] %vm4611, %v4859
      %4925 = vst.msk [vmem:[%s4900 + $0x60] sm:$0xf] %vm4611, %v4860
      %4926 = vst.msk [vmem:[%s4900 + $0x64] sm:$0xf] %vm4611, %v4861
      %4927 = vst.msk [vmem:[%s4900 + $0x68] sm:$0xf] %vm4611, %v4862
      %4928 = vst.msk [vmem:[%s4900 + $0x6c] sm:$0xf] %vm4611, %v4863
      %4929 = vst.msk [vmem:[%s4900 + $0x70] sm:$0xf] %vm4611, %v4864
      %4930 = vst.msk [vmem:[%s4900 + $0x74] sm:$0xf] %vm4611, %v4865
      %4931 = vst.msk [vmem:[%s4900 + $0x78] sm:$0xf] %vm4611, %v4866
      %4932 = vst.msk [vmem:[%s4900 + $0x7c] sm:$0xf] %vm4611, %v4867
      %v4933 = vld [vmem:[%s3144] sm:$0xff]
      %v4934 = vld [vmem:[%s3144 + $0x8] sm:$0xff]
      %v4935 = vld [vmem:[%s3144 + $0x10] sm:$0xff]
      %v4936 = vld [vmem:[%s3144 + $0x18] sm:$0xff]
      %v4937 = vld [vmem:[%s3144 + $0x20] sm:$0xff]
      %v4938 = vld [vmem:[%s3144 + $0x28] sm:$0xff]
      %v4939 = vld [vmem:[%s3144 + $0x30] sm:$0xff]
      %v4940 = vld [vmem:[%s3144 + $0x38] sm:$0xff]
      %v4941 = vld [vmem:[%s3144 + $0x40] sm:$0xff]
      %v4942 = vld [vmem:[%s3144 + $0x48] sm:$0xff]
      %v4943 = vld [vmem:[%s3144 + $0x50] sm:$0xff]
      %v4944 = vld [vmem:[%s3144 + $0x58] sm:$0xff]
      %v4945 = vld [vmem:[%s3144 + $0x60] sm:$0xff]
      %v4946 = vld [vmem:[%s3144 + $0x68] sm:$0xff]
      %v4947 = vld [vmem:[%s3144 + $0x70] sm:$0xff]
      %v4948 = vld [vmem:[%s3144 + $0x78] sm:$0xff]
      %v4949 = vld [vmem:[%s3144 + $0x80] sm:$0xff]
      %v4950 = vld [vmem:[%s3144 + $0x88] sm:$0xff]
      %v4951 = vld [vmem:[%s3144 + $0x90] sm:$0xff]
      %v4952 = vld [vmem:[%s3144 + $0x98] sm:$0xff]
      %v4953 = vld [vmem:[%s3144 + $0xa0] sm:$0xff]
      %v4954 = vld [vmem:[%s3144 + $0xa8] sm:$0xff]
      %v4955 = vld [vmem:[%s3144 + $0xb0] sm:$0xff]
      %v4956 = vld [vmem:[%s3144 + $0xb8] sm:$0xff]
      %v4957 = vld [vmem:[%s3144 + $0xc0] sm:$0xff]
      %v4958 = vld [vmem:[%s3144 + $0xc8] sm:$0xff]
      %v4959 = vld [vmem:[%s3144 + $0xd0] sm:$0xff]
      %v4960 = vld [vmem:[%s3144 + $0xd8] sm:$0xff]
      %v4961 = vld [vmem:[%s3144 + $0xe0] sm:$0xff]
      %v4962 = vld [vmem:[%s3144 + $0xe8] sm:$0xff]
      %v4963 = vld [vmem:[%s3144 + $0xf0] sm:$0xff]
      %v4964 = vld [vmem:[%s3144 + $0xf8] sm:$0xff]
      %v4965 = vsub.f32 %v4933, %v4382
      %v4966 = vsub.f32 %v4934, %v4382
      %v4967 = vsub.f32 %v4935, %v4382
      %v4968 = vsub.f32 %v4936, %v4382
      %v4969 = vsub.f32 %v4937, %v4382
      %v4970 = vsub.f32 %v4938, %v4382
      %v4971 = vsub.f32 %v4939, %v4382
      %v4972 = vsub.f32 %v4940, %v4382
      %v4973 = vsub.f32 %v4941, %v4382
      %v4974 = vsub.f32 %v4942, %v4382
      %v4975 = vsub.f32 %v4943, %v4382
      %v4976 = vsub.f32 %v4944, %v4382
      %v4977 = vsub.f32 %v4945, %v4382
      %v4978 = vsub.f32 %v4946, %v4382
      %v4979 = vsub.f32 %v4947, %v4382
      %v4980 = vsub.f32 %v4948, %v4382
      %v4981 = vsub.f32 %v4949, %v4382
      %v4982 = vsub.f32 %v4950, %v4382
      %v4983 = vsub.f32 %v4951, %v4382
      %v4984 = vsub.f32 %v4952, %v4382
      %v4985 = vsub.f32 %v4953, %v4382
      %v4986 = vsub.f32 %v4954, %v4382
      %v4987 = vsub.f32 %v4955, %v4382
      %v4988 = vsub.f32 %v4956, %v4382
      %v4989 = vsub.f32 %v4957, %v4382
      %v4990 = vsub.f32 %v4958, %v4382
      %v4991 = vsub.f32 %v4959, %v4382
      %v4992 = vsub.f32 %v4960, %v4382
      %v4993 = vsub.f32 %v4961, %v4382
      %v4994 = vsub.f32 %v4962, %v4382
      %v4995 = vsub.f32 %v4963, %v4382
      %v4996 = vsub.f32 %v4964, %v4382
      %v4997 = vmul.f32 %v4965, %v4418
      %v4998 = vmul.f32 %v4966, %v4418
      %v4999 = vmul.f32 %v4967, %v4418
      %v5000 = vmul.f32 %v4968, %v4418
      %v5001 = vmul.f32 %v4969, %v4418
      %v5002 = vmul.f32 %v4970, %v4418
      %v5003 = vmul.f32 %v4971, %v4418
      %v5004 = vmul.f32 %v4972, %v4418
      %v5005 = vmul.f32 %v4973, %v4418
      %v5006 = vmul.f32 %v4974, %v4418
      %v5007 = vmul.f32 %v4975, %v4418
      %v5008 = vmul.f32 %v4976, %v4418
      %v5009 = vmul.f32 %v4977, %v4418
      %v5010 = vmul.f32 %v4978, %v4418
      %v5011 = vmul.f32 %v4979, %v4418
      %v5012 = vmul.f32 %v4980, %v4418
      %v5013 = vmul.f32 %v4981, %v4418
      %v5014 = vmul.f32 %v4982, %v4418
      %v5015 = vmul.f32 %v4983, %v4418
      %v5016 = vmul.f32 %v4984, %v4418
      %v5017 = vmul.f32 %v4985, %v4418
      %v5018 = vmul.f32 %v4986, %v4418
      %v5019 = vmul.f32 %v4987, %v4418
      %v5020 = vmul.f32 %v4988, %v4418
      %v5021 = vmul.f32 %v4989, %v4418
      %v5022 = vmul.f32 %v4990, %v4418
      %v5023 = vmul.f32 %v4991, %v4418
      %v5024 = vmul.f32 %v4992, %v4418
      %v5025 = vmul.f32 %v4993, %v4418
      %v5026 = vmul.f32 %v4994, %v4418
      %v5027 = vmul.f32 %v4995, %v4418
      %v5028 = vmul.f32 %v4996, %v4418
      %v5029 = vmax.f32 %v4997, 0.0
      %v5030 = vmax.f32 %v4998, 0.0
      %v5031 = vmax.f32 %v4999, 0.0
      %v5032 = vmax.f32 %v5000, 0.0
      %v5033 = vmax.f32 %v5001, 0.0
      %v5034 = vmax.f32 %v5002, 0.0
      %v5035 = vmax.f32 %v5003, 0.0
      %v5036 = vmax.f32 %v5004, 0.0
      %v5037 = vmax.f32 %v5005, 0.0
      %v5038 = vmax.f32 %v5006, 0.0
      %v5039 = vmax.f32 %v5007, 0.0
      %v5040 = vmax.f32 %v5008, 0.0
      %v5041 = vmax.f32 %v5009, 0.0
      %v5042 = vmax.f32 %v5010, 0.0
      %v5043 = vmax.f32 %v5011, 0.0
      %v5044 = vmax.f32 %v5012, 0.0
      %v5045 = vmax.f32 %v5013, 0.0
      %v5046 = vmax.f32 %v5014, 0.0
      %v5047 = vmax.f32 %v5015, 0.0
      %v5048 = vmax.f32 %v5016, 0.0
      %v5049 = vmax.f32 %v5017, 0.0
      %v5050 = vmax.f32 %v5018, 0.0
      %v5051 = vmax.f32 %v5019, 0.0
      %v5052 = vmax.f32 %v5020, 0.0
      %v5053 = vmax.f32 %v5021, 0.0
      %v5054 = vmax.f32 %v5022, 0.0
      %v5055 = vmax.f32 %v5023, 0.0
      %v5056 = vmax.f32 %v5024, 0.0
      %v5057 = vmax.f32 %v5025, 0.0
      %v5058 = vmax.f32 %v5026, 0.0
      %v5059 = vmax.f32 %v5027, 0.0
      %v5060 = vmax.f32 %v5028, 0.0
      %v5061 = vpack.c.bf16 %v5030, %v5029
      %v5062 = vpack.c.bf16 %v5032, %v5031
      %v5063 = vpack.c.bf16 %v5034, %v5033
      %v5064 = vpack.c.bf16 %v5036, %v5035
      %v5065 = vpack.c.bf16 %v5038, %v5037
      %v5066 = vpack.c.bf16 %v5040, %v5039
      %v5067 = vpack.c.bf16 %v5042, %v5041
      %v5068 = vpack.c.bf16 %v5044, %v5043
      %v5069 = vpack.c.bf16 %v5046, %v5045
      %v5070 = vpack.c.bf16 %v5048, %v5047
      %v5071 = vpack.c.bf16 %v5050, %v5049
      %v5072 = vpack.c.bf16 %v5052, %v5051
      %v5073 = vpack.c.bf16 %v5054, %v5053
      %v5074 = vpack.c.bf16 %v5056, %v5055
      %v5075 = vpack.c.bf16 %v5058, %v5057
      %v5076 = vpack.c.bf16 %v5060, %v5059
      %v5093 = vunpack.c.l.b16 %v5061
      %v5094 = vunpack.c.h.b16 %v5061
      %v5095 = vunpack.c.l.b16 %v5062
      %v5096 = vunpack.c.h.b16 %v5062
      %v5097 = vunpack.c.l.b16 %v5063
      %v5098 = vunpack.c.h.b16 %v5063
      %v5099 = vunpack.c.l.b16 %v5064
      %v5100 = vunpack.c.h.b16 %v5064
      %v5101 = vunpack.c.l.b16 %v5065
      %v5102 = vunpack.c.h.b16 %v5065
      %v5103 = vunpack.c.l.b16 %v5066
      %v5104 = vunpack.c.h.b16 %v5066
      %v5105 = vunpack.c.l.b16 %v5067
      %v5106 = vunpack.c.h.b16 %v5067
      %v5107 = vunpack.c.l.b16 %v5068
      %v5108 = vunpack.c.h.b16 %v5068
      %v5109 = vunpack.c.l.b16 %v5069
      %v5110 = vunpack.c.h.b16 %v5069
      %v5111 = vunpack.c.l.b16 %v5070
      %v5112 = vunpack.c.h.b16 %v5070
      %v5113 = vunpack.c.l.b16 %v5071
      %v5114 = vunpack.c.h.b16 %v5071
      %v5115 = vunpack.c.l.b16 %v5072
      %v5116 = vunpack.c.h.b16 %v5072
      %v5117 = vunpack.c.l.b16 %v5073
      %v5118 = vunpack.c.h.b16 %v5073
      %v5119 = vunpack.c.l.b16 %v5074
      %v5120 = vunpack.c.h.b16 %v5074
      %v5121 = vunpack.c.l.b16 %v5075
      %v5122 = vunpack.c.h.b16 %v5075
      %v5123 = vunpack.c.l.b16 %v5076
      %v5124 = vunpack.c.h.b16 %v5076
      %v5125 = vpack.c.b16 %v5093, %v5093
      %v5126 = vpack.c.b16 %v5094, %v5094
      %v5127 = vpack.c.b16 %v5095, %v5095
      %v5128 = vpack.c.b16 %v5096, %v5096
      %v5129 = vpack.c.b16 %v5097, %v5097
      %v5130 = vpack.c.b16 %v5098, %v5098
      %v5131 = vpack.c.b16 %v5099, %v5099
      %v5132 = vpack.c.b16 %v5100, %v5100
      %v5133 = vpack.c.b16 %v5101, %v5101
      %v5134 = vpack.c.b16 %v5102, %v5102
      %v5135 = vpack.c.b16 %v5103, %v5103
      %v5136 = vpack.c.b16 %v5104, %v5104
      %v5137 = vpack.c.b16 %v5105, %v5105
      %v5138 = vpack.c.b16 %v5106, %v5106
      %v5139 = vpack.c.b16 %v5107, %v5107
      %v5140 = vpack.c.b16 %v5108, %v5108
      %v5141 = vpack.c.b16 %v5109, %v5109
      %v5142 = vpack.c.b16 %v5110, %v5110
      %v5143 = vpack.c.b16 %v5111, %v5111
      %v5144 = vpack.c.b16 %v5112, %v5112
      %v5145 = vpack.c.b16 %v5113, %v5113
      %v5146 = vpack.c.b16 %v5114, %v5114
      %v5147 = vpack.c.b16 %v5115, %v5115
      %v5148 = vpack.c.b16 %v5116, %v5116
      %v5149 = vpack.c.b16 %v5117, %v5117
      %v5150 = vpack.c.b16 %v5118, %v5118
      %v5151 = vpack.c.b16 %v5119, %v5119
      %v5152 = vpack.c.b16 %v5120, %v5120
      %v5153 = vpack.c.b16 %v5121, %v5121
      %v5154 = vpack.c.b16 %v5122, %v5122
      %v5155 = vpack.c.b16 %v5123, %v5123
      %v5156 = vpack.c.b16 %v5124, %v5124
      %s5189 = scalar_lea.vmem %s143, 256
      %5190 = vst.msk [vmem:[%s5189] sm:$0xf] %vm4611, %v5125
      %5191 = vst.msk [vmem:[%s5189 + $0x4] sm:$0xf] %vm4611, %v5126
      %5192 = vst.msk [vmem:[%s5189 + $0x8] sm:$0xf] %vm4611, %v5127
      %5193 = vst.msk [vmem:[%s5189 + $0xc] sm:$0xf] %vm4611, %v5128
      %5194 = vst.msk [vmem:[%s5189 + $0x10] sm:$0xf] %vm4611, %v5129
      %5195 = vst.msk [vmem:[%s5189 + $0x14] sm:$0xf] %vm4611, %v5130
      %5196 = vst.msk [vmem:[%s5189 + $0x18] sm:$0xf] %vm4611, %v5131
      %5197 = vst.msk [vmem:[%s5189 + $0x1c] sm:$0xf] %vm4611, %v5132
      %5198 = vst.msk [vmem:[%s5189 + $0x20] sm:$0xf] %vm4611, %v5133
      %5199 = vst.msk [vmem:[%s5189 + $0x24] sm:$0xf] %vm4611, %v5134
      %5200 = vst.msk [vmem:[%s5189 + $0x28] sm:$0xf] %vm4611, %v5135
      %5201 = vst.msk [vmem:[%s5189 + $0x2c] sm:$0xf] %vm4611, %v5136
      %5202 = vst.msk [vmem:[%s5189 + $0x30] sm:$0xf] %vm4611, %v5137
      %5203 = vst.msk [vmem:[%s5189 + $0x34] sm:$0xf] %vm4611, %v5138
      %5204 = vst.msk [vmem:[%s5189 + $0x38] sm:$0xf] %vm4611, %v5139
      %5205 = vst.msk [vmem:[%s5189 + $0x3c] sm:$0xf] %vm4611, %v5140
      %5206 = vst.msk [vmem:[%s5189 + $0x40] sm:$0xf] %vm4611, %v5141
      %5207 = vst.msk [vmem:[%s5189 + $0x44] sm:$0xf] %vm4611, %v5142
      %5208 = vst.msk [vmem:[%s5189 + $0x48] sm:$0xf] %vm4611, %v5143
      %5209 = vst.msk [vmem:[%s5189 + $0x4c] sm:$0xf] %vm4611, %v5144
      %5210 = vst.msk [vmem:[%s5189 + $0x50] sm:$0xf] %vm4611, %v5145
      %5211 = vst.msk [vmem:[%s5189 + $0x54] sm:$0xf] %vm4611, %v5146
      %5212 = vst.msk [vmem:[%s5189 + $0x58] sm:$0xf] %vm4611, %v5147
      %5213 = vst.msk [vmem:[%s5189 + $0x5c] sm:$0xf] %vm4611, %v5148
      %5214 = vst.msk [vmem:[%s5189 + $0x60] sm:$0xf] %vm4611, %v5149
      %5215 = vst.msk [vmem:[%s5189 + $0x64] sm:$0xf] %vm4611, %v5150
      %5216 = vst.msk [vmem:[%s5189 + $0x68] sm:$0xf] %vm4611, %v5151
      %5217 = vst.msk [vmem:[%s5189 + $0x6c] sm:$0xf] %vm4611, %v5152
      %5218 = vst.msk [vmem:[%s5189 + $0x70] sm:$0xf] %vm4611, %v5153
      %5219 = vst.msk [vmem:[%s5189 + $0x74] sm:$0xf] %vm4611, %v5154
      %5220 = vst.msk [vmem:[%s5189 + $0x78] sm:$0xf] %vm4611, %v5155
      %5221 = vst.msk [vmem:[%s5189 + $0x7c] sm:$0xf] %vm4611, %v5156
      %v5222 = vld [vmem:[%s4126] sm:$0xff]
      %v5223 = vld [vmem:[%s4126 + $0x8] sm:$0xff]
      %v5224 = vld [vmem:[%s4126 + $0x10] sm:$0xff]
      %v5225 = vld [vmem:[%s4126 + $0x18] sm:$0xff]
      %v5226 = vld [vmem:[%s4126 + $0x20] sm:$0xff]
      %v5227 = vld [vmem:[%s4126 + $0x28] sm:$0xff]
      %v5228 = vld [vmem:[%s4126 + $0x30] sm:$0xff]
      %v5229 = vld [vmem:[%s4126 + $0x38] sm:$0xff]
      %v5230 = vld [vmem:[%s4126 + $0x40] sm:$0xff]
      %v5231 = vld [vmem:[%s4126 + $0x48] sm:$0xff]
      %v5232 = vld [vmem:[%s4126 + $0x50] sm:$0xff]
      %v5233 = vld [vmem:[%s4126 + $0x58] sm:$0xff]
      %v5234 = vld [vmem:[%s4126 + $0x60] sm:$0xff]
      %v5235 = vld [vmem:[%s4126 + $0x68] sm:$0xff]
      %v5236 = vld [vmem:[%s4126 + $0x70] sm:$0xff]
      %v5237 = vld [vmem:[%s4126 + $0x78] sm:$0xff]
      %v5238 = vld [vmem:[%s4126 + $0x80] sm:$0xff]
      %v5239 = vld [vmem:[%s4126 + $0x88] sm:$0xff]
      %v5240 = vld [vmem:[%s4126 + $0x90] sm:$0xff]
      %v5241 = vld [vmem:[%s4126 + $0x98] sm:$0xff]
      %v5242 = vld [vmem:[%s4126 + $0xa0] sm:$0xff]
      %v5243 = vld [vmem:[%s4126 + $0xa8] sm:$0xff]
      %v5244 = vld [vmem:[%s4126 + $0xb0] sm:$0xff]
      %v5245 = vld [vmem:[%s4126 + $0xb8] sm:$0xff]
      %v5246 = vld [vmem:[%s4126 + $0xc0] sm:$0xff]
      %v5247 = vld [vmem:[%s4126 + $0xc8] sm:$0xff]
      %v5248 = vld [vmem:[%s4126 + $0xd0] sm:$0xff]
      %v5249 = vld [vmem:[%s4126 + $0xd8] sm:$0xff]
      %v5250 = vld [vmem:[%s4126 + $0xe0] sm:$0xff]
      %v5251 = vld [vmem:[%s4126 + $0xe8] sm:$0xff]
      %v5252 = vld [vmem:[%s4126 + $0xf0] sm:$0xff]
      %v5253 = vld [vmem:[%s4126 + $0xf8] sm:$0xff]
      %v5254 = vsub.f32 %v5222, %v4382
      %v5255 = vsub.f32 %v5223, %v4382
      %v5256 = vsub.f32 %v5224, %v4382
      %v5257 = vsub.f32 %v5225, %v4382
      %v5258 = vsub.f32 %v5226, %v4382
      %v5259 = vsub.f32 %v5227, %v4382
      %v5260 = vsub.f32 %v5228, %v4382
      %v5261 = vsub.f32 %v5229, %v4382
      %v5262 = vsub.f32 %v5230, %v4382
      %v5263 = vsub.f32 %v5231, %v4382
      %v5264 = vsub.f32 %v5232, %v4382
      %v5265 = vsub.f32 %v5233, %v4382
      %v5266 = vsub.f32 %v5234, %v4382
      %v5267 = vsub.f32 %v5235, %v4382
      %v5268 = vsub.f32 %v5236, %v4382
      %v5269 = vsub.f32 %v5237, %v4382
      %v5270 = vsub.f32 %v5238, %v4382
      %v5271 = vsub.f32 %v5239, %v4382
      %v5272 = vsub.f32 %v5240, %v4382
      %v5273 = vsub.f32 %v5241, %v4382
      %v5274 = vsub.f32 %v5242, %v4382
      %v5275 = vsub.f32 %v5243, %v4382
      %v5276 = vsub.f32 %v5244, %v4382
      %v5277 = vsub.f32 %v5245, %v4382
      %v5278 = vsub.f32 %v5246, %v4382
      %v5279 = vsub.f32 %v5247, %v4382
      %v5280 = vsub.f32 %v5248, %v4382
      %v5281 = vsub.f32 %v5249, %v4382
      %v5282 = vsub.f32 %v5250, %v4382
      %v5283 = vsub.f32 %v5251, %v4382
      %v5284 = vsub.f32 %v5252, %v4382
      %v5285 = vsub.f32 %v5253, %v4382
      %v5286 = vmul.f32 %v5254, %v4418
      %v5287 = vmul.f32 %v5255, %v4418
      %v5288 = vmul.f32 %v5256, %v4418
      %v5289 = vmul.f32 %v5257, %v4418
      %v5290 = vmul.f32 %v5258, %v4418
      %v5291 = vmul.f32 %v5259, %v4418
      %v5292 = vmul.f32 %v5260, %v4418
      %v5293 = vmul.f32 %v5261, %v4418
      %v5294 = vmul.f32 %v5262, %v4418
      %v5295 = vmul.f32 %v5263, %v4418
      %v5296 = vmul.f32 %v5264, %v4418
      %v5297 = vmul.f32 %v5265, %v4418
      %v5298 = vmul.f32 %v5266, %v4418
      %v5299 = vmul.f32 %v5267, %v4418
      %v5300 = vmul.f32 %v5268, %v4418
      %v5301 = vmul.f32 %v5269, %v4418
      %v5302 = vmul.f32 %v5270, %v4418
      %v5303 = vmul.f32 %v5271, %v4418
      %v5304 = vmul.f32 %v5272, %v4418
      %v5305 = vmul.f32 %v5273, %v4418
      %v5306 = vmul.f32 %v5274, %v4418
      %v5307 = vmul.f32 %v5275, %v4418
      %v5308 = vmul.f32 %v5276, %v4418
      %v5309 = vmul.f32 %v5277, %v4418
      %v5310 = vmul.f32 %v5278, %v4418
      %v5311 = vmul.f32 %v5279, %v4418
      %v5312 = vmul.f32 %v5280, %v4418
      %v5313 = vmul.f32 %v5281, %v4418
      %v5314 = vmul.f32 %v5282, %v4418
      %v5315 = vmul.f32 %v5283, %v4418
      %v5316 = vmul.f32 %v5284, %v4418
      %v5317 = vmul.f32 %v5285, %v4418
      %v5318 = vmax.f32 %v5286, 0.0
      %v5319 = vmax.f32 %v5287, 0.0
      %v5320 = vmax.f32 %v5288, 0.0
      %v5321 = vmax.f32 %v5289, 0.0
      %v5322 = vmax.f32 %v5290, 0.0
      %v5323 = vmax.f32 %v5291, 0.0
      %v5324 = vmax.f32 %v5292, 0.0
      %v5325 = vmax.f32 %v5293, 0.0
      %v5326 = vmax.f32 %v5294, 0.0
      %v5327 = vmax.f32 %v5295, 0.0
      %v5328 = vmax.f32 %v5296, 0.0
      %v5329 = vmax.f32 %v5297, 0.0
      %v5330 = vmax.f32 %v5298, 0.0
      %v5331 = vmax.f32 %v5299, 0.0
      %v5332 = vmax.f32 %v5300, 0.0
      %v5333 = vmax.f32 %v5301, 0.0
      %v5334 = vmax.f32 %v5302, 0.0
      %v5335 = vmax.f32 %v5303, 0.0
      %v5336 = vmax.f32 %v5304, 0.0
      %v5337 = vmax.f32 %v5305, 0.0
      %v5338 = vmax.f32 %v5306, 0.0
      %v5339 = vmax.f32 %v5307, 0.0
      %v5340 = vmax.f32 %v5308, 0.0
      %v5341 = vmax.f32 %v5309, 0.0
      %v5342 = vmax.f32 %v5310, 0.0
      %v5343 = vmax.f32 %v5311, 0.0
      %v5344 = vmax.f32 %v5312, 0.0
      %v5345 = vmax.f32 %v5313, 0.0
      %v5346 = vmax.f32 %v5314, 0.0
      %v5347 = vmax.f32 %v5315, 0.0
      %v5348 = vmax.f32 %v5316, 0.0
      %v5349 = vmax.f32 %v5317, 0.0
      %v5350 = vpack.c.bf16 %v5319, %v5318
      %v5351 = vpack.c.bf16 %v5321, %v5320
      %v5352 = vpack.c.bf16 %v5323, %v5322
      %v5353 = vpack.c.bf16 %v5325, %v5324
      %v5354 = vpack.c.bf16 %v5327, %v5326
      %v5355 = vpack.c.bf16 %v5329, %v5328
      %v5356 = vpack.c.bf16 %v5331, %v5330
      %v5357 = vpack.c.bf16 %v5333, %v5332
      %v5358 = vpack.c.bf16 %v5335, %v5334
      %v5359 = vpack.c.bf16 %v5337, %v5336
      %v5360 = vpack.c.bf16 %v5339, %v5338
      %v5361 = vpack.c.bf16 %v5341, %v5340
      %v5362 = vpack.c.bf16 %v5343, %v5342
      %v5363 = vpack.c.bf16 %v5345, %v5344
      %v5364 = vpack.c.bf16 %v5347, %v5346
      %v5365 = vpack.c.bf16 %v5349, %v5348
      %v5382 = vunpack.c.l.b16 %v5350
      %v5383 = vunpack.c.h.b16 %v5350
      %v5384 = vunpack.c.l.b16 %v5351
      %v5385 = vunpack.c.h.b16 %v5351
      %v5386 = vunpack.c.l.b16 %v5352
      %v5387 = vunpack.c.h.b16 %v5352
      %v5388 = vunpack.c.l.b16 %v5353
      %v5389 = vunpack.c.h.b16 %v5353
      %v5390 = vunpack.c.l.b16 %v5354
      %v5391 = vunpack.c.h.b16 %v5354
      %v5392 = vunpack.c.l.b16 %v5355
      %v5393 = vunpack.c.h.b16 %v5355
      %v5394 = vunpack.c.l.b16 %v5356
      %v5395 = vunpack.c.h.b16 %v5356
      %v5396 = vunpack.c.l.b16 %v5357
      %v5397 = vunpack.c.h.b16 %v5357
      %v5398 = vunpack.c.l.b16 %v5358
      %v5399 = vunpack.c.h.b16 %v5358
      %v5400 = vunpack.c.l.b16 %v5359
      %v5401 = vunpack.c.h.b16 %v5359
      %v5402 = vunpack.c.l.b16 %v5360
      %v5403 = vunpack.c.h.b16 %v5360
      %v5404 = vunpack.c.l.b16 %v5361
      %v5405 = vunpack.c.h.b16 %v5361
      %v5406 = vunpack.c.l.b16 %v5362
      %v5407 = vunpack.c.h.b16 %v5362
      %v5408 = vunpack.c.l.b16 %v5363
      %v5409 = vunpack.c.h.b16 %v5363
      %v5410 = vunpack.c.l.b16 %v5364
      %v5411 = vunpack.c.h.b16 %v5364
      %v5412 = vunpack.c.l.b16 %v5365
      %v5413 = vunpack.c.h.b16 %v5365
      %v5414 = vpack.c.b16 %v5382, %v5382
      %v5415 = vpack.c.b16 %v5383, %v5383
      %v5416 = vpack.c.b16 %v5384, %v5384
      %v5417 = vpack.c.b16 %v5385, %v5385
      %v5418 = vpack.c.b16 %v5386, %v5386
      %v5419 = vpack.c.b16 %v5387, %v5387
      %v5420 = vpack.c.b16 %v5388, %v5388
      %v5421 = vpack.c.b16 %v5389, %v5389
      %v5422 = vpack.c.b16 %v5390, %v5390
      %v5423 = vpack.c.b16 %v5391, %v5391
      %v5424 = vpack.c.b16 %v5392, %v5392
      %v5425 = vpack.c.b16 %v5393, %v5393
      %v5426 = vpack.c.b16 %v5394, %v5394
      %v5427 = vpack.c.b16 %v5395, %v5395
      %v5428 = vpack.c.b16 %v5396, %v5396
      %v5429 = vpack.c.b16 %v5397, %v5397
      %v5430 = vpack.c.b16 %v5398, %v5398
      %v5431 = vpack.c.b16 %v5399, %v5399
      %v5432 = vpack.c.b16 %v5400, %v5400
      %v5433 = vpack.c.b16 %v5401, %v5401
      %v5434 = vpack.c.b16 %v5402, %v5402
      %v5435 = vpack.c.b16 %v5403, %v5403
      %v5436 = vpack.c.b16 %v5404, %v5404
      %v5437 = vpack.c.b16 %v5405, %v5405
      %v5438 = vpack.c.b16 %v5406, %v5406
      %v5439 = vpack.c.b16 %v5407, %v5407
      %v5440 = vpack.c.b16 %v5408, %v5408
      %v5441 = vpack.c.b16 %v5409, %v5409
      %v5442 = vpack.c.b16 %v5410, %v5410
      %v5443 = vpack.c.b16 %v5411, %v5411
      %v5444 = vpack.c.b16 %v5412, %v5412
      %v5445 = vpack.c.b16 %v5413, %v5413
      %s5478 = scalar_lea.vmem %s143, 384
      %5479 = vst.msk [vmem:[%s5478] sm:$0xf] %vm4611, %v5414
      %5480 = vst.msk [vmem:[%s5478 + $0x4] sm:$0xf] %vm4611, %v5415
      %5481 = vst.msk [vmem:[%s5478 + $0x8] sm:$0xf] %vm4611, %v5416
      %5482 = vst.msk [vmem:[%s5478 + $0xc] sm:$0xf] %vm4611, %v5417
      %5483 = vst.msk [vmem:[%s5478 + $0x10] sm:$0xf] %vm4611, %v5418
      %5484 = vst.msk [vmem:[%s5478 + $0x14] sm:$0xf] %vm4611, %v5419
      %5485 = vst.msk [vmem:[%s5478 + $0x18] sm:$0xf] %vm4611, %v5420
      %5486 = vst.msk [vmem:[%s5478 + $0x1c] sm:$0xf] %vm4611, %v5421
      %5487 = vst.msk [vmem:[%s5478 + $0x20] sm:$0xf] %vm4611, %v5422
      %5488 = vst.msk [vmem:[%s5478 + $0x24] sm:$0xf] %vm4611, %v5423
      %5489 = vst.msk [vmem:[%s5478 + $0x28] sm:$0xf] %vm4611, %v5424
      %5490 = vst.msk [vmem:[%s5478 + $0x2c] sm:$0xf] %vm4611, %v5425
      %5491 = vst.msk [vmem:[%s5478 + $0x30] sm:$0xf] %vm4611, %v5426
      %5492 = vst.msk [vmem:[%s5478 + $0x34] sm:$0xf] %vm4611, %v5427
      %5493 = vst.msk [vmem:[%s5478 + $0x38] sm:$0xf] %vm4611, %v5428
      %5494 = vst.msk [vmem:[%s5478 + $0x3c] sm:$0xf] %vm4611, %v5429
      %5495 = vst.msk [vmem:[%s5478 + $0x40] sm:$0xf] %vm4611, %v5430
      %5496 = vst.msk [vmem:[%s5478 + $0x44] sm:$0xf] %vm4611, %v5431
      %5497 = vst.msk [vmem:[%s5478 + $0x48] sm:$0xf] %vm4611, %v5432
      %5498 = vst.msk [vmem:[%s5478 + $0x4c] sm:$0xf] %vm4611, %v5433
      %5499 = vst.msk [vmem:[%s5478 + $0x50] sm:$0xf] %vm4611, %v5434
      %5500 = vst.msk [vmem:[%s5478 + $0x54] sm:$0xf] %vm4611, %v5435
      %5501 = vst.msk [vmem:[%s5478 + $0x58] sm:$0xf] %vm4611, %v5436
      %5502 = vst.msk [vmem:[%s5478 + $0x5c] sm:$0xf] %vm4611, %v5437
      %5503 = vst.msk [vmem:[%s5478 + $0x60] sm:$0xf] %vm4611, %v5438
      %5504 = vst.msk [vmem:[%s5478 + $0x64] sm:$0xf] %vm4611, %v5439
      %5505 = vst.msk [vmem:[%s5478 + $0x68] sm:$0xf] %vm4611, %v5440
      %5506 = vst.msk [vmem:[%s5478 + $0x6c] sm:$0xf] %vm4611, %v5441
      %5507 = vst.msk [vmem:[%s5478 + $0x70] sm:$0xf] %vm4611, %v5442
      %5508 = vst.msk [vmem:[%s5478 + $0x74] sm:$0xf] %vm4611, %v5443
      %5509 = vst.msk [vmem:[%s5478 + $0x78] sm:$0xf] %vm4611, %v5444
      %5510 = vst.msk [vmem:[%s5478 + $0x7c] sm:$0xf] %vm4611, %v5445
      %p5511 = scmp.lt.s32.totalorder %s13, 1
      %s5512 = scalar_select %p5511, %s13, 1
      %s5513 = smul.addr %s5512, 128
      %s5514 = smul.addr %s5513, 4
      %s5515 = scalar_lea.vmem %s2, %s5514
      // Predicated region
      $region29: #{unet_up_forward.1} parent=27 // pred_check
        %p5516 = pneg %p78
      $region30: #{unet_up_forward.1} parent=27 // pred_check_branch
        %5518 = sbr.rel (%p5516) target = $region32
      $region31: #{unet_up_forward.1} parent=27 // pred_region
        _
      $region32: #{unet_up_forward.1} parent=27 // pred_fallthru
        _
    $region28: #{unet_up_forward.1} parent=5 // pred_fallthru
      _
    %p5519 = scmp.le.s32.totalorder 2, %s8
    // Predicated region
    $region33: #{unet_up_forward.1} parent=5 // pred_check
      %p5520 = pneg %p5519
    $region34: #{unet_up_forward.1} parent=5 // pred_check_branch
      %5522 = sbr.rel (%p5520) target = $region36
    $region35: #{unet_up_forward.1} parent=5 // pred_region
      %s5523 = ssub.s32 %s8, 2
      // Predicated region
      $region37: #{unet_up_forward.1} parent=35 // pred_check
        %p5524 = pneg %p84
      $region38: #{unet_up_forward.1} parent=35 // pred_check_branch
        %5526 = sbr.rel (%p5524) target = $region40
      $region39: #{unet_up_forward.1} parent=35 // pred_region
        %p5527 = scmp.lt.s32.totalorder %s14, 1
        %s5528 = scalar_select %p5527, %s14, 1
        %s5529 = smul.addr %s5528, 128
        %s5530 = smul.addr %s5529, 4
        %s5531 = scalar_lea.vmem %s2, %s5530
      $region40: #{unet_up_forward.1} parent=35 // pred_fallthru
        _
    $region36: #{unet_up_forward.1} parent=5 // pred_fallthru
      _
  $region6: #{unet_up_forward.1} parent=0 // loop_footer
    %s12 = sadd.s32 1, %s8
  $region7: #{unet_up_forward.1} parent=0 // loop_footer_branch
    %7 = sbr.rel target = $region3
  $region8: #{unet_up_forward.1} parent=0 // loop_exit
    _

</llo_original>
